<compile_context>
chip_gen: v5e
topology: v5e:2x2
jax: 0.10.0
libtpu: 0.0.40
codegen_flags: <defaults>
</compile_context>

<pallas_src>
import functools

import jax
import jax.numpy as jnp
from jax.experimental import pallas as pl
from jax.experimental.pallas import tpu as pltpu


def _round_up(x, m):
    return (x + m - 1) // m * m


# ---------------------------------------------------------------------------
# Fused Pallas kernel: all GRU layers, full sequence, single grid step.
# ---------------------------------------------------------------------------
def _fused_encoder_kernel(n_layers, seq_len, Bp, Hp, *refs):
    """Ref layout (all 2-D except hidden):

    inputs:
      refs[0]                : gi0   (T*Bp, 3*Hp)  precomputed layer-0 input proj
      refs[1], refs[2]       : whh0 (Hp, 3*Hp), bhh0 (1, 3*Hp)
      for l in 1..L-1 (4 each): wih_l (Hp,3*Hp), bih_l (1,3*Hp),
                                whh_l (Hp,3*Hp), bhh_l (1,3*Hp)
    outputs:
      out_ref : (T*Bp, Hp)   last-layer outputs, time-major, padded
      hid_ref : (L, Bp, Hp)  final hidden per layer, padded
    scratch:
      xh_scr  : (T*Bp, Hp)   current layer's outputs (input to next layer)
      gi_scr  : (T*Bp, 3*Hp) input projection for layers >= 1
    """
    n_in = 3 + 4 * (n_layers - 1)
    gi0_ref = refs[0]
    layer_refs = refs[1:n_in]
    out_ref = refs[n_in]
    hid_ref = refs[n_in + 1]
    xh_scr = refs[n_in + 2]
    gi_scr = refs[n_in + 3]
    G = 3 * Hp

    def run_layer(gi_ref, whh_ref, bhh_ref, dst_ref, layer_idx):
        whh = whh_ref[...]                                       # (Hp, 3Hp)
        bhh = jnp.broadcast_to(bhh_ref[...], (Bp, G))            # hoisted bcast

        def step(t, h_prev):
            row = pl.multiple_of(t * Bp, Bp)
            gi_t = gi_ref[pl.ds(row, Bp), :]                     # (Bp, 3Hp)
            gh = jnp.dot(h_prev, whh,
                         preferred_element_type=jnp.float32) + bhh
            # PyTorch GRU gate order: r, z, n — each gate 128-lane aligned.
            r = jax.nn.sigmoid(gi_t[:, 0:Hp] + gh[:, 0:Hp])
            z = jax.nn.sigmoid(gi_t[:, Hp:2 * Hp] + gh[:, Hp:2 * Hp])
            n = jnp.tanh(gi_t[:, 2 * Hp:3 * Hp] + r * gh[:, 2 * Hp:3 * Hp])
            h_new = (1.0 - z) * n + z * h_prev
            dst_ref[pl.ds(row, Bp), :] = h_new
            return h_new

        h0 = jnp.zeros((Bp, Hp), jnp.float32)
        h_last = jax.lax.fori_loop(0, seq_len, step, h0, unroll=True)
        hid_ref[layer_idx] = h_last

    # Layer 0: input projection already precomputed outside -> recurrence only.
    dst0 = out_ref if n_layers == 1 else xh_scr
    run_layer(gi0_ref, layer_refs[0], layer_refs[1], dst0, 0)

    # Layers 1..L-1: ONE big input-projection matmul, then the recurrence.
    for l in range(1, n_layers):
        wih_ref, bih_ref, whh_ref, bhh_ref = layer_refs[2 + 4 * (l - 1):
                                                        2 + 4 * l]
        x_prev = xh_scr[...]                                     # (T*Bp, Hp)
        gi = jnp.dot(x_prev, wih_ref[...],
                     preferred_element_type=jnp.float32) + bih_ref[...]
        gi_scr[...] = gi
        dst = out_ref if l == n_layers - 1 else xh_scr
        run_layer(gi_scr, whh_ref, bhh_ref, dst, l)


# ---------------------------------------------------------------------------
# Wrapper-side weight preparation: transpose + gate-align (128-lane) padding.
# ---------------------------------------------------------------------------
def _gate_pad_matrix(w, in_pad, H, Hp):
    """w: (3H, in_dim) PyTorch layout -> (in_pad, 3*Hp), transposed, each gate
    block starting on a 128-lane boundary; padding is zero."""
    in_dim = w.shape[1]
    out = jnp.zeros((in_pad, 3 * Hp), jnp.float32)
    for g in range(3):
        out = out.at[:in_dim, g * Hp:g * Hp + H].set(
            jnp.transpose(w[g * H:(g + 1) * H, :]))
    return out


def _gate_pad_bias(b, H, Hp):
    out = jnp.zeros((1, 3 * Hp), jnp.float32)
    for g in range(3):
        out = out.at[0, g * Hp:g * Hp + H].set(b[g * H:(g + 1) * H])
    return out


# ---------------------------------------------------------------------------
# Encoder forward: embedding gather (glue) + fused GRU Pallas kernel.
# ---------------------------------------------------------------------------
def init_encoder_params(key, input_dim, emb_dim, hid_dim, n_layers):
    keys = jax.random.split(key, 1 + 4 * n_layers)
    params = {
        # nn.Embedding default init: N(0, 1)
        "embedding": jax.random.normal(keys[0], (input_dim, emb_dim),
                                       dtype=jnp.float32),
        "layers": [],
    }
    k = 1.0 / jnp.sqrt(jnp.float32(hid_dim))   # nn.GRU default: U(-k, k)
    for layer in range(n_layers):
        in_size = emb_dim if layer == 0 else hid_dim
        kw = keys[1 + 4 * layer: 1 + 4 * (layer + 1)]
        params["layers"].append({
            "w_ih": jax.random.uniform(kw[0], (3 * hid_dim, in_size),
                                       minval=-k, maxval=k, dtype=jnp.float32),
            "w_hh": jax.random.uniform(kw[1], (3 * hid_dim, hid_dim),
                                       minval=-k, maxval=k, dtype=jnp.float32),
            "b_ih": jax.random.uniform(kw[2], (3 * hid_dim,),
                                       minval=-k, maxval=k, dtype=jnp.float32),
            "b_hh": jax.random.uniform(kw[3], (3 * hid_dim,),
                                       minval=-k, maxval=k, dtype=jnp.float32),
        })
    return params


def encoder_forward(params, src):
    """src: (B, T) int32 token ids -> (hidden (n_layers,B,H), outputs (B,T,H))."""
    B, T = src.shape
    layers = params["layers"]
    L = len(layers)
    H = layers[0]["w_hh"].shape[1]
    E = params["embedding"].shape[1]
    Hp = _round_up(H, 128)     # gate / hidden lane alignment
    Bp = _round_up(B, 8)       # sublane alignment
    G = 3 * Hp

    # Embedding gather directly in time-major order (no activation transpose).
    emb = params["embedding"][src.T]                          # (T, B, E)
    emb = jnp.pad(emb, ((0, 0), (0, Bp - B), (0, 0)))         # (T, Bp, E)

    # Layer-0 input projection: one big MXU-friendly matmul outside the
    # recurrence (plain XLA); bias folded in here.
    wih0 = _gate_pad_matrix(layers[0]["w_ih"], E, H, Hp)      # (E, 3Hp)
    bih0 = _gate_pad_bias(layers[0]["b_ih"], H, Hp)           # (1, 3Hp)
    gi0 = emb.reshape(T * Bp, E) @ wih0 + bih0                # (T*Bp, 3Hp)

    inputs = [gi0,
              _gate_pad_matrix(layers[0]["w_hh"], Hp, H, Hp),
              _gate_pad_bias(layers[0]["b_hh"], H, Hp)]
    for l in range(1, L):
        inputs += [
            _gate_pad_matrix(layers[l]["w_ih"], Hp, H, Hp),
            _gate_pad_bias(layers[l]["b_ih"], H, Hp),
            _gate_pad_matrix(layers[l]["w_hh"], Hp, H, Hp),
            _gate_pad_bias(layers[l]["b_hh"], H, Hp),
        ]

    in_specs = [pl.BlockSpec(x.shape, lambda i: (0, 0)) for x in inputs]
    out_specs = [pl.BlockSpec((T * Bp, Hp), lambda i: (0, 0)),
                 pl.BlockSpec((L, Bp, Hp), lambda i: (0, 0, 0))]

    out_pad, hid_pad = pl.pallas_call(
        functools.partial(_fused_encoder_kernel, L, T, Bp, Hp),
        out_shape=(jax.ShapeDtypeStruct((T * Bp, Hp), jnp.float32),
                   jax.ShapeDtypeStruct((L, Bp, Hp), jnp.float32)),
        grid_spec=pltpu.PrefetchScalarGridSpec(
            num_scalar_prefetch=0,
            grid=(1,),
            in_specs=in_specs,
            out_specs=out_specs,
            scratch_shapes=[pltpu.VMEM((T * Bp, Hp), jnp.float32),
                            pltpu.VMEM((T * Bp, G), jnp.float32)]),
        compiler_params=pltpu.CompilerParams(
            dimension_semantics=("arbitrary",)),
    )(*inputs)

    outputs = jnp.transpose(out_pad.reshape(T, Bp, Hp)[:, :B, :H],
                            (1, 0, 2))                        # (B, T, H)
    hidden = hid_pad[:, :B, :H]                               # (L, B, H)
    return hidden, outputs


# ---------------------------------------------------------------------------
# Pure-JAX reference (same math) for a correctness check.
# ---------------------------------------------------------------------------
def gru_layer_ref(x_tbe, w_ih, w_hh, b_ih, b_hh):
    T, B, _ = x_tbe.shape
    H = w_hh.shape[1]
    h = jnp.zeros((B, H), jnp.float32)
    outs = []
    for t in range(T):
        gi = x_tbe[t] @ w_ih.T + b_ih
        gh = h @ w_hh.T + b_hh
        r = jax.nn.sigmoid(gi[:, 0:H] + gh[:, 0:H])
        z = jax.nn.sigmoid(gi[:, H:2 * H] + gh[:, H:2 * H])
        n = jnp.tanh(gi[:, 2 * H:3 * H] + r * gh[:, 2 * H:3 * H])
        h = (1.0 - z) * n + z * h
        outs.append(h)
    return jnp.stack(outs, axis=0), h


def encoder_forward_ref(params, src):
    emb = params["embedding"][src]
    x = jnp.transpose(emb, (1, 0, 2))
    hiddens = []
    for lp in params["layers"]:
        x, h = gru_layer_ref(x, lp["w_ih"], lp["w_hh"], lp["b_ih"], lp["b_hh"])
        hiddens.append(h)
    return jnp.stack(hiddens, axis=0), jnp.transpose(x, (1, 0, 2))


if __name__ == "__main__":
    INPUT_DIM = 16   # vocab size
    EMB_DIM = 32
    HID_DIM = 32
    N_LAYERS = 2
    BATCH = 2
    SEQ = 8

    key = jax.random.PRNGKey(0)
    pkey, skey = jax.random.split(key)
    params = init_encoder_params(pkey, INPUT_DIM, EMB_DIM, HID_DIM, N_LAYERS)
    src = jax.random.randint(skey, (BATCH, SEQ), 0, INPUT_DIM, dtype=jnp.int32)

    fwd = jax.jit(functools.partial(encoder_forward, params))
    hidden, outputs = fwd(src)
    jax.block_until_ready((hidden, outputs))

    assert hidden.shape == (N_LAYERS, BATCH, HID_DIM)
    assert outputs.shape == (BATCH, SEQ, HID_DIM)

    # correctness vs pure-JAX reference
    hidden_ref, outputs_ref = encoder_forward_ref(params, src)
    assert jnp.allclose(hidden, hidden_ref, atol=1e-4, rtol=1e-4)
    assert jnp.allclose(outputs, outputs_ref, atol=1e-4, rtol=1e-4)

    print("KERNEL_OK")
</pallas_src>

<mosaic_0001>
module attributes {stable_mosaic.version = 11 : i64} {
  func.func @_fused_encoder_kernel(%arg0: i32, %arg1: memref<64x384xf32, #tpu.memory_space<vmem>>, %arg2: memref<128x384xf32, #tpu.memory_space<vmem>>, %arg3: memref<1x384xf32, #tpu.memory_space<vmem>>, %arg4: memref<128x384xf32, #tpu.memory_space<vmem>>, %arg5: memref<1x384xf32, #tpu.memory_space<vmem>>, %arg6: memref<128x384xf32, #tpu.memory_space<vmem>>, %arg7: memref<1x384xf32, #tpu.memory_space<vmem>>, %arg8: memref<64x128xf32, #tpu.memory_space<vmem>>, %arg9: memref<2x8x128xf32, #tpu.memory_space<vmem>>, %arg10: memref<64x128xf32, #tpu.memory_space<vmem>>, %arg11: memref<64x384xf32, #tpu.memory_space<vmem>>) attributes {dimension_semantics = [#tpu.dimension_semantics<arbitrary>], iteration_bounds = array<i64: 1>, scalar_prefetch = 0 : i64, scratch_operands = 2 : i64, tpu.core_type = #tpu.core_type<tc>, window_params = [{pipeline_mode = #tpu.pipeline_mode<synchronous>, transform_indices = @transform_0, window_bounds = array<i64: 64, 384>}, {pipeline_mode = #tpu.pipeline_mode<synchronous>, transform_indices = @transform_1, window_bounds = array<i64: 128, 384>}, {pipeline_mode = #tpu.pipeline_mode<synchronous>, transform_indices = @transform_2, window_bounds = array<i64: 1, 384>}, {pipeline_mode = #tpu.pipeline_mode<synchronous>, transform_indices = @transform_3, window_bounds = array<i64: 128, 384>}, {pipeline_mode = #tpu.pipeline_mode<synchronous>, transform_indices = @transform_4, window_bounds = array<i64: 1, 384>}, {pipeline_mode = #tpu.pipeline_mode<synchronous>, transform_indices = @transform_5, window_bounds = array<i64: 128, 384>}, {pipeline_mode = #tpu.pipeline_mode<synchronous>, transform_indices = @transform_6, window_bounds = array<i64: 1, 384>}, {pipeline_mode = #tpu.pipeline_mode<synchronous>, transform_indices = @transform_7, window_bounds = array<i64: 64, 128>}, {pipeline_mode = #tpu.pipeline_mode<synchronous>, transform_indices = @transform_8, window_bounds = array<i64: 2, 8, 128>}]} {
    %c0 = arith.constant 0 : index
    %c0_0 = arith.constant 0 : index
    %0 = vector.load %arg2[%c0, %c0_0] : memref<128x384xf32, #tpu.memory_space<vmem>>, vector<128x384xf32>
    %c0_1 = arith.constant 0 : index
    %c0_2 = arith.constant 0 : index
    %1 = vector.load %arg3[%c0_1, %c0_2] : memref<1x384xf32, #tpu.memory_space<vmem>>, vector<1x384xf32>
    %2 = vector.shape_cast %1 : vector<1x384xf32> to vector<1x384xf32>
    %3 = vector.broadcast %2 : vector<1x384xf32> to vector<8x384xf32>
    %cst = arith.constant 0.000000e+00 : f32
    %4 = vector.broadcast %cst : f32 to vector<8x128xf32>
    %c0_i32 = arith.constant 0 : i32
    %c8_i32 = arith.constant 8 : i32
    %5 = arith.muli %c0_i32, %c8_i32 : i32
    %6 = tpu.assume_multiple %5, 8 : i32
    %7 = arith.index_cast %6 : i32 to index
    %c0_3 = arith.constant 0 : index
    %8 = vector.load %arg1[%7, %c0_3] : memref<64x384xf32, #tpu.memory_space<vmem>>, vector<8x384xf32>
    %cst_4 = arith.constant dense<0.000000e+00> : vector<8x384xf32>
    %9 = tpu.matmul %4, %0, %cst_4 {dimension_numbers = #tpu.dot_dimension_numbers<[1], [0], [0], [1], [0, 0, 1, 1], [], []>} : vector<8x128xf32>, vector<128x384xf32>, vector<8x384xf32> -> vector<8x384xf32>
    %10 = arith.addf %9, %3 : vector<8x384xf32>
    %11 = vector.extract_strided_slice %8 {offsets = [0, 0], sizes = [8, 128], strides = [1, 1]} : vector<8x384xf32> to vector<8x128xf32>
    %12 = vector.extract_strided_slice %10 {offsets = [0, 0], sizes = [8, 128], strides = [1, 1]} : vector<8x384xf32> to vector<8x128xf32>
    %13 = arith.addf %11, %12 : vector<8x128xf32>
    %14 = arith.negf %13 : vector<8x128xf32>
    %15 = math.exp %14 : vector<8x128xf32>
    %cst_5 = arith.constant 1.000000e+00 : f32
    %16 = vector.broadcast %cst_5 : f32 to vector<8x128xf32>
    %17 = arith.addf %16, %15 : vector<8x128xf32>
    %18 = arith.divf %16, %17 : vector<8x128xf32>
    %19 = vector.extract_strided_slice %8 {offsets = [0, 128], sizes = [8, 128], strides = [1, 1]} : vector<8x384xf32> to vector<8x128xf32>
    %20 = vector.extract_strided_slice %10 {offsets = [0, 128], sizes = [8, 128], strides = [1, 1]} : vector<8x384xf32> to vector<8x128xf32>
    %21 = arith.addf %19, %20 : vector<8x128xf32>
    %22 = arith.negf %21 : vector<8x128xf32>
    %23 = math.exp %22 : vector<8x128xf32>
    %cst_6 = arith.constant 1.000000e+00 : f32
    %24 = vector.broadcast %cst_6 : f32 to vector<8x128xf32>
    %25 = arith.addf %24, %23 : vector<8x128xf32>
    %26 = arith.divf %24, %25 : vector<8x128xf32>
    %27 = vector.extract_strided_slice %8 {offsets = [0, 256], sizes = [8, 128], strides = [1, 1]} : vector<8x384xf32> to vector<8x128xf32>
    %28 = vector.extract_strided_slice %10 {offsets = [0, 256], sizes = [8, 128], strides = [1, 1]} : vector<8x384xf32> to vector<8x128xf32>
    %29 = arith.mulf %18, %28 : vector<8x128xf32>
    %30 = arith.addf %27, %29 : vector<8x128xf32>
    %31 = math.tanh %30 : vector<8x128xf32>
    %cst_7 = arith.constant 1.000000e+00 : f32
    %32 = vector.broadcast %cst_7 : f32 to vector<8x128xf32>
    %33 = arith.subf %32, %26 : vector<8x128xf32>
    %34 = arith.mulf %33, %31 : vector<8x128xf32>
    %35 = arith.mulf %26, %4 : vector<8x128xf32>
    %36 = arith.addf %34, %35 : vector<8x128xf32>
    %37 = arith.index_cast %6 : i32 to index
    %c0_8 = arith.constant 0 : index
    %38 = vector.load %arg10[%37, %c0_8] : memref<64x128xf32, #tpu.memory_space<vmem>>, vector<8x128xf32>
    tpu.vector_store %arg10[%37, %c0_8], %36 {strides = array<i32>} : memref<64x128xf32, #tpu.memory_space<vmem>>, vector<8x128xf32>,
    %c1_i32 = arith.constant 1 : i32
    %c8_i32_9 = arith.constant 8 : i32
    %39 = arith.muli %c1_i32, %c8_i32_9 : i32
    %40 = tpu.assume_multiple %39, 8 : i32
    %41 = arith.index_cast %40 : i32 to index
    %c0_10 = arith.constant 0 : index
    %42 = vector.load %arg1[%41, %c0_10] : memref<64x384xf32, #tpu.memory_space<vmem>>, vector<8x384xf32>
    %cst_11 = arith.constant dense<0.000000e+00> : vector<8x384xf32>
    %43 = tpu.matmul %36, %0, %cst_11 {dimension_numbers = #tpu.dot_dimension_numbers<[1], [0], [0], [1], [0, 0, 1, 1], [], []>} : vector<8x128xf32>, vector<128x384xf32>, vector<8x384xf32> -> vector<8x384xf32>
    %44 = arith.addf %43, %3 : vector<8x384xf32>
    %45 = vector.extract_strided_slice %42 {offsets = [0, 0], sizes = [8, 128], strides = [1, 1]} : vector<8x384xf32> to vector<8x128xf32>
    %46 = vector.extract_strided_slice %44 {offsets = [0, 0], sizes = [8, 128], strides = [1, 1]} : vector<8x384xf32> to vector<8x128xf32>
    %47 = arith.addf %45, %46 : vector<8x128xf32>
    %48 = arith.negf %47 : vector<8x128xf32>
    %49 = math.exp %48 : vector<8x128xf32>
    %cst_12 = arith.constant 1.000000e+00 : f32
    %50 = vector.broadcast %cst_12 : f32 to vector<8x128xf32>
    %51 = arith.addf %50, %49 : vector<8x128xf32>
    %52 = arith.divf %50, %51 : vector<8x128xf32>
    %53 = vector.extract_strided_slice %42 {offsets = [0, 128], sizes = [8, 128], strides = [1, 1]} : vector<8x384xf32> to vector<8x128xf32>
    %54 = vector.extract_strided_slice %44 {offsets = [0, 128], sizes = [8, 128], strides = [1, 1]} : vector<8x384xf32> to vector<8x128xf32>
    %55 = arith.addf %53, %54 : vector<8x128xf32>
    %56 = arith.negf %55 : vector<8x128xf32>
    %57 = math.exp %56 : vector<8x128xf32>
    %cst_13 = arith.constant 1.000000e+00 : f32
    %58 = vector.broadcast %cst_13 : f32 to vector<8x128xf32>
    %59 = arith.addf %58, %57 : vector<8x128xf32>
    %60 = arith.divf %58, %59 : vector<8x128xf32>
    %61 = vector.extract_strided_slice %42 {offsets = [0, 256], sizes = [8, 128], strides = [1, 1]} : vector<8x384xf32> to vector<8x128xf32>
    %62 = vector.extract_strided_slice %44 {offsets = [0, 256], sizes = [8, 128], strides = [1, 1]} : vector<8x384xf32> to vector<8x128xf32>
    %63 = arith.mulf %52, %62 : vector<8x128xf32>
    %64 = arith.addf %61, %63 : vector<8x128xf32>
    %65 = math.tanh %64 : vector<8x128xf32>
    %cst_14 = arith.constant 1.000000e+00 : f32
    %66 = vector.broadcast %cst_14 : f32 to vector<8x128xf32>
    %67 = arith.subf %66, %60 : vector<8x128xf32>
    %68 = arith.mulf %67, %65 : vector<8x128xf32>
    %69 = arith.mulf %60, %36 : vector<8x128xf32>
    %70 = arith.addf %68, %69 : vector<8x128xf32>
    %71 = arith.index_cast %40 : i32 to index
    %c0_15 = arith.constant 0 : index
    %72 = vector.load %arg10[%71, %c0_15] : memref<64x128xf32, #tpu.memory_space<vmem>>, vector<8x128xf32>
    tpu.vector_store %arg10[%71, %c0_15], %70 {strides = array<i32>} : memref<64x128xf32, #tpu.memory_space<vmem>>, vector<8x128xf32>,
    %c2_i32 = arith.constant 2 : i32
    %c8_i32_16 = arith.constant 8 : i32
    %73 = arith.muli %c2_i32, %c8_i32_16 : i32
    %74 = tpu.assume_multiple %73, 8 : i32
    %75 = arith.index_cast %74 : i32 to index
    %c0_17 = arith.constant 0 : index
    %76 = vector.load %arg1[%75, %c0_17] : memref<64x384xf32, #tpu.memory_space<vmem>>, vector<8x384xf32>
    %cst_18 = arith.constant dense<0.000000e+00> : vector<8x384xf32>
    %77 = tpu.matmul %70, %0, %cst_18 {dimension_numbers = #tpu.dot_dimension_numbers<[1], [0], [0], [1], [0, 0, 1, 1], [], []>} : vector<8x128xf32>, vector<128x384xf32>, vector<8x384xf32> -> vector<8x384xf32>
    %78 = arith.addf %77, %3 : vector<8x384xf32>
    %79 = vector.extract_strided_slice %76 {offsets = [0, 0], sizes = [8, 128], strides = [1, 1]} : vector<8x384xf32> to vector<8x128xf32>
    %80 = vector.extract_strided_slice %78 {offsets = [0, 0], sizes = [8, 128], strides = [1, 1]} : vector<8x384xf32> to vector<8x128xf32>
    %81 = arith.addf %79, %80 : vector<8x128xf32>
    %82 = arith.negf %81 : vector<8x128xf32>
    %83 = math.exp %82 : vector<8x128xf32>
    %cst_19 = arith.constant 1.000000e+00 : f32
    %84 = vector.broadcast %cst_19 : f32 to vector<8x128xf32>
    %85 = arith.addf %84, %83 : vector<8x128xf32>
    %86 = arith.divf %84, %85 : vector<8x128xf32>
    %87 = vector.extract_strided_slice %76 {offsets = [0, 128], sizes = [8, 128], strides = [1, 1]} : vector<8x384xf32> to vector<8x128xf32>
    %88 = vector.extract_strided_slice %78 {offsets = [0, 128], sizes = [8, 128], strides = [1, 1]} : vector<8x384xf32> to vector<8x128xf32>
    %89 = arith.addf %87, %88 : vector<8x128xf32>
    %90 = arith.negf %89 : vector<8x128xf32>
    %91 = math.exp %90 : vector<8x128xf32>
    %cst_20 = arith.constant 1.000000e+00 : f32
    %92 = vector.broadcast %cst_20 : f32 to vector<8x128xf32>
    %93 = arith.addf %92, %91 : vector<8x128xf32>
    %94 = arith.divf %92, %93 : vector<8x128xf32>
    %95 = vector.extract_strided_slice %76 {offsets = [0, 256], sizes = [8, 128], strides = [1, 1]} : vector<8x384xf32> to vector<8x128xf32>
    %96 = vector.extract_strided_slice %78 {offsets = [0, 256], sizes = [8, 128], strides = [1, 1]} : vector<8x384xf32> to vector<8x128xf32>
    %97 = arith.mulf %86, %96 : vector<8x128xf32>
    %98 = arith.addf %95, %97 : vector<8x128xf32>
    %99 = math.tanh %98 : vector<8x128xf32>
    %cst_21 = arith.constant 1.000000e+00 : f32
    %100 = vector.broadcast %cst_21 : f32 to vector<8x128xf32>
    %101 = arith.subf %100, %94 : vector<8x128xf32>
    %102 = arith.mulf %101, %99 : vector<8x128xf32>
    %103 = arith.mulf %94, %70 : vector<8x128xf32>
    %104 = arith.addf %102, %103 : vector<8x128xf32>
    %105 = arith.index_cast %74 : i32 to index
    %c0_22 = arith.constant 0 : index
    %106 = vector.load %arg10[%105, %c0_22] : memref<64x128xf32, #tpu.memory_space<vmem>>, vector<8x128xf32>
    tpu.vector_store %arg10[%105, %c0_22], %104 {strides = array<i32>} : memref<64x128xf32, #tpu.memory_space<vmem>>, vector<8x128xf32>,
    %c3_i32 = arith.constant 3 : i32
    %c8_i32_23 = arith.constant 8 : i32
    %107 = arith.muli %c3_i32, %c8_i32_23 : i32
    %108 = tpu.assume_multiple %107, 8 : i32
    %109 = arith.index_cast %108 : i32 to index
    %c0_24 = arith.constant 0 : index
    %110 = vector.load %arg1[%109, %c0_24] : memref<64x384xf32, #tpu.memory_space<vmem>>, vector<8x384xf32>
    %cst_25 = arith.constant dense<0.000000e+00> : vector<8x384xf32>
    %111 = tpu.matmul %104, %0, %cst_25 {dimension_numbers = #tpu.dot_dimension_numbers<[1], [0], [0], [1], [0, 0, 1, 1], [], []>} : vector<8x128xf32>, vector<128x384xf32>, vector<8x384xf32> -> vector<8x384xf32>
    %112 = arith.addf %111, %3 : vector<8x384xf32>
    %113 = vector.extract_strided_slice %110 {offsets = [0, 0], sizes = [8, 128], strides = [1, 1]} : vector<8x384xf32> to vector<8x128xf32>
    %114 = vector.extract_strided_slice %112 {offsets = [0, 0], sizes = [8, 128], strides = [1, 1]} : vector<8x384xf32> to vector<8x128xf32>
    %115 = arith.addf %113, %114 : vector<8x128xf32>
    %116 = arith.negf %115 : vector<8x128xf32>
    %117 = math.exp %116 : vector<8x128xf32>
    %cst_26 = arith.constant 1.000000e+00 : f32
    %118 = vector.broadcast %cst_26 : f32 to vector<8x128xf32>
    %119 = arith.addf %118, %117 : vector<8x128xf32>
    %120 = arith.divf %118, %119 : vector<8x128xf32>
    %121 = vector.extract_strided_slice %110 {offsets = [0, 128], sizes = [8, 128], strides = [1, 1]} : vector<8x384xf32> to vector<8x128xf32>
    %122 = vector.extract_strided_slice %112 {offsets = [0, 128], sizes = [8, 128], strides = [1, 1]} : vector<8x384xf32> to vector<8x128xf32>
    %123 = arith.addf %121, %122 : vector<8x128xf32>
    %124 = arith.negf %123 : vector<8x128xf32>
    %125 = math.exp %124 : vector<8x128xf32>
    %cst_27 = arith.constant 1.000000e+00 : f32
    %126 = vector.broadcast %cst_27 : f32 to vector<8x128xf32>
    %127 = arith.addf %126, %125 : vector<8x128xf32>
    %128 = arith.divf %126, %127 : vector<8x128xf32>
    %129 = vector.extract_strided_slice %110 {offsets = [0, 256], sizes = [8, 128], strides = [1, 1]} : vector<8x384xf32> to vector<8x128xf32>
    %130 = vector.extract_strided_slice %112 {offsets = [0, 256], sizes = [8, 128], strides = [1, 1]} : vector<8x384xf32> to vector<8x128xf32>
    %131 = arith.mulf %120, %130 : vector<8x128xf32>
    %132 = arith.addf %129, %131 : vector<8x128xf32>
    %133 = math.tanh %132 : vector<8x128xf32>
    %cst_28 = arith.constant 1.000000e+00 : f32
    %134 = vector.broadcast %cst_28 : f32 to vector<8x128xf32>
    %135 = arith.subf %134, %128 : vector<8x128xf32>
    %136 = arith.mulf %135, %133 : vector<8x128xf32>
    %137 = arith.mulf %128, %104 : vector<8x128xf32>
    %138 = arith.addf %136, %137 : vector<8x128xf32>
    %139 = arith.index_cast %108 : i32 to index
    %c0_29 = arith.constant 0 : index
    %140 = vector.load %arg10[%139, %c0_29] : memref<64x128xf32, #tpu.memory_space<vmem>>, vector<8x128xf32>
    tpu.vector_store %arg10[%139, %c0_29], %138 {strides = array<i32>} : memref<64x128xf32, #tpu.memory_space<vmem>>, vector<8x128xf32>,
    %c4_i32 = arith.constant 4 : i32
    %c8_i32_30 = arith.constant 8 : i32
    %141 = arith.muli %c4_i32, %c8_i32_30 : i32
    %142 = tpu.assume_multiple %141, 8 : i32
    %143 = arith.index_cast %142 : i32 to index
    %c0_31 = arith.constant 0 : index
    %144 = vector.load %arg1[%143, %c0_31] : memref<64x384xf32, #tpu.memory_space<vmem>>, vector<8x384xf32>
    %cst_32 = arith.constant dense<0.000000e+00> : vector<8x384xf32>
    %145 = tpu.matmul %138, %0, %cst_32 {dimension_numbers = #tpu.dot_dimension_numbers<[1], [0], [0], [1], [0, 0, 1, 1], [], []>} : vector<8x128xf32>, vector<128x384xf32>, vector<8x384xf32> -> vector<8x384xf32>
    %146 = arith.addf %145, %3 : vector<8x384xf32>
    %147 = vector.extract_strided_slice %144 {offsets = [0, 0], sizes = [8, 128], strides = [1, 1]} : vector<8x384xf32> to vector<8x128xf32>
    %148 = vector.extract_strided_slice %146 {offsets = [0, 0], sizes = [8, 128], strides = [1, 1]} : vector<8x384xf32> to vector<8x128xf32>
    %149 = arith.addf %147, %148 : vector<8x128xf32>
    %150 = arith.negf %149 : vector<8x128xf32>
    %151 = math.exp %150 : vector<8x128xf32>
    %cst_33 = arith.constant 1.000000e+00 : f32
    %152 = vector.broadcast %cst_33 : f32 to vector<8x128xf32>
    %153 = arith.addf %152, %151 : vector<8x128xf32>
    %154 = arith.divf %152, %153 : vector<8x128xf32>
    %155 = vector.extract_strided_slice %144 {offsets = [0, 128], sizes = [8, 128], strides = [1, 1]} : vector<8x384xf32> to vector<8x128xf32>
    %156 = vector.extract_strided_slice %146 {offsets = [0, 128], sizes = [8, 128], strides = [1, 1]} : vector<8x384xf32> to vector<8x128xf32>
    %157 = arith.addf %155, %156 : vector<8x128xf32>
    %158 = arith.negf %157 : vector<8x128xf32>
    %159 = math.exp %158 : vector<8x128xf32>
    %cst_34 = arith.constant 1.000000e+00 : f32
    %160 = vector.broadcast %cst_34 : f32 to vector<8x128xf32>
    %161 = arith.addf %160, %159 : vector<8x128xf32>
    %162 = arith.divf %160, %161 : vector<8x128xf32>
    %163 = vector.extract_strided_slice %144 {offsets = [0, 256], sizes = [8, 128], strides = [1, 1]} : vector<8x384xf32> to vector<8x128xf32>
    %164 = vector.extract_strided_slice %146 {offsets = [0, 256], sizes = [8, 128], strides = [1, 1]} : vector<8x384xf32> to vector<8x128xf32>
    %165 = arith.mulf %154, %164 : vector<8x128xf32>
    %166 = arith.addf %163, %165 : vector<8x128xf32>
    %167 = math.tanh %166 : vector<8x128xf32>
    %cst_35 = arith.constant 1.000000e+00 : f32
    %168 = vector.broadcast %cst_35 : f32 to vector<8x128xf32>
    %169 = arith.subf %168, %162 : vector<8x128xf32>
    %170 = arith.mulf %169, %167 : vector<8x128xf32>
    %171 = arith.mulf %162, %138 : vector<8x128xf32>
    %172 = arith.addf %170, %171 : vector<8x128xf32>
    %173 = arith.index_cast %142 : i32 to index
    %c0_36 = arith.constant 0 : index
    %174 = vector.load %arg10[%173, %c0_36] : memref<64x128xf32, #tpu.memory_space<vmem>>, vector<8x128xf32>
    tpu.vector_store %arg10[%173, %c0_36], %172 {strides = array<i32>} : memref<64x128xf32, #tpu.memory_space<vmem>>, vector<8x128xf32>,
    %c5_i32 = arith.constant 5 : i32
    %c8_i32_37 = arith.constant 8 : i32
    %175 = arith.muli %c5_i32, %c8_i32_37 : i32
    %176 = tpu.assume_multiple %175, 8 : i32
    %177 = arith.index_cast %176 : i32 to index
    %c0_38 = arith.constant 0 : index
    %178 = vector.load %arg1[%177, %c0_38] : memref<64x384xf32, #tpu.memory_space<vmem>>, vector<8x384xf32>
    %cst_39 = arith.constant dense<0.000000e+00> : vector<8x384xf32>
    %179 = tpu.matmul %172, %0, %cst_39 {dimension_numbers = #tpu.dot_dimension_numbers<[1], [0], [0], [1], [0, 0, 1, 1], [], []>} : vector<8x128xf32>, vector<128x384xf32>, vector<8x384xf32> -> vector<8x384xf32>
    %180 = arith.addf %179, %3 : vector<8x384xf32>
    %181 = vector.extract_strided_slice %178 {offsets = [0, 0], sizes = [8, 128], strides = [1, 1]} : vector<8x384xf32> to vector<8x128xf32>
    %182 = vector.extract_strided_slice %180 {offsets = [0, 0], sizes = [8, 128], strides = [1, 1]} : vector<8x384xf32> to vector<8x128xf32>
    %183 = arith.addf %181, %182 : vector<8x128xf32>
    %184 = arith.negf %183 : vector<8x128xf32>
    %185 = math.exp %184 : vector<8x128xf32>
    %cst_40 = arith.constant 1.000000e+00 : f32
    %186 = vector.broadcast %cst_40 : f32 to vector<8x128xf32>
    %187 = arith.addf %186, %185 : vector<8x128xf32>
    %188 = arith.divf %186, %187 : vector<8x128xf32>
    %189 = vector.extract_strided_slice %178 {offsets = [0, 128], sizes = [8, 128], strides = [1, 1]} : vector<8x384xf32> to vector<8x128xf32>
    %190 = vector.extract_strided_slice %180 {offsets = [0, 128], sizes = [8, 128], strides = [1, 1]} : vector<8x384xf32> to vector<8x128xf32>
    %191 = arith.addf %189, %190 : vector<8x128xf32>
    %192 = arith.negf %191 : vector<8x128xf32>
    %193 = math.exp %192 : vector<8x128xf32>
    %cst_41 = arith.constant 1.000000e+00 : f32
    %194 = vector.broadcast %cst_41 : f32 to vector<8x128xf32>
    %195 = arith.addf %194, %193 : vector<8x128xf32>
    %196 = arith.divf %194, %195 : vector<8x128xf32>
    %197 = vector.extract_strided_slice %178 {offsets = [0, 256], sizes = [8, 128], strides = [1, 1]} : vector<8x384xf32> to vector<8x128xf32>
    %198 = vector.extract_strided_slice %180 {offsets = [0, 256], sizes = [8, 128], strides = [1, 1]} : vector<8x384xf32> to vector<8x128xf32>
    %199 = arith.mulf %188, %198 : vector<8x128xf32>
    %200 = arith.addf %197, %199 : vector<8x128xf32>
    %201 = math.tanh %200 : vector<8x128xf32>
    %cst_42 = arith.constant 1.000000e+00 : f32
    %202 = vector.broadcast %cst_42 : f32 to vector<8x128xf32>
    %203 = arith.subf %202, %196 : vector<8x128xf32>
    %204 = arith.mulf %203, %201 : vector<8x128xf32>
    %205 = arith.mulf %196, %172 : vector<8x128xf32>
    %206 = arith.addf %204, %205 : vector<8x128xf32>
    %207 = arith.index_cast %176 : i32 to index
    %c0_43 = arith.constant 0 : index
    %208 = vector.load %arg10[%207, %c0_43] : memref<64x128xf32, #tpu.memory_space<vmem>>, vector<8x128xf32>
    tpu.vector_store %arg10[%207, %c0_43], %206 {strides = array<i32>} : memref<64x128xf32, #tpu.memory_space<vmem>>, vector<8x128xf32>,
    %c6_i32 = arith.constant 6 : i32
    %c8_i32_44 = arith.constant 8 : i32
    %209 = arith.muli %c6_i32, %c8_i32_44 : i32
    %210 = tpu.assume_multiple %209, 8 : i32
    %211 = arith.index_cast %210 : i32 to index
    %c0_45 = arith.constant 0 : index
    %212 = vector.load %arg1[%211, %c0_45] : memref<64x384xf32, #tpu.memory_space<vmem>>, vector<8x384xf32>
    %cst_46 = arith.constant dense<0.000000e+00> : vector<8x384xf32>
    %213 = tpu.matmul %206, %0, %cst_46 {dimension_numbers = #tpu.dot_dimension_numbers<[1], [0], [0], [1], [0, 0, 1, 1], [], []>} : vector<8x128xf32>, vector<128x384xf32>, vector<8x384xf32> -> vector<8x384xf32>
    %214 = arith.addf %213, %3 : vector<8x384xf32>
    %215 = vector.extract_strided_slice %212 {offsets = [0, 0], sizes = [8, 128], strides = [1, 1]} : vector<8x384xf32> to vector<8x128xf32>
    %216 = vector.extract_strided_slice %214 {offsets = [0, 0], sizes = [8, 128], strides = [1, 1]} : vector<8x384xf32> to vector<8x128xf32>
    %217 = arith.addf %215, %216 : vector<8x128xf32>
    %218 = arith.negf %217 : vector<8x128xf32>
    %219 = math.exp %218 : vector<8x128xf32>
    %cst_47 = arith.constant 1.000000e+00 : f32
    %220 = vector.broadcast %cst_47 : f32 to vector<8x128xf32>
    %221 = arith.addf %220, %219 : vector<8x128xf32>
    %222 = arith.divf %220, %221 : vector<8x128xf32>
    %223 = vector.extract_strided_slice %212 {offsets = [0, 128], sizes = [8, 128], strides = [1, 1]} : vector<8x384xf32> to vector<8x128xf32>
    %224 = vector.extract_strided_slice %214 {offsets = [0, 128], sizes = [8, 128], strides = [1, 1]} : vector<8x384xf32> to vector<8x128xf32>
    %225 = arith.addf %223, %224 : vector<8x128xf32>
    %226 = arith.negf %225 : vector<8x128xf32>
    %227 = math.exp %226 : vector<8x128xf32>
    %cst_48 = arith.constant 1.000000e+00 : f32
    %228 = vector.broadcast %cst_48 : f32 to vector<8x128xf32>
    %229 = arith.addf %228, %227 : vector<8x128xf32>
    %230 = arith.divf %228, %229 : vector<8x128xf32>
    %231 = vector.extract_strided_slice %212 {offsets = [0, 256], sizes = [8, 128], strides = [1, 1]} : vector<8x384xf32> to vector<8x128xf32>
    %232 = vector.extract_strided_slice %214 {offsets = [0, 256], sizes = [8, 128], strides = [1, 1]} : vector<8x384xf32> to vector<8x128xf32>
    %233 = arith.mulf %222, %232 : vector<8x128xf32>
    %234 = arith.addf %231, %233 : vector<8x128xf32>
    %235 = math.tanh %234 : vector<8x128xf32>
    %cst_49 = arith.constant 1.000000e+00 : f32
    %236 = vector.broadcast %cst_49 : f32 to vector<8x128xf32>
    %237 = arith.subf %236, %230 : vector<8x128xf32>
    %238 = arith.mulf %237, %235 : vector<8x128xf32>
    %239 = arith.mulf %230, %206 : vector<8x128xf32>
    %240 = arith.addf %238, %239 : vector<8x128xf32>
    %241 = arith.index_cast %210 : i32 to index
    %c0_50 = arith.constant 0 : index
    %242 = vector.load %arg10[%241, %c0_50] : memref<64x128xf32, #tpu.memory_space<vmem>>, vector<8x128xf32>
    tpu.vector_store %arg10[%241, %c0_50], %240 {strides = array<i32>} : memref<64x128xf32, #tpu.memory_space<vmem>>, vector<8x128xf32>,
    %c7_i32 = arith.constant 7 : i32
    %c8_i32_51 = arith.constant 8 : i32
    %243 = arith.muli %c7_i32, %c8_i32_51 : i32
    %244 = tpu.assume_multiple %243, 8 : i32
    %245 = arith.index_cast %244 : i32 to index
    %c0_52 = arith.constant 0 : index
    %246 = vector.load %arg1[%245, %c0_52] : memref<64x384xf32, #tpu.memory_space<vmem>>, vector<8x384xf32>
    %cst_53 = arith.constant dense<0.000000e+00> : vector<8x384xf32>
    %247 = tpu.matmul %240, %0, %cst_53 {dimension_numbers = #tpu.dot_dimension_numbers<[1], [0], [0], [1], [0, 0, 1, 1], [], []>} : vector<8x128xf32>, vector<128x384xf32>, vector<8x384xf32> -> vector<8x384xf32>
    %248 = arith.addf %247, %3 : vector<8x384xf32>
    %249 = vector.extract_strided_slice %246 {offsets = [0, 0], sizes = [8, 128], strides = [1, 1]} : vector<8x384xf32> to vector<8x128xf32>
    %250 = vector.extract_strided_slice %248 {offsets = [0, 0], sizes = [8, 128], strides = [1, 1]} : vector<8x384xf32> to vector<8x128xf32>
    %251 = arith.addf %249, %250 : vector<8x128xf32>
    %252 = arith.negf %251 : vector<8x128xf32>
    %253 = math.exp %252 : vector<8x128xf32>
    %cst_54 = arith.constant 1.000000e+00 : f32
    %254 = vector.broadcast %cst_54 : f32 to vector<8x128xf32>
    %255 = arith.addf %254, %253 : vector<8x128xf32>
    %256 = arith.divf %254, %255 : vector<8x128xf32>
    %257 = vector.extract_strided_slice %246 {offsets = [0, 128], sizes = [8, 128], strides = [1, 1]} : vector<8x384xf32> to vector<8x128xf32>
    %258 = vector.extract_strided_slice %248 {offsets = [0, 128], sizes = [8, 128], strides = [1, 1]} : vector<8x384xf32> to vector<8x128xf32>
    %259 = arith.addf %257, %258 : vector<8x128xf32>
    %260 = arith.negf %259 : vector<8x128xf32>
    %261 = math.exp %260 : vector<8x128xf32>
    %cst_55 = arith.constant 1.000000e+00 : f32
    %262 = vector.broadcast %cst_55 : f32 to vector<8x128xf32>
    %263 = arith.addf %262, %261 : vector<8x128xf32>
    %264 = arith.divf %262, %263 : vector<8x128xf32>
    %265 = vector.extract_strided_slice %246 {offsets = [0, 256], sizes = [8, 128], strides = [1, 1]} : vector<8x384xf32> to vector<8x128xf32>
    %266 = vector.extract_strided_slice %248 {offsets = [0, 256], sizes = [8, 128], strides = [1, 1]} : vector<8x384xf32> to vector<8x128xf32>
    %267 = arith.mulf %256, %266 : vector<8x128xf32>
    %268 = arith.addf %265, %267 : vector<8x128xf32>
    %269 = math.tanh %268 : vector<8x128xf32>
    %cst_56 = arith.constant 1.000000e+00 : f32
    %270 = vector.broadcast %cst_56 : f32 to vector<8x128xf32>
    %271 = arith.subf %270, %264 : vector<8x128xf32>
    %272 = arith.mulf %271, %269 : vector<8x128xf32>
    %273 = arith.mulf %264, %240 : vector<8x128xf32>
    %274 = arith.addf %272, %273 : vector<8x128xf32>
    %275 = arith.index_cast %244 : i32 to index
    %c0_57 = arith.constant 0 : index
    %276 = vector.load %arg10[%275, %c0_57] : memref<64x128xf32, #tpu.memory_space<vmem>>, vector<8x128xf32>
    tpu.vector_store %arg10[%275, %c0_57], %274 {strides = array<i32>} : memref<64x128xf32, #tpu.memory_space<vmem>>, vector<8x128xf32>,
    %c8_i32_58 = arith.constant 8 : i32
    %c0_59 = arith.constant 0 : index
    %c0_60 = arith.constant 0 : index
    %c0_61 = arith.constant 0 : index
    %277 = vector.load %arg9[%c0_59, %c0_60, %c0_61] : memref<2x8x128xf32, #tpu.memory_space<vmem>>, vector<1x8x128xf32>
    %278 = vector.shape_cast %277 : vector<1x8x128xf32> to vector<8x128xf32>
    %279 = vector.shape_cast %274 : vector<8x128xf32> to vector<1x8x128xf32>
    tpu.vector_store %arg9[%c0_59, %c0_60, %c0_61], %279 {strides = array<i32>} : memref<2x8x128xf32, #tpu.memory_space<vmem>>, vector<1x8x128xf32>,
    %c0_62 = arith.constant 0 : index
    %c0_63 = arith.constant 0 : index
    %280 = vector.load %arg10[%c0_62, %c0_63] : memref<64x128xf32, #tpu.memory_space<vmem>>, vector<64x128xf32>
    %c0_64 = arith.constant 0 : index
    %c0_65 = arith.constant 0 : index
    %281 = vector.load %arg4[%c0_64, %c0_65] : memref<128x384xf32, #tpu.memory_space<vmem>>, vector<128x384xf32>
    %cst_66 = arith.constant dense<0.000000e+00> : vector<64x384xf32>
    %282 = tpu.matmul %280, %281, %cst_66 {dimension_numbers = #tpu.dot_dimension_numbers<[1], [0], [0], [1], [0, 0, 1, 1], [], []>} : vector<64x128xf32>, vector<128x384xf32>, vector<64x384xf32> -> vector<64x384xf32>
    %c0_67 = arith.constant 0 : index
    %c0_68 = arith.constant 0 : index
    %283 = vector.load %arg5[%c0_67, %c0_68] : memref<1x384xf32, #tpu.memory_space<vmem>>, vector<1x384xf32>
    %284 = vector.broadcast %283 : vector<1x384xf32> to vector<64x384xf32>
    %285 = arith.addf %282, %284 : vector<64x384xf32>
    %c0_69 = arith.constant 0 : index
    %c0_70 = arith.constant 0 : index
    %286 = vector.load %arg11[%c0_69, %c0_70] : memref<64x384xf32, #tpu.memory_space<vmem>>, vector<64x384xf32>
    tpu.vector_store %arg11[%c0_69, %c0_70], %285 {strides = array<i32>} : memref<64x384xf32, #tpu.memory_space<vmem>>, vector<64x384xf32>,
    %c0_71 = arith.constant 0 : index
    %c0_72 = arith.constant 0 : index
    %287 = vector.load %arg6[%c0_71, %c0_72] : memref<128x384xf32, #tpu.memory_space<vmem>>, vector<128x384xf32>
    %c0_73 = arith.constant 0 : index
    %c0_74 = arith.constant 0 : index
    %288 = vector.load %arg7[%c0_73, %c0_74] : memref<1x384xf32, #tpu.memory_space<vmem>>, vector<1x384xf32>
    %289 = vector.shape_cast %288 : vector<1x384xf32> to vector<1x384xf32>
    %290 = vector.broadcast %289 : vector<1x384xf32> to vector<8x384xf32>
    %cst_75 = arith.constant 0.000000e+00 : f32
    %291 = vector.broadcast %cst_75 : f32 to vector<8x128xf32>
    %c0_i32_76 = arith.constant 0 : i32
    %c8_i32_77 = arith.constant 8 : i32
    %292 = arith.muli %c0_i32_76, %c8_i32_77 : i32
    %293 = tpu.assume_multiple %292, 8 : i32
    %294 = arith.index_cast %293 : i32 to index
    %c0_78 = arith.constant 0 : index
    %295 = vector.load %arg11[%294, %c0_78] : memref<64x384xf32, #tpu.memory_space<vmem>>, vector<8x384xf32>
    %cst_79 = arith.constant dense<0.000000e+00> : vector<8x384xf32>
    %296 = tpu.matmul %291, %287, %cst_79 {dimension_numbers = #tpu.dot_dimension_numbers<[1], [0], [0], [1], [0, 0, 1, 1], [], []>} : vector<8x128xf32>, vector<128x384xf32>, vector<8x384xf32> -> vector<8x384xf32>
    %297 = arith.addf %296, %290 : vector<8x384xf32>
    %298 = vector.extract_strided_slice %295 {offsets = [0, 0], sizes = [8, 128], strides = [1, 1]} : vector<8x384xf32> to vector<8x128xf32>
    %299 = vector.extract_strided_slice %297 {offsets = [0, 0], sizes = [8, 128], strides = [1, 1]} : vector<8x384xf32> to vector<8x128xf32>
    %300 = arith.addf %298, %299 : vector<8x128xf32>
    %301 = arith.negf %300 : vector<8x128xf32>
    %302 = math.exp %301 : vector<8x128xf32>
    %cst_80 = arith.constant 1.000000e+00 : f32
    %303 = vector.broadcast %cst_80 : f32 to vector<8x128xf32>
    %304 = arith.addf %303, %302 : vector<8x128xf32>
    %305 = arith.divf %303, %304 : vector<8x128xf32>
    %306 = vector.extract_strided_slice %295 {offsets = [0, 128], sizes = [8, 128], strides = [1, 1]} : vector<8x384xf32> to vector<8x128xf32>
    %307 = vector.extract_strided_slice %297 {offsets = [0, 128], sizes = [8, 128], strides = [1, 1]} : vector<8x384xf32> to vector<8x128xf32>
    %308 = arith.addf %306, %307 : vector<8x128xf32>
    %309 = arith.negf %308 : vector<8x128xf32>
    %310 = math.exp %309 : vector<8x128xf32>
    %cst_81 = arith.constant 1.000000e+00 : f32
    %311 = vector.broadcast %cst_81 : f32 to vector<8x128xf32>
    %312 = arith.addf %311, %310 : vector<8x128xf32>
    %313 = arith.divf %311, %312 : vector<8x128xf32>
    %314 = vector.extract_strided_slice %295 {offsets = [0, 256], sizes = [8, 128], strides = [1, 1]} : vector<8x384xf32> to vector<8x128xf32>
    %315 = vector.extract_strided_slice %297 {offsets = [0, 256], sizes = [8, 128], strides = [1, 1]} : vector<8x384xf32> to vector<8x128xf32>
    %316 = arith.mulf %305, %315 : vector<8x128xf32>
    %317 = arith.addf %314, %316 : vector<8x128xf32>
    %318 = math.tanh %317 : vector<8x128xf32>
    %cst_82 = arith.constant 1.000000e+00 : f32
    %319 = vector.broadcast %cst_82 : f32 to vector<8x128xf32>
    %320 = arith.subf %319, %313 : vector<8x128xf32>
    %321 = arith.mulf %320, %318 : vector<8x128xf32>
    %322 = arith.mulf %313, %291 : vector<8x128xf32>
    %323 = arith.addf %321, %322 : vector<8x128xf32>
    %324 = arith.index_cast %293 : i32 to index
    %c0_83 = arith.constant 0 : index
    %325 = vector.load %arg8[%324, %c0_83] : memref<64x128xf32, #tpu.memory_space<vmem>>, vector<8x128xf32>
    tpu.vector_store %arg8[%324, %c0_83], %323 {strides = array<i32>} : memref<64x128xf32, #tpu.memory_space<vmem>>, vector<8x128xf32>,
    %c1_i32_84 = arith.constant 1 : i32
    %c8_i32_85 = arith.constant 8 : i32
    %326 = arith.muli %c1_i32_84, %c8_i32_85 : i32
    %327 = tpu.assume_multiple %326, 8 : i32
    %328 = arith.index_cast %327 : i32 to index
    %c0_86 = arith.constant 0 : index
    %329 = vector.load %arg11[%328, %c0_86] : memref<64x384xf32, #tpu.memory_space<vmem>>, vector<8x384xf32>
    %cst_87 = arith.constant dense<0.000000e+00> : vector<8x384xf32>
    %330 = tpu.matmul %323, %287, %cst_87 {dimension_numbers = #tpu.dot_dimension_numbers<[1], [0], [0], [1], [0, 0, 1, 1], [], []>} : vector<8x128xf32>, vector<128x384xf32>, vector<8x384xf32> -> vector<8x384xf32>
    %331 = arith.addf %330, %290 : vector<8x384xf32>
    %332 = vector.extract_strided_slice %329 {offsets = [0, 0], sizes = [8, 128], strides = [1, 1]} : vector<8x384xf32> to vector<8x128xf32>
    %333 = vector.extract_strided_slice %331 {offsets = [0, 0], sizes = [8, 128], strides = [1, 1]} : vector<8x384xf32> to vector<8x128xf32>
    %334 = arith.addf %332, %333 : vector<8x128xf32>
    %335 = arith.negf %334 : vector<8x128xf32>
    %336 = math.exp %335 : vector<8x128xf32>
    %cst_88 = arith.constant 1.000000e+00 : f32
    %337 = vector.broadcast %cst_88 : f32 to vector<8x128xf32>
    %338 = arith.addf %337, %336 : vector<8x128xf32>
    %339 = arith.divf %337, %338 : vector<8x128xf32>
    %340 = vector.extract_strided_slice %329 {offsets = [0, 128], sizes = [8, 128], strides = [1, 1]} : vector<8x384xf32> to vector<8x128xf32>
    %341 = vector.extract_strided_slice %331 {offsets = [0, 128], sizes = [8, 128], strides = [1, 1]} : vector<8x384xf32> to vector<8x128xf32>
    %342 = arith.addf %340, %341 : vector<8x128xf32>
    %343 = arith.negf %342 : vector<8x128xf32>
    %344 = math.exp %343 : vector<8x128xf32>
    %cst_89 = arith.constant 1.000000e+00 : f32
    %345 = vector.broadcast %cst_89 : f32 to vector<8x128xf32>
    %346 = arith.addf %345, %344 : vector<8x128xf32>
    %347 = arith.divf %345, %346 : vector<8x128xf32>
    %348 = vector.extract_strided_slice %329 {offsets = [0, 256], sizes = [8, 128], strides = [1, 1]} : vector<8x384xf32> to vector<8x128xf32>
    %349 = vector.extract_strided_slice %331 {offsets = [0, 256], sizes = [8, 128], strides = [1, 1]} : vector<8x384xf32> to vector<8x128xf32>
    %350 = arith.mulf %339, %349 : vector<8x128xf32>
    %351 = arith.addf %348, %350 : vector<8x128xf32>
    %352 = math.tanh %351 : vector<8x128xf32>
    %cst_90 = arith.constant 1.000000e+00 : f32
    %353 = vector.broadcast %cst_90 : f32 to vector<8x128xf32>
    %354 = arith.subf %353, %347 : vector<8x128xf32>
    %355 = arith.mulf %354, %352 : vector<8x128xf32>
    %356 = arith.mulf %347, %323 : vector<8x128xf32>
    %357 = arith.addf %355, %356 : vector<8x128xf32>
    %358 = arith.index_cast %327 : i32 to index
    %c0_91 = arith.constant 0 : index
    %359 = vector.load %arg8[%358, %c0_91] : memref<64x128xf32, #tpu.memory_space<vmem>>, vector<8x128xf32>
    tpu.vector_store %arg8[%358, %c0_91], %357 {strides = array<i32>} : memref<64x128xf32, #tpu.memory_space<vmem>>, vector<8x128xf32>,
    %c2_i32_92 = arith.constant 2 : i32
    %c8_i32_93 = arith.constant 8 : i32
    %360 = arith.muli %c2_i32_92, %c8_i32_93 : i32
    %361 = tpu.assume_multiple %360, 8 : i32
    %362 = arith.index_cast %361 : i32 to index
    %c0_94 = arith.constant 0 : index
    %363 = vector.load %arg11[%362, %c0_94] : memref<64x384xf32, #tpu.memory_space<vmem>>, vector<8x384xf32>
    %cst_95 = arith.constant dense<0.000000e+00> : vector<8x384xf32>
    %364 = tpu.matmul %357, %287, %cst_95 {dimension_numbers = #tpu.dot_dimension_numbers<[1], [0], [0], [1], [0, 0, 1, 1], [], []>} : vector<8x128xf32>, vector<128x384xf32>, vector<8x384xf32> -> vector<8x384xf32>
    %365 = arith.addf %364, %290 : vector<8x384xf32>
    %366 = vector.extract_strided_slice %363 {offsets = [0, 0], sizes = [8, 128], strides = [1, 1]} : vector<8x384xf32> to vector<8x128xf32>
    %367 = vector.extract_strided_slice %365 {offsets = [0, 0], sizes = [8, 128], strides = [1, 1]} : vector<8x384xf32> to vector<8x128xf32>
    %368 = arith.addf %366, %367 : vector<8x128xf32>
    %369 = arith.negf %368 : vector<8x128xf32>
    %370 = math.exp %369 : vector<8x128xf32>
    %cst_96 = arith.constant 1.000000e+00 : f32
    %371 = vector.broadcast %cst_96 : f32 to vector<8x128xf32>
    %372 = arith.addf %371, %370 : vector<8x128xf32>
    %373 = arith.divf %371, %372 : vector<8x128xf32>
    %374 = vector.extract_strided_slice %363 {offsets = [0, 128], sizes = [8, 128], strides = [1, 1]} : vector<8x384xf32> to vector<8x128xf32>
    %375 = vector.extract_strided_slice %365 {offsets = [0, 128], sizes = [8, 128], strides = [1, 1]} : vector<8x384xf32> to vector<8x128xf32>
    %376 = arith.addf %374, %375 : vector<8x128xf32>
    %377 = arith.negf %376 : vector<8x128xf32>
    %378 = math.exp %377 : vector<8x128xf32>
    %cst_97 = arith.constant 1.000000e+00 : f32
    %379 = vector.broadcast %cst_97 : f32 to vector<8x128xf32>
    %380 = arith.addf %379, %378 : vector<8x128xf32>
    %381 = arith.divf %379, %380 : vector<8x128xf32>
    %382 = vector.extract_strided_slice %363 {offsets = [0, 256], sizes = [8, 128], strides = [1, 1]} : vector<8x384xf32> to vector<8x128xf32>
    %383 = vector.extract_strided_slice %365 {offsets = [0, 256], sizes = [8, 128], strides = [1, 1]} : vector<8x384xf32> to vector<8x128xf32>
    %384 = arith.mulf %373, %383 : vector<8x128xf32>
    %385 = arith.addf %382, %384 : vector<8x128xf32>
    %386 = math.tanh %385 : vector<8x128xf32>
    %cst_98 = arith.constant 1.000000e+00 : f32
    %387 = vector.broadcast %cst_98 : f32 to vector<8x128xf32>
    %388 = arith.subf %387, %381 : vector<8x128xf32>
    %389 = arith.mulf %388, %386 : vector<8x128xf32>
    %390 = arith.mulf %381, %357 : vector<8x128xf32>
    %391 = arith.addf %389, %390 : vector<8x128xf32>
    %392 = arith.index_cast %361 : i32 to index
    %c0_99 = arith.constant 0 : index
    %393 = vector.load %arg8[%392, %c0_99] : memref<64x128xf32, #tpu.memory_space<vmem>>, vector<8x128xf32>
    tpu.vector_store %arg8[%392, %c0_99], %391 {strides = array<i32>} : memref<64x128xf32, #tpu.memory_space<vmem>>, vector<8x128xf32>,
    %c3_i32_100 = arith.constant 3 : i32
    %c8_i32_101 = arith.constant 8 : i32
    %394 = arith.muli %c3_i32_100, %c8_i32_101 : i32
    %395 = tpu.assume_multiple %394, 8 : i32
    %396 = arith.index_cast %395 : i32 to index
    %c0_102 = arith.constant 0 : index
    %397 = vector.load %arg11[%396, %c0_102] : memref<64x384xf32, #tpu.memory_space<vmem>>, vector<8x384xf32>
    %cst_103 = arith.constant dense<0.000000e+00> : vector<8x384xf32>
    %398 = tpu.matmul %391, %287, %cst_103 {dimension_numbers = #tpu.dot_dimension_numbers<[1], [0], [0], [1], [0, 0, 1, 1], [], []>} : vector<8x128xf32>, vector<128x384xf32>, vector<8x384xf32> -> vector<8x384xf32>
    %399 = arith.addf %398, %290 : vector<8x384xf32>
    %400 = vector.extract_strided_slice %397 {offsets = [0, 0], sizes = [8, 128], strides = [1, 1]} : vector<8x384xf32> to vector<8x128xf32>
    %401 = vector.extract_strided_slice %399 {offsets = [0, 0], sizes = [8, 128], strides = [1, 1]} : vector<8x384xf32> to vector<8x128xf32>
    %402 = arith.addf %400, %401 : vector<8x128xf32>
    %403 = arith.negf %402 : vector<8x128xf32>
    %404 = math.exp %403 : vector<8x128xf32>
    %cst_104 = arith.constant 1.000000e+00 : f32
    %405 = vector.broadcast %cst_104 : f32 to vector<8x128xf32>
    %406 = arith.addf %405, %404 : vector<8x128xf32>
    %407 = arith.divf %405, %406 : vector<8x128xf32>
    %408 = vector.extract_strided_slice %397 {offsets = [0, 128], sizes = [8, 128], strides = [1, 1]} : vector<8x384xf32> to vector<8x128xf32>
    %409 = vector.extract_strided_slice %399 {offsets = [0, 128], sizes = [8, 128], strides = [1, 1]} : vector<8x384xf32> to vector<8x128xf32>
    %410 = arith.addf %408, %409 : vector<8x128xf32>
    %411 = arith.negf %410 : vector<8x128xf32>
    %412 = math.exp %411 : vector<8x128xf32>
    %cst_105 = arith.constant 1.000000e+00 : f32
    %413 = vector.broadcast %cst_105 : f32 to vector<8x128xf32>
    %414 = arith.addf %413, %412 : vector<8x128xf32>
    %415 = arith.divf %413, %414 : vector<8x128xf32>
    %416 = vector.extract_strided_slice %397 {offsets = [0, 256], sizes = [8, 128], strides = [1, 1]} : vector<8x384xf32> to vector<8x128xf32>
    %417 = vector.extract_strided_slice %399 {offsets = [0, 256], sizes = [8, 128], strides = [1, 1]} : vector<8x384xf32> to vector<8x128xf32>
    %418 = arith.mulf %407, %417 : vector<8x128xf32>
    %419 = arith.addf %416, %418 : vector<8x128xf32>
    %420 = math.tanh %419 : vector<8x128xf32>
    %cst_106 = arith.constant 1.000000e+00 : f32
    %421 = vector.broadcast %cst_106 : f32 to vector<8x128xf32>
    %422 = arith.subf %421, %415 : vector<8x128xf32>
    %423 = arith.mulf %422, %420 : vector<8x128xf32>
    %424 = arith.mulf %415, %391 : vector<8x128xf32>
    %425 = arith.addf %423, %424 : vector<8x128xf32>
    %426 = arith.index_cast %395 : i32 to index
    %c0_107 = arith.constant 0 : index
    %427 = vector.load %arg8[%426, %c0_107] : memref<64x128xf32, #tpu.memory_space<vmem>>, vector<8x128xf32>
    tpu.vector_store %arg8[%426, %c0_107], %425 {strides = array<i32>} : memref<64x128xf32, #tpu.memory_space<vmem>>, vector<8x128xf32>,
    %c4_i32_108 = arith.constant 4 : i32
    %c8_i32_109 = arith.constant 8 : i32
    %428 = arith.muli %c4_i32_108, %c8_i32_109 : i32
    %429 = tpu.assume_multiple %428, 8 : i32
    %430 = arith.index_cast %429 : i32 to index
    %c0_110 = arith.constant 0 : index
    %431 = vector.load %arg11[%430, %c0_110] : memref<64x384xf32, #tpu.memory_space<vmem>>, vector<8x384xf32>
    %cst_111 = arith.constant dense<0.000000e+00> : vector<8x384xf32>
    %432 = tpu.matmul %425, %287, %cst_111 {dimension_numbers = #tpu.dot_dimension_numbers<[1], [0], [0], [1], [0, 0, 1, 1], [], []>} : vector<8x128xf32>, vector<128x384xf32>, vector<8x384xf32> -> vector<8x384xf32>
    %433 = arith.addf %432, %290 : vector<8x384xf32>
    %434 = vector.extract_strided_slice %431 {offsets = [0, 0], sizes = [8, 128], strides = [1, 1]} : vector<8x384xf32> to vector<8x128xf32>
    %435 = vector.extract_strided_slice %433 {offsets = [0, 0], sizes = [8, 128], strides = [1, 1]} : vector<8x384xf32> to vector<8x128xf32>
    %436 = arith.addf %434, %435 : vector<8x128xf32>
    %437 = arith.negf %436 : vector<8x128xf32>
    %438 = math.exp %437 : vector<8x128xf32>
    %cst_112 = arith.constant 1.000000e+00 : f32
    %439 = vector.broadcast %cst_112 : f32 to vector<8x128xf32>
    %440 = arith.addf %439, %438 : vector<8x128xf32>
    %441 = arith.divf %439, %440 : vector<8x128xf32>
    %442 = vector.extract_strided_slice %431 {offsets = [0, 128], sizes = [8, 128], strides = [1, 1]} : vector<8x384xf32> to vector<8x128xf32>
    %443 = vector.extract_strided_slice %433 {offsets = [0, 128], sizes = [8, 128], strides = [1, 1]} : vector<8x384xf32> to vector<8x128xf32>
    %444 = arith.addf %442, %443 : vector<8x128xf32>
    %445 = arith.negf %444 : vector<8x128xf32>
    %446 = math.exp %445 : vector<8x128xf32>
    %cst_113 = arith.constant 1.000000e+00 : f32
    %447 = vector.broadcast %cst_113 : f32 to vector<8x128xf32>
    %448 = arith.addf %447, %446 : vector<8x128xf32>
    %449 = arith.divf %447, %448 : vector<8x128xf32>
    %450 = vector.extract_strided_slice %431 {offsets = [0, 256], sizes = [8, 128], strides = [1, 1]} : vector<8x384xf32> to vector<8x128xf32>
    %451 = vector.extract_strided_slice %433 {offsets = [0, 256], sizes = [8, 128], strides = [1, 1]} : vector<8x384xf32> to vector<8x128xf32>
    %452 = arith.mulf %441, %451 : vector<8x128xf32>
    %453 = arith.addf %450, %452 : vector<8x128xf32>
    %454 = math.tanh %453 : vector<8x128xf32>
    %cst_114 = arith.constant 1.000000e+00 : f32
    %455 = vector.broadcast %cst_114 : f32 to vector<8x128xf32>
    %456 = arith.subf %455, %449 : vector<8x128xf32>
    %457 = arith.mulf %456, %454 : vector<8x128xf32>
    %458 = arith.mulf %449, %425 : vector<8x128xf32>
    %459 = arith.addf %457, %458 : vector<8x128xf32>
    %460 = arith.index_cast %429 : i32 to index
    %c0_115 = arith.constant 0 : index
    %461 = vector.load %arg8[%460, %c0_115] : memref<64x128xf32, #tpu.memory_space<vmem>>, vector<8x128xf32>
    tpu.vector_store %arg8[%460, %c0_115], %459 {strides = array<i32>} : memref<64x128xf32, #tpu.memory_space<vmem>>, vector<8x128xf32>,
    %c5_i32_116 = arith.constant 5 : i32
    %c8_i32_117 = arith.constant 8 : i32
    %462 = arith.muli %c5_i32_116, %c8_i32_117 : i32
    %463 = tpu.assume_multiple %462, 8 : i32
    %464 = arith.index_cast %463 : i32 to index
    %c0_118 = arith.constant 0 : index
    %465 = vector.load %arg11[%464, %c0_118] : memref<64x384xf32, #tpu.memory_space<vmem>>, vector<8x384xf32>
    %cst_119 = arith.constant dense<0.000000e+00> : vector<8x384xf32>
    %466 = tpu.matmul %459, %287, %cst_119 {dimension_numbers = #tpu.dot_dimension_numbers<[1], [0], [0], [1], [0, 0, 1, 1], [], []>} : vector<8x128xf32>, vector<128x384xf32>, vector<8x384xf32> -> vector<8x384xf32>
    %467 = arith.addf %466, %290 : vector<8x384xf32>
    %468 = vector.extract_strided_slice %465 {offsets = [0, 0], sizes = [8, 128], strides = [1, 1]} : vector<8x384xf32> to vector<8x128xf32>
    %469 = vector.extract_strided_slice %467 {offsets = [0, 0], sizes = [8, 128], strides = [1, 1]} : vector<8x384xf32> to vector<8x128xf32>
    %470 = arith.addf %468, %469 : vector<8x128xf32>
    %471 = arith.negf %470 : vector<8x128xf32>
    %472 = math.exp %471 : vector<8x128xf32>
    %cst_120 = arith.constant 1.000000e+00 : f32
    %473 = vector.broadcast %cst_120 : f32 to vector<8x128xf32>
    %474 = arith.addf %473, %472 : vector<8x128xf32>
    %475 = arith.divf %473, %474 : vector<8x128xf32>
    %476 = vector.extract_strided_slice %465 {offsets = [0, 128], sizes = [8, 128], strides = [1, 1]} : vector<8x384xf32> to vector<8x128xf32>
    %477 = vector.extract_strided_slice %467 {offsets = [0, 128], sizes = [8, 128], strides = [1, 1]} : vector<8x384xf32> to vector<8x128xf32>
    %478 = arith.addf %476, %477 : vector<8x128xf32>
    %479 = arith.negf %478 : vector<8x128xf32>
    %480 = math.exp %479 : vector<8x128xf32>
    %cst_121 = arith.constant 1.000000e+00 : f32
    %481 = vector.broadcast %cst_121 : f32 to vector<8x128xf32>
    %482 = arith.addf %481, %480 : vector<8x128xf32>
    %483 = arith.divf %481, %482 : vector<8x128xf32>
    %484 = vector.extract_strided_slice %465 {offsets = [0, 256], sizes = [8, 128], strides = [1, 1]} : vector<8x384xf32> to vector<8x128xf32>
    %485 = vector.extract_strided_slice %467 {offsets = [0, 256], sizes = [8, 128], strides = [1, 1]} : vector<8x384xf32> to vector<8x128xf32>
    %486 = arith.mulf %475, %485 : vector<8x128xf32>
    %487 = arith.addf %484, %486 : vector<8x128xf32>
    %488 = math.tanh %487 : vector<8x128xf32>
    %cst_122 = arith.constant 1.000000e+00 : f32
    %489 = vector.broadcast %cst_122 : f32 to vector<8x128xf32>
    %490 = arith.subf %489, %483 : vector<8x128xf32>
    %491 = arith.mulf %490, %488 : vector<8x128xf32>
    %492 = arith.mulf %483, %459 : vector<8x128xf32>
    %493 = arith.addf %491, %492 : vector<8x128xf32>
    %494 = arith.index_cast %463 : i32 to index
    %c0_123 = arith.constant 0 : index
    %495 = vector.load %arg8[%494, %c0_123] : memref<64x128xf32, #tpu.memory_space<vmem>>, vector<8x128xf32>
    tpu.vector_store %arg8[%494, %c0_123], %493 {strides = array<i32>} : memref<64x128xf32, #tpu.memory_space<vmem>>, vector<8x128xf32>,
    %c6_i32_124 = arith.constant 6 : i32
    %c8_i32_125 = arith.constant 8 : i32
    %496 = arith.muli %c6_i32_124, %c8_i32_125 : i32
    %497 = tpu.assume_multiple %496, 8 : i32
    %498 = arith.index_cast %497 : i32 to index
    %c0_126 = arith.constant 0 : index
    %499 = vector.load %arg11[%498, %c0_126] : memref<64x384xf32, #tpu.memory_space<vmem>>, vector<8x384xf32>
    %cst_127 = arith.constant dense<0.000000e+00> : vector<8x384xf32>
    %500 = tpu.matmul %493, %287, %cst_127 {dimension_numbers = #tpu.dot_dimension_numbers<[1], [0], [0], [1], [0, 0, 1, 1], [], []>} : vector<8x128xf32>, vector<128x384xf32>, vector<8x384xf32> -> vector<8x384xf32>
    %501 = arith.addf %500, %290 : vector<8x384xf32>
    %502 = vector.extract_strided_slice %499 {offsets = [0, 0], sizes = [8, 128], strides = [1, 1]} : vector<8x384xf32> to vector<8x128xf32>
    %503 = vector.extract_strided_slice %501 {offsets = [0, 0], sizes = [8, 128], strides = [1, 1]} : vector<8x384xf32> to vector<8x128xf32>
    %504 = arith.addf %502, %503 : vector<8x128xf32>
    %505 = arith.negf %504 : vector<8x128xf32>
    %506 = math.exp %505 : vector<8x128xf32>
    %cst_128 = arith.constant 1.000000e+00 : f32
    %507 = vector.broadcast %cst_128 : f32 to vector<8x128xf32>
    %508 = arith.addf %507, %506 : vector<8x128xf32>
    %509 = arith.divf %507, %508 : vector<8x128xf32>
    %510 = vector.extract_strided_slice %499 {offsets = [0, 128], sizes = [8, 128], strides = [1, 1]} : vector<8x384xf32> to vector<8x128xf32>
    %511 = vector.extract_strided_slice %501 {offsets = [0, 128], sizes = [8, 128], strides = [1, 1]} : vector<8x384xf32> to vector<8x128xf32>
    %512 = arith.addf %510, %511 : vector<8x128xf32>
    %513 = arith.negf %512 : vector<8x128xf32>
    %514 = math.exp %513 : vector<8x128xf32>
    %cst_129 = arith.constant 1.000000e+00 : f32
    %515 = vector.broadcast %cst_129 : f32 to vector<8x128xf32>
    %516 = arith.addf %515, %514 : vector<8x128xf32>
    %517 = arith.divf %515, %516 : vector<8x128xf32>
    %518 = vector.extract_strided_slice %499 {offsets = [0, 256], sizes = [8, 128], strides = [1, 1]} : vector<8x384xf32> to vector<8x128xf32>
    %519 = vector.extract_strided_slice %501 {offsets = [0, 256], sizes = [8, 128], strides = [1, 1]} : vector<8x384xf32> to vector<8x128xf32>
    %520 = arith.mulf %509, %519 : vector<8x128xf32>
    %521 = arith.addf %518, %520 : vector<8x128xf32>
    %522 = math.tanh %521 : vector<8x128xf32>
    %cst_130 = arith.constant 1.000000e+00 : f32
    %523 = vector.broadcast %cst_130 : f32 to vector<8x128xf32>
    %524 = arith.subf %523, %517 : vector<8x128xf32>
    %525 = arith.mulf %524, %522 : vector<8x128xf32>
    %526 = arith.mulf %517, %493 : vector<8x128xf32>
    %527 = arith.addf %525, %526 : vector<8x128xf32>
    %528 = arith.index_cast %497 : i32 to index
    %c0_131 = arith.constant 0 : index
    %529 = vector.load %arg8[%528, %c0_131] : memref<64x128xf32, #tpu.memory_space<vmem>>, vector<8x128xf32>
    tpu.vector_store %arg8[%528, %c0_131], %527 {strides = array<i32>} : memref<64x128xf32, #tpu.memory_space<vmem>>, vector<8x128xf32>,
    %c7_i32_132 = arith.constant 7 : i32
    %c8_i32_133 = arith.constant 8 : i32
    %530 = arith.muli %c7_i32_132, %c8_i32_133 : i32
    %531 = tpu.assume_multiple %530, 8 : i32
    %532 = arith.index_cast %531 : i32 to index
    %c0_134 = arith.constant 0 : index
    %533 = vector.load %arg11[%532, %c0_134] : memref<64x384xf32, #tpu.memory_space<vmem>>, vector<8x384xf32>
    %cst_135 = arith.constant dense<0.000000e+00> : vector<8x384xf32>
    %534 = tpu.matmul %527, %287, %cst_135 {dimension_numbers = #tpu.dot_dimension_numbers<[1], [0], [0], [1], [0, 0, 1, 1], [], []>} : vector<8x128xf32>, vector<128x384xf32>, vector<8x384xf32> -> vector<8x384xf32>
    %535 = arith.addf %534, %290 : vector<8x384xf32>
    %536 = vector.extract_strided_slice %533 {offsets = [0, 0], sizes = [8, 128], strides = [1, 1]} : vector<8x384xf32> to vector<8x128xf32>
    %537 = vector.extract_strided_slice %535 {offsets = [0, 0], sizes = [8, 128], strides = [1, 1]} : vector<8x384xf32> to vector<8x128xf32>
    %538 = arith.addf %536, %537 : vector<8x128xf32>
    %539 = arith.negf %538 : vector<8x128xf32>
    %540 = math.exp %539 : vector<8x128xf32>
    %cst_136 = arith.constant 1.000000e+00 : f32
    %541 = vector.broadcast %cst_136 : f32 to vector<8x128xf32>
    %542 = arith.addf %541, %540 : vector<8x128xf32>
    %543 = arith.divf %541, %542 : vector<8x128xf32>
    %544 = vector.extract_strided_slice %533 {offsets = [0, 128], sizes = [8, 128], strides = [1, 1]} : vector<8x384xf32> to vector<8x128xf32>
    %545 = vector.extract_strided_slice %535 {offsets = [0, 128], sizes = [8, 128], strides = [1, 1]} : vector<8x384xf32> to vector<8x128xf32>
    %546 = arith.addf %544, %545 : vector<8x128xf32>
    %547 = arith.negf %546 : vector<8x128xf32>
    %548 = math.exp %547 : vector<8x128xf32>
    %cst_137 = arith.constant 1.000000e+00 : f32
    %549 = vector.broadcast %cst_137 : f32 to vector<8x128xf32>
    %550 = arith.addf %549, %548 : vector<8x128xf32>
    %551 = arith.divf %549, %550 : vector<8x128xf32>
    %552 = vector.extract_strided_slice %533 {offsets = [0, 256], sizes = [8, 128], strides = [1, 1]} : vector<8x384xf32> to vector<8x128xf32>
    %553 = vector.extract_strided_slice %535 {offsets = [0, 256], sizes = [8, 128], strides = [1, 1]} : vector<8x384xf32> to vector<8x128xf32>
    %554 = arith.mulf %543, %553 : vector<8x128xf32>
    %555 = arith.addf %552, %554 : vector<8x128xf32>
    %556 = math.tanh %555 : vector<8x128xf32>
    %cst_138 = arith.constant 1.000000e+00 : f32
    %557 = vector.broadcast %cst_138 : f32 to vector<8x128xf32>
    %558 = arith.subf %557, %551 : vector<8x128xf32>
    %559 = arith.mulf %558, %556 : vector<8x128xf32>
    %560 = arith.mulf %551, %527 : vector<8x128xf32>
    %561 = arith.addf %559, %560 : vector<8x128xf32>
    %562 = arith.index_cast %531 : i32 to index
    %c0_139 = arith.constant 0 : index
    %563 = vector.load %arg8[%562, %c0_139] : memref<64x128xf32, #tpu.memory_space<vmem>>, vector<8x128xf32>
    tpu.vector_store %arg8[%562, %c0_139], %561 {strides = array<i32>} : memref<64x128xf32, #tpu.memory_space<vmem>>, vector<8x128xf32>,
    %c8_i32_140 = arith.constant 8 : i32
    %c1 = arith.constant 1 : index
    %c0_141 = arith.constant 0 : index
    %c0_142 = arith.constant 0 : index
    %564 = vector.load %arg9[%c1, %c0_141, %c0_142] : memref<2x8x128xf32, #tpu.memory_space<vmem>>, vector<1x8x128xf32>
    %565 = vector.shape_cast %564 : vector<1x8x128xf32> to vector<8x128xf32>
    %566 = vector.shape_cast %561 : vector<8x128xf32> to vector<1x8x128xf32>
    tpu.vector_store %arg9[%c1, %c0_141, %c0_142], %566 {strides = array<i32>} : memref<2x8x128xf32, #tpu.memory_space<vmem>>, vector<1x8x128xf32>,
    return
  }
  func.func @transform_0(%arg0: i32) -> (i32, i32) {
    %c0_i32 = arith.constant 0 : i32
    %c0_i32_0 = arith.constant 0 : i32
    %c0_i32_1 = arith.constant 0 : i32
    return %c0_i32, %c0_i32_0 : i32, i32
  }
  func.func @transform_1(%arg0: i32) -> (i32, i32) {
    %c0_i32 = arith.constant 0 : i32
    %c0_i32_0 = arith.constant 0 : i32
    %c0_i32_1 = arith.constant 0 : i32
    return %c0_i32, %c0_i32_0 : i32, i32
  }
  func.func @transform_2(%arg0: i32) -> (i32, i32) {
    %c0_i32 = arith.constant 0 : i32
    %c0_i32_0 = arith.constant 0 : i32
    %c0_i32_1 = arith.constant 0 : i32
    return %c0_i32, %c0_i32_0 : i32, i32
  }
  func.func @transform_3(%arg0: i32) -> (i32, i32) {
    %c0_i32 = arith.constant 0 : i32
    %c0_i32_0 = arith.constant 0 : i32
    %c0_i32_1 = arith.constant 0 : i32
    return %c0_i32, %c0_i32_0 : i32, i32
  }
  func.func @transform_4(%arg0: i32) -> (i32, i32) {
    %c0_i32 = arith.constant 0 : i32
    %c0_i32_0 = arith.constant 0 : i32
    %c0_i32_1 = arith.constant 0 : i32
    return %c0_i32, %c0_i32_0 : i32, i32
  }
  func.func @transform_5(%arg0: i32) -> (i32, i32) {
    %c0_i32 = arith.constant 0 : i32
    %c0_i32_0 = arith.constant 0 : i32
    %c0_i32_1 = arith.constant 0 : i32
    return %c0_i32, %c0_i32_0 : i32, i32
  }
  func.func @transform_6(%arg0: i32) -> (i32, i32) {
    %c0_i32 = arith.constant 0 : i32
    %c0_i32_0 = arith.constant 0 : i32
    %c0_i32_1 = arith.constant 0 : i32
    return %c0_i32, %c0_i32_0 : i32, i32
  }
  func.func @transform_7(%arg0: i32) -> (i32, i32) {
    %c0_i32 = arith.constant 0 : i32
    %c0_i32_0 = arith.constant 0 : i32
    %c0_i32_1 = arith.constant 0 : i32
    return %c0_i32, %c0_i32_0 : i32, i32
  }
  func.func @transform_8(%arg0: i32) -> (i32, i32, i32) {
    %c0_i32 = arith.constant 0 : i32
    %c0_i32_0 = arith.constant 0 : i32
    %c0_i32_1 = arith.constant 0 : i32
    %c0_i32_2 = arith.constant 0 : i32
    return %c0_i32, %c0_i32_0, %c0_i32_1 : i32, i32, i32
  }
}

</mosaic_0001>

<llo_original>
// kernel: encoder_forward.1
$region0: #{encoder_forward.1}
  #allocation0 [shape = 'u32[]', space=smem, size = 0x4, offset = 0x4, fixed_abs, tag = 'smem constant byte address 0x4 - core index']
  #allocation1 [shape = 'u32[72,128]{1,0:T(1,128)}', space=vmem, size = 0x9000, scoped, tag = 'internal scratch']
  #allocation2 [shape = 'f32[64,128]{1,0:T(8,128)}', space=vmem, size = 0x8000, scoped, tag = 'scratch operand']
  #allocation3 [shape = 'f32[64,384]{1,0:T(8,128)}', space=vmem, size = 0x18000, scoped, tag = 'scratch operand']
  %s0 = inlined_call_operand.vmem [shape: f32[64,384], index: 0, kind: input, shape index: {}]
  %s1 = inlined_call_operand.vmem [shape: f32[128,384], index: 1, kind: input, shape index: {}]
  %s2 = inlined_call_operand.vmem [shape: f32[1,384], index: 2, kind: input, shape index: {}]
  %s3 = inlined_call_operand.vmem [shape: f32[128,384], index: 3, kind: input, shape index: {}]
  %s4 = inlined_call_operand.vmem [shape: f32[1,384], index: 4, kind: input, shape index: {}]
  %s5 = inlined_call_operand.vmem [shape: f32[128,384], index: 5, kind: input, shape index: {}]
  %s6 = inlined_call_operand.vmem [shape: f32[1,384], index: 6, kind: input, shape index: {}]
  %s7 = inlined_call_operand.vmem [shape: f32[64,128], index: 7, kind: output, shape index: {0}]
  %s8 = inlined_call_operand.vmem [shape: f32[2,8,128], index: 8, kind: output, shape index: {1}]
  %9 = xla_tuple %s7, %s8
  %s10 = sld [smem:[#allocation0]]
  $region46: #{encoder_forward.1} parent=0
    _
  %s12 = ssub.s32 1, %s10
  %s13 = scalar_select 0, %s12, %s10
  // Predicated region
  $region2: #{encoder_forward.1} parent=0 // pred_check
    _
  $region3: #{encoder_forward.1} parent=0 // pred_check_branch
    %15 = sbr.rel (0) target = $region5
  $region4: #{encoder_forward.1} parent=0 // pred_region
    _
  $region5: #{encoder_forward.1} parent=0 // pred_fallthru
    _
  // Predicated region
  $region6: #{encoder_forward.1} parent=0 // pred_check
    _
  $region7: #{encoder_forward.1} parent=0 // pred_check_branch
    %17 = sbr.rel (0) target = $region9
  $region8: #{encoder_forward.1} parent=0 // pred_region
    _
  $region9: #{encoder_forward.1} parent=0 // pred_fallthru
    _
  // Predicated region
  $region10: #{encoder_forward.1} parent=0 // pred_check
    _
  $region11: #{encoder_forward.1} parent=0 // pred_check_branch
    %19 = sbr.rel (0) target = $region13
  $region12: #{encoder_forward.1} parent=0 // pred_region
    _
  $region13: #{encoder_forward.1} parent=0 // pred_fallthru
    _
  // Predicated region
  $region14: #{encoder_forward.1} parent=0 // pred_check
    _
  $region15: #{encoder_forward.1} parent=0 // pred_check_branch
    %21 = sbr.rel (0) target = $region17
  $region16: #{encoder_forward.1} parent=0 // pred_region
    _
  $region17: #{encoder_forward.1} parent=0 // pred_fallthru
    _
  // Predicated region
  $region18: #{encoder_forward.1} parent=0 // pred_check
    _
  $region19: #{encoder_forward.1} parent=0 // pred_check_branch
    %23 = sbr.rel (0) target = $region21
  $region20: #{encoder_forward.1} parent=0 // pred_region
    _
  $region21: #{encoder_forward.1} parent=0 // pred_fallthru
    _
  // Predicated region
  $region22: #{encoder_forward.1} parent=0 // pred_check
    _
  $region23: #{encoder_forward.1} parent=0 // pred_check_branch
    %25 = sbr.rel (0) target = $region25
  $region24: #{encoder_forward.1} parent=0 // pred_region
    _
  $region25: #{encoder_forward.1} parent=0 // pred_fallthru
    _
  // Predicated region
  $region26: #{encoder_forward.1} parent=0 // pred_check
    _
  $region27: #{encoder_forward.1} parent=0 // pred_check_branch
    %27 = sbr.rel (0) target = $region29
  $region28: #{encoder_forward.1} parent=0 // pred_region
    _
  $region29: #{encoder_forward.1} parent=0 // pred_fallthru
    _
  %v28 = vld [vmem:[%s1] sm:$0xff]
  %v29 = vld [vmem:[%s1 + $0x8] sm:$0xff]
  %v30 = vld [vmem:[%s1 + $0x10] sm:$0xff]
  %v31 = vld [vmem:[%s1 + $0x18] sm:$0xff]
  %v32 = vld [vmem:[%s1 + $0x20] sm:$0xff]
  %v33 = vld [vmem:[%s1 + $0x28] sm:$0xff]
  %v34 = vld [vmem:[%s1 + $0x30] sm:$0xff]
  %v35 = vld [vmem:[%s1 + $0x38] sm:$0xff]
  %v36 = vld [vmem:[%s1 + $0x40] sm:$0xff]
  %v37 = vld [vmem:[%s1 + $0x48] sm:$0xff]
  %v38 = vld [vmem:[%s1 + $0x50] sm:$0xff]
  %v39 = vld [vmem:[%s1 + $0x58] sm:$0xff]
  %v40 = vld [vmem:[%s1 + $0x60] sm:$0xff]
  %v41 = vld [vmem:[%s1 + $0x68] sm:$0xff]
  %v42 = vld [vmem:[%s1 + $0x70] sm:$0xff]
  %v43 = vld [vmem:[%s1 + $0x78] sm:$0xff]
  %v44 = vld [vmem:[%s1 + $0x80] sm:$0xff]
  %v45 = vld [vmem:[%s1 + $0x88] sm:$0xff]
  %v46 = vld [vmem:[%s1 + $0x90] sm:$0xff]
  %v47 = vld [vmem:[%s1 + $0x98] sm:$0xff]
  %v48 = vld [vmem:[%s1 + $0xa0] sm:$0xff]
  %v49 = vld [vmem:[%s1 + $0xa8] sm:$0xff]
  %v50 = vld [vmem:[%s1 + $0xb0] sm:$0xff]
  %v51 = vld [vmem:[%s1 + $0xb8] sm:$0xff]
  %v52 = vld [vmem:[%s1 + $0xc0] sm:$0xff]
  %v53 = vld [vmem:[%s1 + $0xc8] sm:$0xff]
  %v54 = vld [vmem:[%s1 + $0xd0] sm:$0xff]
  %v55 = vld [vmem:[%s1 + $0xd8] sm:$0xff]
  %v56 = vld [vmem:[%s1 + $0xe0] sm:$0xff]
  %v57 = vld [vmem:[%s1 + $0xe8] sm:$0xff]
  %v58 = vld [vmem:[%s1 + $0xf0] sm:$0xff]
  %v59 = vld [vmem:[%s1 + $0xf8] sm:$0xff]
  %v60 = vld [vmem:[%s1 + $0x100] sm:$0xff]
  %v61 = vld [vmem:[%s1 + $0x108] sm:$0xff]
  %v62 = vld [vmem:[%s1 + $0x110] sm:$0xff]
  %v63 = vld [vmem:[%s1 + $0x118] sm:$0xff]
  %v64 = vld [vmem:[%s1 + $0x120] sm:$0xff]
  %v65 = vld [vmem:[%s1 + $0x128] sm:$0xff]
  %v66 = vld [vmem:[%s1 + $0x130] sm:$0xff]
  %v67 = vld [vmem:[%s1 + $0x138] sm:$0xff]
  %v68 = vld [vmem:[%s1 + $0x140] sm:$0xff]
  %v69 = vld [vmem:[%s1 + $0x148] sm:$0xff]
  %v70 = vld [vmem:[%s1 + $0x150] sm:$0xff]
  %v71 = vld [vmem:[%s1 + $0x158] sm:$0xff]
  %v72 = vld [vmem:[%s1 + $0x160] sm:$0xff]
  %v73 = vld [vmem:[%s1 + $0x168] sm:$0xff]
  %v74 = vld [vmem:[%s1 + $0x170] sm:$0xff]
  %v75 = vld [vmem:[%s1 + $0x178] sm:$0xff]
  %v76 = vld [vmem:[%s2] sm:$0x7]
  %v78 = vperm.slane %v76, 0
  %v79 = vperm.slane %v76, 1
  %v80 = vperm.slane %v76, 2
  %s84 = smul.u32 0, 3
  %s85 = smul.addr %s84, 8
  %s86 = scalar_lea.vmem %s0, %s85
  %v87 = vld [vmem:[%s86] sm:$0xff]
  %v88 = vld [vmem:[%s86 + $0x8] sm:$0xff]
  %v89 = vld [vmem:[%s86 + $0x10] sm:$0xff]
  %90 = vmatpush.msra.mxu0 %v73
  %91 = vmatpush.msra.mxu0 %v70
  %92 = vmatpush.msra.mxu0 %v67
  %93 = vmatpush.msra.mxu0 %v64
  %94 = vmatpush.msra.mxu0 %v61
  %95 = vmatpush.msra.mxu0 %v58
  %96 = vmatpush.msra.mxu0 %v55
  %97 = vmatpush.msra.mxu0 %v52
  %98 = vmatpush.msra.mxu0 %v49
  %99 = vmatpush.msra.mxu0 %v46
  %100 = vmatpush.msra.mxu0 %v43
  %101 = vmatpush.msra.mxu0 %v40
  %102 = vmatpush.msra.mxu0 %v37
  %103 = vmatpush.msra.mxu0 %v34
  %104 = vmatpush.msra.mxu0 %v31
  %105 = vmatpush.msra.mxu0 %v28
  %106 = vmatmul.f32.gmra.mxu0 0.0
  %v107 = vpop.f32.mrf.mxu0
  %v108 = vadd.f32 %v78, %v107
  %109 = vdwg.mxu0
  %110 = vmatpush.msra.mxu0 %v74
  %111 = vmatpush.msra.mxu0 %v71
  %112 = vmatpush.msra.mxu0 %v68
  %113 = vmatpush.msra.mxu0 %v65
  %114 = vmatpush.msra.mxu0 %v62
  %115 = vmatpush.msra.mxu0 %v59
  %116 = vmatpush.msra.mxu0 %v56
  %117 = vmatpush.msra.mxu0 %v53
  %118 = vmatpush.msra.mxu0 %v50
  %119 = vmatpush.msra.mxu0 %v47
  %120 = vmatpush.msra.mxu0 %v44
  %121 = vmatpush.msra.mxu0 %v41
  %122 = vmatpush.msra.mxu0 %v38
  %123 = vmatpush.msra.mxu0 %v35
  %124 = vmatpush.msra.mxu0 %v32
  %125 = vmatpush.msra.mxu0 %v29
  %126 = vmatmul.f32.gmra.mxu0 0.0
  %v127 = vpop.f32.mrf.mxu0
  %v128 = vadd.f32 %v79, %v127
  %129 = vdwg.mxu0
  %130 = vmatpush.msra.mxu0 %v75
  %131 = vmatpush.msra.mxu0 %v72
  %132 = vmatpush.msra.mxu0 %v69
  %133 = vmatpush.msra.mxu0 %v66
  %134 = vmatpush.msra.mxu0 %v63
  %135 = vmatpush.msra.mxu0 %v60
  %136 = vmatpush.msra.mxu0 %v57
  %137 = vmatpush.msra.mxu0 %v54
  %138 = vmatpush.msra.mxu0 %v51
  %139 = vmatpush.msra.mxu0 %v48
  %140 = vmatpush.msra.mxu0 %v45
  %141 = vmatpush.msra.mxu0 %v42
  %142 = vmatpush.msra.mxu0 %v39
  %143 = vmatpush.msra.mxu0 %v36
  %144 = vmatpush.msra.mxu0 %v33
  %145 = vmatpush.msra.mxu0 %v30
  %146 = vmatmul.f32.gmra.mxu0 0.0
  %v147 = vpop.f32.mrf.mxu0
  %v148 = vadd.f32 %v80, %v147
  %149 = vdwg.mxu0
  %v150 = vadd.f32 %v87, %v108
  %v151 = vxor.u32 %v150, 2147483648
  %v152 = vmul.f32 %v151, 1.442695
  %v153 = vpow.pop %v152
  %v154 = vadd.f32 %v153, 1.0
  %v155 = vrcp.pop %v154
  %v156 = vmul.f32 %v154, %v155
  %v157 = vsub.f32 1.0, %v156
  %v158 = vmul.f32 %v155, %v157
  %v159 = vadd.f32 %v155, %v158
  %vm160 = vweird.f32 %v154
  %vm161 = vweird.f32 %v155
  %vm162 = vmor %vm160, %vm161
  %v163 = vsel %vm162, %v155, %v159
  %v164 = vand.u32 2147483647, %v154
  %vm165 = vcmp.eq.f32.partialorder %v164, 8.507059e+37
  %v166 = vand.u32 %v154, 2147483648
  %v167 = vor.u32 1.1754944e-38, %v166
  %v168 = vsel %vm165, %v167, %v163
  %v169 = vmul.f32 1.0, %v168
  %v170 = vadd.f32 %v88, %v128
  %v171 = vxor.u32 %v170, 2147483648
  %v172 = vmul.f32 %v171, 1.442695
  %v173 = vpow.pop %v172
  %v174 = vadd.f32 %v173, 1.0
  %v175 = vrcp.pop %v174
  %v176 = vmul.f32 %v174, %v175
  %v177 = vsub.f32 1.0, %v176
  %v178 = vmul.f32 %v175, %v177
  %v179 = vadd.f32 %v175, %v178
  %vm180 = vweird.f32 %v174
  %vm181 = vweird.f32 %v175
  %vm182 = vmor %vm180, %vm181
  %v183 = vsel %vm182, %v175, %v179
  %v184 = vand.u32 2147483647, %v174
  %vm185 = vcmp.eq.f32.partialorder %v184, 8.507059e+37
  %v186 = vand.u32 %v174, 2147483648
  %v187 = vor.u32 1.1754944e-38, %v186
  %v188 = vsel %vm185, %v187, %v183
  %v189 = vmul.f32 1.0, %v188
  %v190 = vmul.f32 %v169, %v148
  %v191 = vadd.f32 %v89, %v190
  %v192 = vtanh.pop %v191
  %v193 = vsub.f32 1.0, %v189
  %v194 = vmul.f32 %v193, %v192
  %v195 = vmul.f32 %v189, 0.0
  %v196 = vadd.f32 %v194, %v195
  %197 = vst [vmem:[#allocation2] sm:$0xff] %v196
  %s198 = smul.u32 1, 3
  %s199 = smul.addr %s198, 8
  %s200 = scalar_lea.vmem %s0, %s199
  %v201 = vld [vmem:[%s200] sm:$0xff]
  %v202 = vld [vmem:[%s200 + $0x8] sm:$0xff]
  %v203 = vld [vmem:[%s200 + $0x10] sm:$0xff]
  %204 = vmatpush.msra.mxu0 %v73
  %205 = vmatpush.msra.mxu0 %v70
  %206 = vmatpush.msra.mxu0 %v67
  %207 = vmatpush.msra.mxu0 %v64
  %208 = vmatpush.msra.mxu0 %v61
  %209 = vmatpush.msra.mxu0 %v58
  %210 = vmatpush.msra.mxu0 %v55
  %211 = vmatpush.msra.mxu0 %v52
  %212 = vmatpush.msra.mxu0 %v49
  %213 = vmatpush.msra.mxu0 %v46
  %214 = vmatpush.msra.mxu0 %v43
  %215 = vmatpush.msra.mxu0 %v40
  %216 = vmatpush.msra.mxu0 %v37
  %217 = vmatpush.msra.mxu0 %v34
  %218 = vmatpush.msra.mxu0 %v31
  %219 = vmatpush.msra.mxu0 %v28
  %220 = vmatmul.f32.gmra.mxu0 %v196
  %v221 = vpop.f32.mrf.mxu0
  %v222 = vadd.f32 %v78, %v221
  %223 = vdwg.mxu0
  %224 = vmatpush.msra.mxu0 %v74
  %225 = vmatpush.msra.mxu0 %v71
  %226 = vmatpush.msra.mxu0 %v68
  %227 = vmatpush.msra.mxu0 %v65
  %228 = vmatpush.msra.mxu0 %v62
  %229 = vmatpush.msra.mxu0 %v59
  %230 = vmatpush.msra.mxu0 %v56
  %231 = vmatpush.msra.mxu0 %v53
  %232 = vmatpush.msra.mxu0 %v50
  %233 = vmatpush.msra.mxu0 %v47
  %234 = vmatpush.msra.mxu0 %v44
  %235 = vmatpush.msra.mxu0 %v41
  %236 = vmatpush.msra.mxu0 %v38
  %237 = vmatpush.msra.mxu0 %v35
  %238 = vmatpush.msra.mxu0 %v32
  %239 = vmatpush.msra.mxu0 %v29
  %240 = vmatmul.f32.gmra.mxu0 %v196
  %v241 = vpop.f32.mrf.mxu0
  %v242 = vadd.f32 %v79, %v241
  %243 = vdwg.mxu0
  %244 = vmatpush.msra.mxu0 %v75
  %245 = vmatpush.msra.mxu0 %v72
  %246 = vmatpush.msra.mxu0 %v69
  %247 = vmatpush.msra.mxu0 %v66
  %248 = vmatpush.msra.mxu0 %v63
  %249 = vmatpush.msra.mxu0 %v60
  %250 = vmatpush.msra.mxu0 %v57
  %251 = vmatpush.msra.mxu0 %v54
  %252 = vmatpush.msra.mxu0 %v51
  %253 = vmatpush.msra.mxu0 %v48
  %254 = vmatpush.msra.mxu0 %v45
  %255 = vmatpush.msra.mxu0 %v42
  %256 = vmatpush.msra.mxu0 %v39
  %257 = vmatpush.msra.mxu0 %v36
  %258 = vmatpush.msra.mxu0 %v33
  %259 = vmatpush.msra.mxu0 %v30
  %260 = vmatmul.f32.gmra.mxu0 %v196
  %v261 = vpop.f32.mrf.mxu0
  %v262 = vadd.f32 %v80, %v261
  %263 = vdwg.mxu0
  %v264 = vadd.f32 %v201, %v222
  %v265 = vxor.u32 %v264, 2147483648
  %v266 = vmul.f32 %v265, 1.442695
  %v267 = vpow.pop %v266
  %v268 = vadd.f32 %v267, 1.0
  %v269 = vrcp.pop %v268
  %v270 = vmul.f32 %v268, %v269
  %v271 = vsub.f32 1.0, %v270
  %v272 = vmul.f32 %v269, %v271
  %v273 = vadd.f32 %v269, %v272
  %vm274 = vweird.f32 %v268
  %vm275 = vweird.f32 %v269
  %vm276 = vmor %vm274, %vm275
  %v277 = vsel %vm276, %v269, %v273
  %v278 = vand.u32 2147483647, %v268
  %vm279 = vcmp.eq.f32.partialorder %v278, 8.507059e+37
  %v280 = vand.u32 %v268, 2147483648
  %v281 = vor.u32 1.1754944e-38, %v280
  %v282 = vsel %vm279, %v281, %v277
  %v283 = vmul.f32 1.0, %v282
  %v284 = vadd.f32 %v202, %v242
  %v285 = vxor.u32 %v284, 2147483648
  %v286 = vmul.f32 %v285, 1.442695
  %v287 = vpow.pop %v286
  %v288 = vadd.f32 %v287, 1.0
  %v289 = vrcp.pop %v288
  %v290 = vmul.f32 %v288, %v289
  %v291 = vsub.f32 1.0, %v290
  %v292 = vmul.f32 %v289, %v291
  %v293 = vadd.f32 %v289, %v292
  %vm294 = vweird.f32 %v288
  %vm295 = vweird.f32 %v289
  %vm296 = vmor %vm294, %vm295
  %v297 = vsel %vm296, %v289, %v293
  %v298 = vand.u32 2147483647, %v288
  %vm299 = vcmp.eq.f32.partialorder %v298, 8.507059e+37
  %v300 = vand.u32 %v288, 2147483648
  %v301 = vor.u32 1.1754944e-38, %v300
  %v302 = vsel %vm299, %v301, %v297
  %v303 = vmul.f32 1.0, %v302
  %v304 = vmul.f32 %v283, %v262
  %v305 = vadd.f32 %v203, %v304
  %v306 = vtanh.pop %v305
  %v307 = vsub.f32 1.0, %v303
  %v308 = vmul.f32 %v307, %v306
  %v309 = vmul.f32 %v303, %v196
  %v310 = vadd.f32 %v308, %v309
  %s311 = scalar_lea.vmem [#allocation2], 8
  %312 = vst [vmem:[%s311] sm:$0xff] %v310
  %s313 = smul.u32 2, 3
  %s314 = smul.addr %s313, 8
  %s315 = scalar_lea.vmem %s0, %s314
  %v316 = vld [vmem:[%s315] sm:$0xff]
  %v317 = vld [vmem:[%s315 + $0x8] sm:$0xff]
  %v318 = vld [vmem:[%s315 + $0x10] sm:$0xff]
  %319 = vmatpush.msra.mxu0 %v73
  %320 = vmatpush.msra.mxu0 %v70
  %321 = vmatpush.msra.mxu0 %v67
  %322 = vmatpush.msra.mxu0 %v64
  %323 = vmatpush.msra.mxu0 %v61
  %324 = vmatpush.msra.mxu0 %v58
  %325 = vmatpush.msra.mxu0 %v55
  %326 = vmatpush.msra.mxu0 %v52
  %327 = vmatpush.msra.mxu0 %v49
  %328 = vmatpush.msra.mxu0 %v46
  %329 = vmatpush.msra.mxu0 %v43
  %330 = vmatpush.msra.mxu0 %v40
  %331 = vmatpush.msra.mxu0 %v37
  %332 = vmatpush.msra.mxu0 %v34
  %333 = vmatpush.msra.mxu0 %v31
  %334 = vmatpush.msra.mxu0 %v28
  %335 = vmatmul.f32.gmra.mxu0 %v310
  %v336 = vpop.f32.mrf.mxu0
  %v337 = vadd.f32 %v78, %v336
  %338 = vdwg.mxu0
  %339 = vmatpush.msra.mxu0 %v74
  %340 = vmatpush.msra.mxu0 %v71
  %341 = vmatpush.msra.mxu0 %v68
  %342 = vmatpush.msra.mxu0 %v65
  %343 = vmatpush.msra.mxu0 %v62
  %344 = vmatpush.msra.mxu0 %v59
  %345 = vmatpush.msra.mxu0 %v56
  %346 = vmatpush.msra.mxu0 %v53
  %347 = vmatpush.msra.mxu0 %v50
  %348 = vmatpush.msra.mxu0 %v47
  %349 = vmatpush.msra.mxu0 %v44
  %350 = vmatpush.msra.mxu0 %v41
  %351 = vmatpush.msra.mxu0 %v38
  %352 = vmatpush.msra.mxu0 %v35
  %353 = vmatpush.msra.mxu0 %v32
  %354 = vmatpush.msra.mxu0 %v29
  %355 = vmatmul.f32.gmra.mxu0 %v310
  %v356 = vpop.f32.mrf.mxu0
  %v357 = vadd.f32 %v79, %v356
  %358 = vdwg.mxu0
  %359 = vmatpush.msra.mxu0 %v75
  %360 = vmatpush.msra.mxu0 %v72
  %361 = vmatpush.msra.mxu0 %v69
  %362 = vmatpush.msra.mxu0 %v66
  %363 = vmatpush.msra.mxu0 %v63
  %364 = vmatpush.msra.mxu0 %v60
  %365 = vmatpush.msra.mxu0 %v57
  %366 = vmatpush.msra.mxu0 %v54
  %367 = vmatpush.msra.mxu0 %v51
  %368 = vmatpush.msra.mxu0 %v48
  %369 = vmatpush.msra.mxu0 %v45
  %370 = vmatpush.msra.mxu0 %v42
  %371 = vmatpush.msra.mxu0 %v39
  %372 = vmatpush.msra.mxu0 %v36
  %373 = vmatpush.msra.mxu0 %v33
  %374 = vmatpush.msra.mxu0 %v30
  %375 = vmatmul.f32.gmra.mxu0 %v310
  %v376 = vpop.f32.mrf.mxu0
  %v377 = vadd.f32 %v80, %v376
  %378 = vdwg.mxu0
  %v379 = vadd.f32 %v316, %v337
  %v380 = vxor.u32 %v379, 2147483648
  %v381 = vmul.f32 %v380, 1.442695
  %v382 = vpow.pop %v381
  %v383 = vadd.f32 %v382, 1.0
  %v384 = vrcp.pop %v383
  %v385 = vmul.f32 %v383, %v384
  %v386 = vsub.f32 1.0, %v385
  %v387 = vmul.f32 %v384, %v386
  %v388 = vadd.f32 %v384, %v387
  %vm389 = vweird.f32 %v383
  %vm390 = vweird.f32 %v384
  %vm391 = vmor %vm389, %vm390
  %v392 = vsel %vm391, %v384, %v388
  %v393 = vand.u32 2147483647, %v383
  %vm394 = vcmp.eq.f32.partialorder %v393, 8.507059e+37
  %v395 = vand.u32 %v383, 2147483648
  %v396 = vor.u32 1.1754944e-38, %v395
  %v397 = vsel %vm394, %v396, %v392
  %v398 = vmul.f32 1.0, %v397
  %v399 = vadd.f32 %v317, %v357
  %v400 = vxor.u32 %v399, 2147483648
  %v401 = vmul.f32 %v400, 1.442695
  %v402 = vpow.pop %v401
  %v403 = vadd.f32 %v402, 1.0
  %v404 = vrcp.pop %v403
  %v405 = vmul.f32 %v403, %v404
  %v406 = vsub.f32 1.0, %v405
  %v407 = vmul.f32 %v404, %v406
  %v408 = vadd.f32 %v404, %v407
  %vm409 = vweird.f32 %v403
  %vm410 = vweird.f32 %v404
  %vm411 = vmor %vm409, %vm410
  %v412 = vsel %vm411, %v404, %v408
  %v413 = vand.u32 2147483647, %v403
  %vm414 = vcmp.eq.f32.partialorder %v413, 8.507059e+37
  %v415 = vand.u32 %v403, 2147483648
  %v416 = vor.u32 1.1754944e-38, %v415
  %v417 = vsel %vm414, %v416, %v412
  %v418 = vmul.f32 1.0, %v417
  %v419 = vmul.f32 %v398, %v377
  %v420 = vadd.f32 %v318, %v419
  %v421 = vtanh.pop %v420
  %v422 = vsub.f32 1.0, %v418
  %v423 = vmul.f32 %v422, %v421
  %v424 = vmul.f32 %v418, %v310
  %v425 = vadd.f32 %v423, %v424
  %s426 = scalar_lea.vmem [#allocation2], 16
  %427 = vst [vmem:[%s426] sm:$0xff] %v425
  %s428 = smul.u32 3, 3
  %s429 = smul.addr %s428, 8
  %s430 = scalar_lea.vmem %s0, %s429
  %v431 = vld [vmem:[%s430] sm:$0xff]
  %v432 = vld [vmem:[%s430 + $0x8] sm:$0xff]
  %v433 = vld [vmem:[%s430 + $0x10] sm:$0xff]
  %434 = vmatpush.msra.mxu0 %v73
  %435 = vmatpush.msra.mxu0 %v70
  %436 = vmatpush.msra.mxu0 %v67
  %437 = vmatpush.msra.mxu0 %v64
  %438 = vmatpush.msra.mxu0 %v61
  %439 = vmatpush.msra.mxu0 %v58
  %440 = vmatpush.msra.mxu0 %v55
  %441 = vmatpush.msra.mxu0 %v52
  %442 = vmatpush.msra.mxu0 %v49
  %443 = vmatpush.msra.mxu0 %v46
  %444 = vmatpush.msra.mxu0 %v43
  %445 = vmatpush.msra.mxu0 %v40
  %446 = vmatpush.msra.mxu0 %v37
  %447 = vmatpush.msra.mxu0 %v34
  %448 = vmatpush.msra.mxu0 %v31
  %449 = vmatpush.msra.mxu0 %v28
  %450 = vmatmul.f32.gmra.mxu0 %v425
  %v451 = vpop.f32.mrf.mxu0
  %v452 = vadd.f32 %v78, %v451
  %453 = vdwg.mxu0
  %454 = vmatpush.msra.mxu0 %v74
  %455 = vmatpush.msra.mxu0 %v71
  %456 = vmatpush.msra.mxu0 %v68
  %457 = vmatpush.msra.mxu0 %v65
  %458 = vmatpush.msra.mxu0 %v62
  %459 = vmatpush.msra.mxu0 %v59
  %460 = vmatpush.msra.mxu0 %v56
  %461 = vmatpush.msra.mxu0 %v53
  %462 = vmatpush.msra.mxu0 %v50
  %463 = vmatpush.msra.mxu0 %v47
  %464 = vmatpush.msra.mxu0 %v44
  %465 = vmatpush.msra.mxu0 %v41
  %466 = vmatpush.msra.mxu0 %v38
  %467 = vmatpush.msra.mxu0 %v35
  %468 = vmatpush.msra.mxu0 %v32
  %469 = vmatpush.msra.mxu0 %v29
  %470 = vmatmul.f32.gmra.mxu0 %v425
  %v471 = vpop.f32.mrf.mxu0
  %v472 = vadd.f32 %v79, %v471
  %473 = vdwg.mxu0
  %474 = vmatpush.msra.mxu0 %v75
  %475 = vmatpush.msra.mxu0 %v72
  %476 = vmatpush.msra.mxu0 %v69
  %477 = vmatpush.msra.mxu0 %v66
  %478 = vmatpush.msra.mxu0 %v63
  %479 = vmatpush.msra.mxu0 %v60
  %480 = vmatpush.msra.mxu0 %v57
  %481 = vmatpush.msra.mxu0 %v54
  %482 = vmatpush.msra.mxu0 %v51
  %483 = vmatpush.msra.mxu0 %v48
  %484 = vmatpush.msra.mxu0 %v45
  %485 = vmatpush.msra.mxu0 %v42
  %486 = vmatpush.msra.mxu0 %v39
  %487 = vmatpush.msra.mxu0 %v36
  %488 = vmatpush.msra.mxu0 %v33
  %489 = vmatpush.msra.mxu0 %v30
  %490 = vmatmul.f32.gmra.mxu0 %v425
  %v491 = vpop.f32.mrf.mxu0
  %v492 = vadd.f32 %v80, %v491
  %493 = vdwg.mxu0
  %v494 = vadd.f32 %v431, %v452
  %v495 = vxor.u32 %v494, 2147483648
  %v496 = vmul.f32 %v495, 1.442695
  %v497 = vpow.pop %v496
  %v498 = vadd.f32 %v497, 1.0
  %v499 = vrcp.pop %v498
  %v500 = vmul.f32 %v498, %v499
  %v501 = vsub.f32 1.0, %v500
  %v502 = vmul.f32 %v499, %v501
  %v503 = vadd.f32 %v499, %v502
  %vm504 = vweird.f32 %v498
  %vm505 = vweird.f32 %v499
  %vm506 = vmor %vm504, %vm505
  %v507 = vsel %vm506, %v499, %v503
  %v508 = vand.u32 2147483647, %v498
  %vm509 = vcmp.eq.f32.partialorder %v508, 8.507059e+37
  %v510 = vand.u32 %v498, 2147483648
  %v511 = vor.u32 1.1754944e-38, %v510
  %v512 = vsel %vm509, %v511, %v507
  %v513 = vmul.f32 1.0, %v512
  %v514 = vadd.f32 %v432, %v472
  %v515 = vxor.u32 %v514, 2147483648
  %v516 = vmul.f32 %v515, 1.442695
  %v517 = vpow.pop %v516
  %v518 = vadd.f32 %v517, 1.0
  %v519 = vrcp.pop %v518
  %v520 = vmul.f32 %v518, %v519
  %v521 = vsub.f32 1.0, %v520
  %v522 = vmul.f32 %v519, %v521
  %v523 = vadd.f32 %v519, %v522
  %vm524 = vweird.f32 %v518
  %vm525 = vweird.f32 %v519
  %vm526 = vmor %vm524, %vm525
  %v527 = vsel %vm526, %v519, %v523
  %v528 = vand.u32 2147483647, %v518
  %vm529 = vcmp.eq.f32.partialorder %v528, 8.507059e+37
  %v530 = vand.u32 %v518, 2147483648
  %v531 = vor.u32 1.1754944e-38, %v530
  %v532 = vsel %vm529, %v531, %v527
  %v533 = vmul.f32 1.0, %v532
  %v534 = vmul.f32 %v513, %v492
  %v535 = vadd.f32 %v433, %v534
  %v536 = vtanh.pop %v535
  %v537 = vsub.f32 1.0, %v533
  %v538 = vmul.f32 %v537, %v536
  %v539 = vmul.f32 %v533, %v425
  %v540 = vadd.f32 %v538, %v539
  %s541 = scalar_lea.vmem [#allocation2], 24
  %542 = vst [vmem:[%s541] sm:$0xff] %v540
  %s543 = smul.u32 4, 3
  %s544 = smul.addr %s543, 8
  %s545 = scalar_lea.vmem %s0, %s544
  %v546 = vld [vmem:[%s545] sm:$0xff]
  %v547 = vld [vmem:[%s545 + $0x8] sm:$0xff]
  %v548 = vld [vmem:[%s545 + $0x10] sm:$0xff]
  %549 = vmatpush.msra.mxu0 %v73
  %550 = vmatpush.msra.mxu0 %v70
  %551 = vmatpush.msra.mxu0 %v67
  %552 = vmatpush.msra.mxu0 %v64
  %553 = vmatpush.msra.mxu0 %v61
  %554 = vmatpush.msra.mxu0 %v58
  %555 = vmatpush.msra.mxu0 %v55
  %556 = vmatpush.msra.mxu0 %v52
  %557 = vmatpush.msra.mxu0 %v49
  %558 = vmatpush.msra.mxu0 %v46
  %559 = vmatpush.msra.mxu0 %v43
  %560 = vmatpush.msra.mxu0 %v40
  %561 = vmatpush.msra.mxu0 %v37
  %562 = vmatpush.msra.mxu0 %v34
  %563 = vmatpush.msra.mxu0 %v31
  %564 = vmatpush.msra.mxu0 %v28
  %565 = vmatmul.f32.gmra.mxu0 %v540
  %v566 = vpop.f32.mrf.mxu0
  %v567 = vadd.f32 %v78, %v566
  %568 = vdwg.mxu0
  %569 = vmatpush.msra.mxu0 %v74
  %570 = vmatpush.msra.mxu0 %v71
  %571 = vmatpush.msra.mxu0 %v68
  %572 = vmatpush.msra.mxu0 %v65
  %573 = vmatpush.msra.mxu0 %v62
  %574 = vmatpush.msra.mxu0 %v59
  %575 = vmatpush.msra.mxu0 %v56
  %576 = vmatpush.msra.mxu0 %v53
  %577 = vmatpush.msra.mxu0 %v50
  %578 = vmatpush.msra.mxu0 %v47
  %579 = vmatpush.msra.mxu0 %v44
  %580 = vmatpush.msra.mxu0 %v41
  %581 = vmatpush.msra.mxu0 %v38
  %582 = vmatpush.msra.mxu0 %v35
  %583 = vmatpush.msra.mxu0 %v32
  %584 = vmatpush.msra.mxu0 %v29
  %585 = vmatmul.f32.gmra.mxu0 %v540
  %v586 = vpop.f32.mrf.mxu0
  %v587 = vadd.f32 %v79, %v586
  %588 = vdwg.mxu0
  %589 = vmatpush.msra.mxu0 %v75
  %590 = vmatpush.msra.mxu0 %v72
  %591 = vmatpush.msra.mxu0 %v69
  %592 = vmatpush.msra.mxu0 %v66
  %593 = vmatpush.msra.mxu0 %v63
  %594 = vmatpush.msra.mxu0 %v60
  %595 = vmatpush.msra.mxu0 %v57
  %596 = vmatpush.msra.mxu0 %v54
  %597 = vmatpush.msra.mxu0 %v51
  %598 = vmatpush.msra.mxu0 %v48
  %599 = vmatpush.msra.mxu0 %v45
  %600 = vmatpush.msra.mxu0 %v42
  %601 = vmatpush.msra.mxu0 %v39
  %602 = vmatpush.msra.mxu0 %v36
  %603 = vmatpush.msra.mxu0 %v33
  %604 = vmatpush.msra.mxu0 %v30
  %605 = vmatmul.f32.gmra.mxu0 %v540
  %v606 = vpop.f32.mrf.mxu0
  %v607 = vadd.f32 %v80, %v606
  %608 = vdwg.mxu0
  %v609 = vadd.f32 %v546, %v567
  %v610 = vxor.u32 %v609, 2147483648
  %v611 = vmul.f32 %v610, 1.442695
  %v612 = vpow.pop %v611
  %v613 = vadd.f32 %v612, 1.0
  %v614 = vrcp.pop %v613
  %v615 = vmul.f32 %v613, %v614
  %v616 = vsub.f32 1.0, %v615
  %v617 = vmul.f32 %v614, %v616
  %v618 = vadd.f32 %v614, %v617
  %vm619 = vweird.f32 %v613
  %vm620 = vweird.f32 %v614
  %vm621 = vmor %vm619, %vm620
  %v622 = vsel %vm621, %v614, %v618
  %v623 = vand.u32 2147483647, %v613
  %vm624 = vcmp.eq.f32.partialorder %v623, 8.507059e+37
  %v625 = vand.u32 %v613, 2147483648
  %v626 = vor.u32 1.1754944e-38, %v625
  %v627 = vsel %vm624, %v626, %v622
  %v628 = vmul.f32 1.0, %v627
  %v629 = vadd.f32 %v547, %v587
  %v630 = vxor.u32 %v629, 2147483648
  %v631 = vmul.f32 %v630, 1.442695
  %v632 = vpow.pop %v631
  %v633 = vadd.f32 %v632, 1.0
  %v634 = vrcp.pop %v633
  %v635 = vmul.f32 %v633, %v634
  %v636 = vsub.f32 1.0, %v635
  %v637 = vmul.f32 %v634, %v636
  %v638 = vadd.f32 %v634, %v637
  %vm639 = vweird.f32 %v633
  %vm640 = vweird.f32 %v634
  %vm641 = vmor %vm639, %vm640
  %v642 = vsel %vm641, %v634, %v638
  %v643 = vand.u32 2147483647, %v633
  %vm644 = vcmp.eq.f32.partialorder %v643, 8.507059e+37
  %v645 = vand.u32 %v633, 2147483648
  %v646 = vor.u32 1.1754944e-38, %v645
  %v647 = vsel %vm644, %v646, %v642
  %v648 = vmul.f32 1.0, %v647
  %v649 = vmul.f32 %v628, %v607
  %v650 = vadd.f32 %v548, %v649
  %v651 = vtanh.pop %v650
  %v652 = vsub.f32 1.0, %v648
  %v653 = vmul.f32 %v652, %v651
  %v654 = vmul.f32 %v648, %v540
  %v655 = vadd.f32 %v653, %v654
  %s656 = scalar_lea.vmem [#allocation2], 32
  %657 = vst [vmem:[%s656] sm:$0xff] %v655
  %s658 = smul.u32 5, 3
  %s659 = smul.addr %s658, 8
  %s660 = scalar_lea.vmem %s0, %s659
  %v661 = vld [vmem:[%s660] sm:$0xff]
  %v662 = vld [vmem:[%s660 + $0x8] sm:$0xff]
  %v663 = vld [vmem:[%s660 + $0x10] sm:$0xff]
  %664 = vmatpush.msra.mxu0 %v73
  %665 = vmatpush.msra.mxu0 %v70
  %666 = vmatpush.msra.mxu0 %v67
  %667 = vmatpush.msra.mxu0 %v64
  %668 = vmatpush.msra.mxu0 %v61
  %669 = vmatpush.msra.mxu0 %v58
  %670 = vmatpush.msra.mxu0 %v55
  %671 = vmatpush.msra.mxu0 %v52
  %672 = vmatpush.msra.mxu0 %v49
  %673 = vmatpush.msra.mxu0 %v46
  %674 = vmatpush.msra.mxu0 %v43
  %675 = vmatpush.msra.mxu0 %v40
  %676 = vmatpush.msra.mxu0 %v37
  %677 = vmatpush.msra.mxu0 %v34
  %678 = vmatpush.msra.mxu0 %v31
  %679 = vmatpush.msra.mxu0 %v28
  %680 = vmatmul.f32.gmra.mxu0 %v655
  %v681 = vpop.f32.mrf.mxu0
  %v682 = vadd.f32 %v78, %v681
  %683 = vdwg.mxu0
  %684 = vmatpush.msra.mxu0 %v74
  %685 = vmatpush.msra.mxu0 %v71
  %686 = vmatpush.msra.mxu0 %v68
  %687 = vmatpush.msra.mxu0 %v65
  %688 = vmatpush.msra.mxu0 %v62
  %689 = vmatpush.msra.mxu0 %v59
  %690 = vmatpush.msra.mxu0 %v56
  %691 = vmatpush.msra.mxu0 %v53
  %692 = vmatpush.msra.mxu0 %v50
  %693 = vmatpush.msra.mxu0 %v47
  %694 = vmatpush.msra.mxu0 %v44
  %695 = vmatpush.msra.mxu0 %v41
  %696 = vmatpush.msra.mxu0 %v38
  %697 = vmatpush.msra.mxu0 %v35
  %698 = vmatpush.msra.mxu0 %v32
  %699 = vmatpush.msra.mxu0 %v29
  %700 = vmatmul.f32.gmra.mxu0 %v655
  %v701 = vpop.f32.mrf.mxu0
  %v702 = vadd.f32 %v79, %v701
  %703 = vdwg.mxu0
  %704 = vmatpush.msra.mxu0 %v75
  %705 = vmatpush.msra.mxu0 %v72
  %706 = vmatpush.msra.mxu0 %v69
  %707 = vmatpush.msra.mxu0 %v66
  %708 = vmatpush.msra.mxu0 %v63
  %709 = vmatpush.msra.mxu0 %v60
  %710 = vmatpush.msra.mxu0 %v57
  %711 = vmatpush.msra.mxu0 %v54
  %712 = vmatpush.msra.mxu0 %v51
  %713 = vmatpush.msra.mxu0 %v48
  %714 = vmatpush.msra.mxu0 %v45
  %715 = vmatpush.msra.mxu0 %v42
  %716 = vmatpush.msra.mxu0 %v39
  %717 = vmatpush.msra.mxu0 %v36
  %718 = vmatpush.msra.mxu0 %v33
  %719 = vmatpush.msra.mxu0 %v30
  %720 = vmatmul.f32.gmra.mxu0 %v655
  %v721 = vpop.f32.mrf.mxu0
  %v722 = vadd.f32 %v80, %v721
  %723 = vdwg.mxu0
  %v724 = vadd.f32 %v661, %v682
  %v725 = vxor.u32 %v724, 2147483648
  %v726 = vmul.f32 %v725, 1.442695
  %v727 = vpow.pop %v726
  %v728 = vadd.f32 %v727, 1.0
  %v729 = vrcp.pop %v728
  %v730 = vmul.f32 %v728, %v729
  %v731 = vsub.f32 1.0, %v730
  %v732 = vmul.f32 %v729, %v731
  %v733 = vadd.f32 %v729, %v732
  %vm734 = vweird.f32 %v728
  %vm735 = vweird.f32 %v729
  %vm736 = vmor %vm734, %vm735
  %v737 = vsel %vm736, %v729, %v733
  %v738 = vand.u32 2147483647, %v728
  %vm739 = vcmp.eq.f32.partialorder %v738, 8.507059e+37
  %v740 = vand.u32 %v728, 2147483648
  %v741 = vor.u32 1.1754944e-38, %v740
  %v742 = vsel %vm739, %v741, %v737
  %v743 = vmul.f32 1.0, %v742
  %v744 = vadd.f32 %v662, %v702
  %v745 = vxor.u32 %v744, 2147483648
  %v746 = vmul.f32 %v745, 1.442695
  %v747 = vpow.pop %v746
  %v748 = vadd.f32 %v747, 1.0
  %v749 = vrcp.pop %v748
  %v750 = vmul.f32 %v748, %v749
  %v751 = vsub.f32 1.0, %v750
  %v752 = vmul.f32 %v749, %v751
  %v753 = vadd.f32 %v749, %v752
  %vm754 = vweird.f32 %v748
  %vm755 = vweird.f32 %v749
  %vm756 = vmor %vm754, %vm755
  %v757 = vsel %vm756, %v749, %v753
  %v758 = vand.u32 2147483647, %v748
  %vm759 = vcmp.eq.f32.partialorder %v758, 8.507059e+37
  %v760 = vand.u32 %v748, 2147483648
  %v761 = vor.u32 1.1754944e-38, %v760
  %v762 = vsel %vm759, %v761, %v757
  %v763 = vmul.f32 1.0, %v762
  %v764 = vmul.f32 %v743, %v722
  %v765 = vadd.f32 %v663, %v764
  %v766 = vtanh.pop %v765
  %v767 = vsub.f32 1.0, %v763
  %v768 = vmul.f32 %v767, %v766
  %v769 = vmul.f32 %v763, %v655
  %v770 = vadd.f32 %v768, %v769
  %s771 = scalar_lea.vmem [#allocation2], 40
  %772 = vst [vmem:[%s771] sm:$0xff] %v770
  %s773 = smul.u32 6, 3
  %s774 = smul.addr %s773, 8
  %s775 = scalar_lea.vmem %s0, %s774
  %v776 = vld [vmem:[%s775] sm:$0xff]
  %v777 = vld [vmem:[%s775 + $0x8] sm:$0xff]
  %v778 = vld [vmem:[%s775 + $0x10] sm:$0xff]
  %779 = vmatpush.msra.mxu0 %v73
  %780 = vmatpush.msra.mxu0 %v70
  %781 = vmatpush.msra.mxu0 %v67
  %782 = vmatpush.msra.mxu0 %v64
  %783 = vmatpush.msra.mxu0 %v61
  %784 = vmatpush.msra.mxu0 %v58
  %785 = vmatpush.msra.mxu0 %v55
  %786 = vmatpush.msra.mxu0 %v52
  %787 = vmatpush.msra.mxu0 %v49
  %788 = vmatpush.msra.mxu0 %v46
  %789 = vmatpush.msra.mxu0 %v43
  %790 = vmatpush.msra.mxu0 %v40
  %791 = vmatpush.msra.mxu0 %v37
  %792 = vmatpush.msra.mxu0 %v34
  %793 = vmatpush.msra.mxu0 %v31
  %794 = vmatpush.msra.mxu0 %v28
  %795 = vmatmul.f32.gmra.mxu0 %v770
  %v796 = vpop.f32.mrf.mxu0
  %v797 = vadd.f32 %v78, %v796
  %798 = vdwg.mxu0
  %799 = vmatpush.msra.mxu0 %v74
  %800 = vmatpush.msra.mxu0 %v71
  %801 = vmatpush.msra.mxu0 %v68
  %802 = vmatpush.msra.mxu0 %v65
  %803 = vmatpush.msra.mxu0 %v62
  %804 = vmatpush.msra.mxu0 %v59
  %805 = vmatpush.msra.mxu0 %v56
  %806 = vmatpush.msra.mxu0 %v53
  %807 = vmatpush.msra.mxu0 %v50
  %808 = vmatpush.msra.mxu0 %v47
  %809 = vmatpush.msra.mxu0 %v44
  %810 = vmatpush.msra.mxu0 %v41
  %811 = vmatpush.msra.mxu0 %v38
  %812 = vmatpush.msra.mxu0 %v35
  %813 = vmatpush.msra.mxu0 %v32
  %814 = vmatpush.msra.mxu0 %v29
  %815 = vmatmul.f32.gmra.mxu0 %v770
  %v816 = vpop.f32.mrf.mxu0
  %v817 = vadd.f32 %v79, %v816
  %818 = vdwg.mxu0
  %819 = vmatpush.msra.mxu0 %v75
  %820 = vmatpush.msra.mxu0 %v72
  %821 = vmatpush.msra.mxu0 %v69
  %822 = vmatpush.msra.mxu0 %v66
  %823 = vmatpush.msra.mxu0 %v63
  %824 = vmatpush.msra.mxu0 %v60
  %825 = vmatpush.msra.mxu0 %v57
  %826 = vmatpush.msra.mxu0 %v54
  %827 = vmatpush.msra.mxu0 %v51
  %828 = vmatpush.msra.mxu0 %v48
  %829 = vmatpush.msra.mxu0 %v45
  %830 = vmatpush.msra.mxu0 %v42
  %831 = vmatpush.msra.mxu0 %v39
  %832 = vmatpush.msra.mxu0 %v36
  %833 = vmatpush.msra.mxu0 %v33
  %834 = vmatpush.msra.mxu0 %v30
  %835 = vmatmul.f32.gmra.mxu0 %v770
  %v836 = vpop.f32.mrf.mxu0
  %v837 = vadd.f32 %v80, %v836
  %838 = vdwg.mxu0
  %v839 = vadd.f32 %v776, %v797
  %v840 = vxor.u32 %v839, 2147483648
  %v841 = vmul.f32 %v840, 1.442695
  %v842 = vpow.pop %v841
  %v843 = vadd.f32 %v842, 1.0
  %v844 = vrcp.pop %v843
  %v845 = vmul.f32 %v843, %v844
  %v846 = vsub.f32 1.0, %v845
  %v847 = vmul.f32 %v844, %v846
  %v848 = vadd.f32 %v844, %v847
  %vm849 = vweird.f32 %v843
  %vm850 = vweird.f32 %v844
  %vm851 = vmor %vm849, %vm850
  %v852 = vsel %vm851, %v844, %v848
  %v853 = vand.u32 2147483647, %v843
  %vm854 = vcmp.eq.f32.partialorder %v853, 8.507059e+37
  %v855 = vand.u32 %v843, 2147483648
  %v856 = vor.u32 1.1754944e-38, %v855
  %v857 = vsel %vm854, %v856, %v852
  %v858 = vmul.f32 1.0, %v857
  %v859 = vadd.f32 %v777, %v817
  %v860 = vxor.u32 %v859, 2147483648
  %v861 = vmul.f32 %v860, 1.442695
  %v862 = vpow.pop %v861
  %v863 = vadd.f32 %v862, 1.0
  %v864 = vrcp.pop %v863
  %v865 = vmul.f32 %v863, %v864
  %v866 = vsub.f32 1.0, %v865
  %v867 = vmul.f32 %v864, %v866
  %v868 = vadd.f32 %v864, %v867
  %vm869 = vweird.f32 %v863
  %vm870 = vweird.f32 %v864
  %vm871 = vmor %vm869, %vm870
  %v872 = vsel %vm871, %v864, %v868
  %v873 = vand.u32 2147483647, %v863
  %vm874 = vcmp.eq.f32.partialorder %v873, 8.507059e+37
  %v875 = vand.u32 %v863, 2147483648
  %v876 = vor.u32 1.1754944e-38, %v875
  %v877 = vsel %vm874, %v876, %v872
  %v878 = vmul.f32 1.0, %v877
  %v879 = vmul.f32 %v858, %v837
  %v880 = vadd.f32 %v778, %v879
  %v881 = vtanh.pop %v880
  %v882 = vsub.f32 1.0, %v878
  %v883 = vmul.f32 %v882, %v881
  %v884 = vmul.f32 %v878, %v770
  %v885 = vadd.f32 %v883, %v884
  %s886 = scalar_lea.vmem [#allocation2], 48
  %887 = vst [vmem:[%s886] sm:$0xff] %v885
  %s888 = smul.u32 7, 3
  %s889 = smul.addr %s888, 8
  %s890 = scalar_lea.vmem %s0, %s889
  %v891 = vld [vmem:[%s890] sm:$0xff]
  %v892 = vld [vmem:[%s890 + $0x8] sm:$0xff]
  %v893 = vld [vmem:[%s890 + $0x10] sm:$0xff]
  %894 = vmatpush.msra.mxu0 %v73
  %895 = vmatpush.msra.mxu0 %v70
  %896 = vmatpush.msra.mxu0 %v67
  %897 = vmatpush.msra.mxu0 %v64
  %898 = vmatpush.msra.mxu0 %v61
  %899 = vmatpush.msra.mxu0 %v58
  %900 = vmatpush.msra.mxu0 %v55
  %901 = vmatpush.msra.mxu0 %v52
  %902 = vmatpush.msra.mxu0 %v49
  %903 = vmatpush.msra.mxu0 %v46
  %904 = vmatpush.msra.mxu0 %v43
  %905 = vmatpush.msra.mxu0 %v40
  %906 = vmatpush.msra.mxu0 %v37
  %907 = vmatpush.msra.mxu0 %v34
  %908 = vmatpush.msra.mxu0 %v31
  %909 = vmatpush.msra.mxu0 %v28
  %910 = vmatmul.f32.gmra.mxu0 %v885
  %v911 = vpop.f32.mrf.mxu0
  %v912 = vadd.f32 %v78, %v911
  %913 = vdwg.mxu0
  %914 = vmatpush.msra.mxu0 %v74
  %915 = vmatpush.msra.mxu0 %v71
  %916 = vmatpush.msra.mxu0 %v68
  %917 = vmatpush.msra.mxu0 %v65
  %918 = vmatpush.msra.mxu0 %v62
  %919 = vmatpush.msra.mxu0 %v59
  %920 = vmatpush.msra.mxu0 %v56
  %921 = vmatpush.msra.mxu0 %v53
  %922 = vmatpush.msra.mxu0 %v50
  %923 = vmatpush.msra.mxu0 %v47
  %924 = vmatpush.msra.mxu0 %v44
  %925 = vmatpush.msra.mxu0 %v41
  %926 = vmatpush.msra.mxu0 %v38
  %927 = vmatpush.msra.mxu0 %v35
  %928 = vmatpush.msra.mxu0 %v32
  %929 = vmatpush.msra.mxu0 %v29
  %930 = vmatmul.f32.gmra.mxu0 %v885
  %v931 = vpop.f32.mrf.mxu0
  %v932 = vadd.f32 %v79, %v931
  %933 = vdwg.mxu0
  %934 = vmatpush.msra.mxu0 %v75
  %935 = vmatpush.msra.mxu0 %v72
  %936 = vmatpush.msra.mxu0 %v69
  %937 = vmatpush.msra.mxu0 %v66
  %938 = vmatpush.msra.mxu0 %v63
  %939 = vmatpush.msra.mxu0 %v60
  %940 = vmatpush.msra.mxu0 %v57
  %941 = vmatpush.msra.mxu0 %v54
  %942 = vmatpush.msra.mxu0 %v51
  %943 = vmatpush.msra.mxu0 %v48
  %944 = vmatpush.msra.mxu0 %v45
  %945 = vmatpush.msra.mxu0 %v42
  %946 = vmatpush.msra.mxu0 %v39
  %947 = vmatpush.msra.mxu0 %v36
  %948 = vmatpush.msra.mxu0 %v33
  %949 = vmatpush.msra.mxu0 %v30
  %950 = vmatmul.f32.gmra.mxu0 %v885
  %v951 = vpop.f32.mrf.mxu0
  %v952 = vadd.f32 %v80, %v951
  %953 = vdwg.mxu0
  %v954 = vadd.f32 %v891, %v912
  %v955 = vxor.u32 %v954, 2147483648
  %v956 = vmul.f32 %v955, 1.442695
  %v957 = vpow.pop %v956
  %v958 = vadd.f32 %v957, 1.0
  %v959 = vrcp.pop %v958
  %v960 = vmul.f32 %v958, %v959
  %v961 = vsub.f32 1.0, %v960
  %v962 = vmul.f32 %v959, %v961
  %v963 = vadd.f32 %v959, %v962
  %vm964 = vweird.f32 %v958
  %vm965 = vweird.f32 %v959
  %vm966 = vmor %vm964, %vm965
  %v967 = vsel %vm966, %v959, %v963
  %v968 = vand.u32 2147483647, %v958
  %vm969 = vcmp.eq.f32.partialorder %v968, 8.507059e+37
  %v970 = vand.u32 %v958, 2147483648
  %v971 = vor.u32 1.1754944e-38, %v970
  %v972 = vsel %vm969, %v971, %v967
  %v973 = vmul.f32 1.0, %v972
  %v974 = vadd.f32 %v892, %v932
  %v975 = vxor.u32 %v974, 2147483648
  %v976 = vmul.f32 %v975, 1.442695
  %v977 = vpow.pop %v976
  %v978 = vadd.f32 %v977, 1.0
  %v979 = vrcp.pop %v978
  %v980 = vmul.f32 %v978, %v979
  %v981 = vsub.f32 1.0, %v980
  %v982 = vmul.f32 %v979, %v981
  %v983 = vadd.f32 %v979, %v982
  %vm984 = vweird.f32 %v978
  %vm985 = vweird.f32 %v979
  %vm986 = vmor %vm984, %vm985
  %v987 = vsel %vm986, %v979, %v983
  %v988 = vand.u32 2147483647, %v978
  %vm989 = vcmp.eq.f32.partialorder %v988, 8.507059e+37
  %v990 = vand.u32 %v978, 2147483648
  %v991 = vor.u32 1.1754944e-38, %v990
  %v992 = vsel %vm989, %v991, %v987
  %v993 = vmul.f32 1.0, %v992
  %v994 = vmul.f32 %v973, %v952
  %v995 = vadd.f32 %v893, %v994
  %v996 = vtanh.pop %v995
  %v997 = vsub.f32 1.0, %v993
  %v998 = vmul.f32 %v997, %v996
  %v999 = vmul.f32 %v993, %v885
  %v1000 = vadd.f32 %v998, %v999
  %s1001 = scalar_lea.vmem [#allocation2], 56
  %1002 = vst [vmem:[%s1001] sm:$0xff] %v1000
  %1003 = vst [vmem:[%s8] sm:$0xff] %v1000
  %v1004 = vld [vmem:[#allocation2] sm:$0xff]
  %v1005 = vld [vmem:[#allocation2 + $0x8] sm:$0xff]
  %v1006 = vld [vmem:[#allocation2 + $0x10] sm:$0xff]
  %v1007 = vld [vmem:[#allocation2 + $0x18] sm:$0xff]
  %v1008 = vld [vmem:[#allocation2 + $0x20] sm:$0xff]
  %v1009 = vld [vmem:[#allocation2 + $0x28] sm:$0xff]
  %v1010 = vld [vmem:[#allocation2 + $0x30] sm:$0xff]
  %v1011 = vld [vmem:[#allocation2 + $0x38] sm:$0xff]
  %v1012 = vld [vmem:[%s3] sm:$0xff]
  %v1013 = vld [vmem:[%s3 + $0x8] sm:$0xff]
  %v1014 = vld [vmem:[%s3 + $0x10] sm:$0xff]
  %v1015 = vld [vmem:[%s3 + $0x18] sm:$0xff]
  %v1016 = vld [vmem:[%s3 + $0x20] sm:$0xff]
  %v1017 = vld [vmem:[%s3 + $0x28] sm:$0xff]
  %v1018 = vld [vmem:[%s3 + $0x30] sm:$0xff]
  %v1019 = vld [vmem:[%s3 + $0x38] sm:$0xff]
  %v1020 = vld [vmem:[%s3 + $0x40] sm:$0xff]
  %v1021 = vld [vmem:[%s3 + $0x48] sm:$0xff]
  %v1022 = vld [vmem:[%s3 + $0x50] sm:$0xff]
  %v1023 = vld [vmem:[%s3 + $0x58] sm:$0xff]
  %v1024 = vld [vmem:[%s3 + $0x60] sm:$0xff]
  %v1025 = vld [vmem:[%s3 + $0x68] sm:$0xff]
  %v1026 = vld [vmem:[%s3 + $0x70] sm:$0xff]
  %v1027 = vld [vmem:[%s3 + $0x78] sm:$0xff]
  %v1028 = vld [vmem:[%s3 + $0x80] sm:$0xff]
  %v1029 = vld [vmem:[%s3 + $0x88] sm:$0xff]
  %v1030 = vld [vmem:[%s3 + $0x90] sm:$0xff]
  %v1031 = vld [vmem:[%s3 + $0x98] sm:$0xff]
  %v1032 = vld [vmem:[%s3 + $0xa0] sm:$0xff]
  %v1033 = vld [vmem:[%s3 + $0xa8] sm:$0xff]
  %v1034 = vld [vmem:[%s3 + $0xb0] sm:$0xff]
  %v1035 = vld [vmem:[%s3 + $0xb8] sm:$0xff]
  %v1036 = vld [vmem:[%s3 + $0xc0] sm:$0xff]
  %v1037 = vld [vmem:[%s3 + $0xc8] sm:$0xff]
  %v1038 = vld [vmem:[%s3 + $0xd0] sm:$0xff]
  %v1039 = vld [vmem:[%s3 + $0xd8] sm:$0xff]
  %v1040 = vld [vmem:[%s3 + $0xe0] sm:$0xff]
  %v1041 = vld [vmem:[%s3 + $0xe8] sm:$0xff]
  %v1042 = vld [vmem:[%s3 + $0xf0] sm:$0xff]
  %v1043 = vld [vmem:[%s3 + $0xf8] sm:$0xff]
  %v1044 = vld [vmem:[%s3 + $0x100] sm:$0xff]
  %v1045 = vld [vmem:[%s3 + $0x108] sm:$0xff]
  %v1046 = vld [vmem:[%s3 + $0x110] sm:$0xff]
  %v1047 = vld [vmem:[%s3 + $0x118] sm:$0xff]
  %v1048 = vld [vmem:[%s3 + $0x120] sm:$0xff]
  %v1049 = vld [vmem:[%s3 + $0x128] sm:$0xff]
  %v1050 = vld [vmem:[%s3 + $0x130] sm:$0xff]
  %v1051 = vld [vmem:[%s3 + $0x138] sm:$0xff]
  %v1052 = vld [vmem:[%s3 + $0x140] sm:$0xff]
  %v1053 = vld [vmem:[%s3 + $0x148] sm:$0xff]
  %v1054 = vld [vmem:[%s3 + $0x150] sm:$0xff]
  %v1055 = vld [vmem:[%s3 + $0x158] sm:$0xff]
  %v1056 = vld [vmem:[%s3 + $0x160] sm:$0xff]
  %v1057 = vld [vmem:[%s3 + $0x168] sm:$0xff]
  %v1058 = vld [vmem:[%s3 + $0x170] sm:$0xff]
  %v1059 = vld [vmem:[%s3 + $0x178] sm:$0xff]
  %v1060 = vld [vmem:[%s4] sm:$0x7]
  %v1062 = vperm.slane %v1060, 0
  %v1063 = vperm.slane %v1060, 1
  %v1064 = vperm.slane %v1060, 2
  %1068 = vmatpush.msra.mxu0 %v1057
  %1069 = vmatpush.msra.mxu0 %v1054
  %1070 = vmatpush.msra.mxu0 %v1051
  %1071 = vmatpush.msra.mxu0 %v1048
  %1072 = vmatpush.msra.mxu0 %v1045
  %1073 = vmatpush.msra.mxu0 %v1042
  %1074 = vmatpush.msra.mxu0 %v1039
  %1075 = vmatpush.msra.mxu0 %v1036
  %1076 = vmatpush.msra.mxu0 %v1033
  %1077 = vmatpush.msra.mxu0 %v1030
  %1078 = vmatpush.msra.mxu0 %v1027
  %1079 = vmatpush.msra.mxu0 %v1024
  %1080 = vmatpush.msra.mxu0 %v1021
  %1081 = vmatpush.msra.mxu0 %v1018
  %1082 = vmatpush.msra.mxu0 %v1015
  %1083 = vmatpush.msra.mxu0 %v1012
  %1084 = vmatmul.f32.gmra.mxu0 %v1004
  %v1085 = vpop.f32.mrf.mxu0
  %v1086 = vadd.f32 %v1062, %v1085
  %1087 = vmatmul.f32.gmra.mxu0 %v1005
  %v1088 = vpop.f32.mrf.mxu0
  %v1089 = vadd.f32 %v1062, %v1088
  %1090 = vmatmul.f32.gmra.mxu0 %v1006
  %v1091 = vpop.f32.mrf.mxu0
  %v1092 = vadd.f32 %v1062, %v1091
  %1093 = vmatmul.f32.gmra.mxu0 %v1007
  %v1094 = vpop.f32.mrf.mxu0
  %v1095 = vadd.f32 %v1062, %v1094
  %1096 = vmatmul.f32.gmra.mxu0 %v1008
  %v1097 = vpop.f32.mrf.mxu0
  %v1098 = vadd.f32 %v1062, %v1097
  %1099 = vmatmul.f32.gmra.mxu0 %v1009
  %v1100 = vpop.f32.mrf.mxu0
  %v1101 = vadd.f32 %v1062, %v1100
  %1102 = vmatmul.f32.gmra.mxu0 %v1010
  %v1103 = vpop.f32.mrf.mxu0
  %v1104 = vadd.f32 %v1062, %v1103
  %1105 = vmatmul.f32.gmra.mxu0 %v1011
  %v1106 = vpop.f32.mrf.mxu0
  %v1107 = vadd.f32 %v1062, %v1106
  %1108 = vdwg.mxu0
  %1109 = vmatpush.msra.mxu0 %v1058
  %1110 = vmatpush.msra.mxu0 %v1055
  %1111 = vmatpush.msra.mxu0 %v1052
  %1112 = vmatpush.msra.mxu0 %v1049
  %1113 = vmatpush.msra.mxu0 %v1046
  %1114 = vmatpush.msra.mxu0 %v1043
  %1115 = vmatpush.msra.mxu0 %v1040
  %1116 = vmatpush.msra.mxu0 %v1037
  %1117 = vmatpush.msra.mxu0 %v1034
  %1118 = vmatpush.msra.mxu0 %v1031
  %1119 = vmatpush.msra.mxu0 %v1028
  %1120 = vmatpush.msra.mxu0 %v1025
  %1121 = vmatpush.msra.mxu0 %v1022
  %1122 = vmatpush.msra.mxu0 %v1019
  %1123 = vmatpush.msra.mxu0 %v1016
  %1124 = vmatpush.msra.mxu0 %v1013
  %1125 = vmatmul.f32.gmra.mxu0 %v1004
  %v1126 = vpop.f32.mrf.mxu0
  %v1127 = vadd.f32 %v1063, %v1126
  %1128 = vmatmul.f32.gmra.mxu0 %v1005
  %v1129 = vpop.f32.mrf.mxu0
  %v1130 = vadd.f32 %v1063, %v1129
  %1131 = vmatmul.f32.gmra.mxu0 %v1006
  %v1132 = vpop.f32.mrf.mxu0
  %v1133 = vadd.f32 %v1063, %v1132
  %1134 = vmatmul.f32.gmra.mxu0 %v1007
  %v1135 = vpop.f32.mrf.mxu0
  %v1136 = vadd.f32 %v1063, %v1135
  %1137 = vmatmul.f32.gmra.mxu0 %v1008
  %v1138 = vpop.f32.mrf.mxu0
  %v1139 = vadd.f32 %v1063, %v1138
  %1140 = vmatmul.f32.gmra.mxu0 %v1009
  %v1141 = vpop.f32.mrf.mxu0
  %v1142 = vadd.f32 %v1063, %v1141
  %1143 = vmatmul.f32.gmra.mxu0 %v1010
  %v1144 = vpop.f32.mrf.mxu0
  %v1145 = vadd.f32 %v1063, %v1144
  %1146 = vmatmul.f32.gmra.mxu0 %v1011
  %v1147 = vpop.f32.mrf.mxu0
  %v1148 = vadd.f32 %v1063, %v1147
  %1149 = vdwg.mxu0
  %1150 = vmatpush.msra.mxu0 %v1059
  %1151 = vmatpush.msra.mxu0 %v1056
  %1152 = vmatpush.msra.mxu0 %v1053
  %1153 = vmatpush.msra.mxu0 %v1050
  %1154 = vmatpush.msra.mxu0 %v1047
  %1155 = vmatpush.msra.mxu0 %v1044
  %1156 = vmatpush.msra.mxu0 %v1041
  %1157 = vmatpush.msra.mxu0 %v1038
  %1158 = vmatpush.msra.mxu0 %v1035
  %1159 = vmatpush.msra.mxu0 %v1032
  %1160 = vmatpush.msra.mxu0 %v1029
  %1161 = vmatpush.msra.mxu0 %v1026
  %1162 = vmatpush.msra.mxu0 %v1023
  %1163 = vmatpush.msra.mxu0 %v1020
  %1164 = vmatpush.msra.mxu0 %v1017
  %1165 = vmatpush.msra.mxu0 %v1014
  %1166 = vmatmul.f32.gmra.mxu0 %v1004
  %v1167 = vpop.f32.mrf.mxu0
  %v1168 = vadd.f32 %v1064, %v1167
  %1169 = vmatmul.f32.gmra.mxu0 %v1005
  %v1170 = vpop.f32.mrf.mxu0
  %v1171 = vadd.f32 %v1064, %v1170
  %1172 = vmatmul.f32.gmra.mxu0 %v1006
  %v1173 = vpop.f32.mrf.mxu0
  %v1174 = vadd.f32 %v1064, %v1173
  %1175 = vmatmul.f32.gmra.mxu0 %v1007
  %v1176 = vpop.f32.mrf.mxu0
  %v1177 = vadd.f32 %v1064, %v1176
  %1178 = vmatmul.f32.gmra.mxu0 %v1008
  %v1179 = vpop.f32.mrf.mxu0
  %v1180 = vadd.f32 %v1064, %v1179
  %1181 = vmatmul.f32.gmra.mxu0 %v1009
  %v1182 = vpop.f32.mrf.mxu0
  %v1183 = vadd.f32 %v1064, %v1182
  %1184 = vmatmul.f32.gmra.mxu0 %v1010
  %v1185 = vpop.f32.mrf.mxu0
  %v1186 = vadd.f32 %v1064, %v1185
  %1187 = vmatmul.f32.gmra.mxu0 %v1011
  %v1188 = vpop.f32.mrf.mxu0
  %v1189 = vadd.f32 %v1064, %v1188
  %1190 = vdwg.mxu0
  %1191 = vst [vmem:[#allocation3] sm:$0xff] %v1086
  %1192 = vst [vmem:[#allocation3 + $0x8] sm:$0xff] %v1127
  %1193 = vst [vmem:[#allocation3 + $0x10] sm:$0xff] %v1168
  %1194 = vst [vmem:[#allocation3 + $0x18] sm:$0xff] %v1089
  %1195 = vst [vmem:[#allocation3 + $0x20] sm:$0xff] %v1130
  %1196 = vst [vmem:[#allocation3 + $0x28] sm:$0xff] %v1171
  %1197 = vst [vmem:[#allocation3 + $0x30] sm:$0xff] %v1092
  %1198 = vst [vmem:[#allocation3 + $0x38] sm:$0xff] %v1133
  %1199 = vst [vmem:[#allocation3 + $0x40] sm:$0xff] %v1174
  %1200 = vst [vmem:[#allocation3 + $0x48] sm:$0xff] %v1095
  %1201 = vst [vmem:[#allocation3 + $0x50] sm:$0xff] %v1136
  %1202 = vst [vmem:[#allocation3 + $0x58] sm:$0xff] %v1177
  %1203 = vst [vmem:[#allocation3 + $0x60] sm:$0xff] %v1098
  %1204 = vst [vmem:[#allocation3 + $0x68] sm:$0xff] %v1139
  %1205 = vst [vmem:[#allocation3 + $0x70] sm:$0xff] %v1180
  %1206 = vst [vmem:[#allocation3 + $0x78] sm:$0xff] %v1101
  %1207 = vst [vmem:[#allocation3 + $0x80] sm:$0xff] %v1142
  %1208 = vst [vmem:[#allocation3 + $0x88] sm:$0xff] %v1183
  %1209 = vst [vmem:[#allocation3 + $0x90] sm:$0xff] %v1104
  %1210 = vst [vmem:[#allocation3 + $0x98] sm:$0xff] %v1145
  %1211 = vst [vmem:[#allocation3 + $0xa0] sm:$0xff] %v1186
  %1212 = vst [vmem:[#allocation3 + $0xa8] sm:$0xff] %v1107
  %1213 = vst [vmem:[#allocation3 + $0xb0] sm:$0xff] %v1148
  %1214 = vst [vmem:[#allocation3 + $0xb8] sm:$0xff] %v1189
  %v1215 = vld [vmem:[%s5] sm:$0xff]
  %v1216 = vld [vmem:[%s5 + $0x8] sm:$0xff]
  %v1217 = vld [vmem:[%s5 + $0x10] sm:$0xff]
  %v1218 = vld [vmem:[%s5 + $0x18] sm:$0xff]
  %v1219 = vld [vmem:[%s5 + $0x20] sm:$0xff]
  %v1220 = vld [vmem:[%s5 + $0x28] sm:$0xff]
  %v1221 = vld [vmem:[%s5 + $0x30] sm:$0xff]
  %v1222 = vld [vmem:[%s5 + $0x38] sm:$0xff]
  %v1223 = vld [vmem:[%s5 + $0x40] sm:$0xff]
  %v1224 = vld [vmem:[%s5 + $0x48] sm:$0xff]
  %v1225 = vld [vmem:[%s5 + $0x50] sm:$0xff]
  %v1226 = vld [vmem:[%s5 + $0x58] sm:$0xff]
  %v1227 = vld [vmem:[%s5 + $0x60] sm:$0xff]
  %v1228 = vld [vmem:[%s5 + $0x68] sm:$0xff]
  %v1229 = vld [vmem:[%s5 + $0x70] sm:$0xff]
  %v1230 = vld [vmem:[%s5 + $0x78] sm:$0xff]
  %v1231 = vld [vmem:[%s5 + $0x80] sm:$0xff]
  %v1232 = vld [vmem:[%s5 + $0x88] sm:$0xff]
  %v1233 = vld [vmem:[%s5 + $0x90] sm:$0xff]
  %v1234 = vld [vmem:[%s5 + $0x98] sm:$0xff]
  %v1235 = vld [vmem:[%s5 + $0xa0] sm:$0xff]
  %v1236 = vld [vmem:[%s5 + $0xa8] sm:$0xff]
  %v1237 = vld [vmem:[%s5 + $0xb0] sm:$0xff]
  %v1238 = vld [vmem:[%s5 + $0xb8] sm:$0xff]
  %v1239 = vld [vmem:[%s5 + $0xc0] sm:$0xff]
  %v1240 = vld [vmem:[%s5 + $0xc8] sm:$0xff]
  %v1241 = vld [vmem:[%s5 + $0xd0] sm:$0xff]
  %v1242 = vld [vmem:[%s5 + $0xd8] sm:$0xff]
  %v1243 = vld [vmem:[%s5 + $0xe0] sm:$0xff]
  %v1244 = vld [vmem:[%s5 + $0xe8] sm:$0xff]
  %v1245 = vld [vmem:[%s5 + $0xf0] sm:$0xff]
  %v1246 = vld [vmem:[%s5 + $0xf8] sm:$0xff]
  %v1247 = vld [vmem:[%s5 + $0x100] sm:$0xff]
  %v1248 = vld [vmem:[%s5 + $0x108] sm:$0xff]
  %v1249 = vld [vmem:[%s5 + $0x110] sm:$0xff]
  %v1250 = vld [vmem:[%s5 + $0x118] sm:$0xff]
  %v1251 = vld [vmem:[%s5 + $0x120] sm:$0xff]
  %v1252 = vld [vmem:[%s5 + $0x128] sm:$0xff]
  %v1253 = vld [vmem:[%s5 + $0x130] sm:$0xff]
  %v1254 = vld [vmem:[%s5 + $0x138] sm:$0xff]
  %v1255 = vld [vmem:[%s5 + $0x140] sm:$0xff]
  %v1256 = vld [vmem:[%s5 + $0x148] sm:$0xff]
  %v1257 = vld [vmem:[%s5 + $0x150] sm:$0xff]
  %v1258 = vld [vmem:[%s5 + $0x158] sm:$0xff]
  %v1259 = vld [vmem:[%s5 + $0x160] sm:$0xff]
  %v1260 = vld [vmem:[%s5 + $0x168] sm:$0xff]
  %v1261 = vld [vmem:[%s5 + $0x170] sm:$0xff]
  %v1262 = vld [vmem:[%s5 + $0x178] sm:$0xff]
  %v1263 = vld [vmem:[%s6] sm:$0x7]
  %v1265 = vperm.slane %v1263, 0
  %v1266 = vperm.slane %v1263, 1
  %v1267 = vperm.slane %v1263, 2
  %s1271 = smul.addr %s84, 8
  %s1272 = scalar_lea.vmem [#allocation3], %s1271
  %v1273 = vld [vmem:[%s1272] sm:$0xff]
  %v1274 = vld [vmem:[%s1272 + $0x8] sm:$0xff]
  %v1275 = vld [vmem:[%s1272 + $0x10] sm:$0xff]
  %1276 = vmatpush.msra.mxu0 %v1260
  %1277 = vmatpush.msra.mxu0 %v1257
  %1278 = vmatpush.msra.mxu0 %v1254
  %1279 = vmatpush.msra.mxu0 %v1251
  %1280 = vmatpush.msra.mxu0 %v1248
  %1281 = vmatpush.msra.mxu0 %v1245
  %1282 = vmatpush.msra.mxu0 %v1242
  %1283 = vmatpush.msra.mxu0 %v1239
  %1284 = vmatpush.msra.mxu0 %v1236
  %1285 = vmatpush.msra.mxu0 %v1233
  %1286 = vmatpush.msra.mxu0 %v1230
  %1287 = vmatpush.msra.mxu0 %v1227
  %1288 = vmatpush.msra.mxu0 %v1224
  %1289 = vmatpush.msra.mxu0 %v1221
  %1290 = vmatpush.msra.mxu0 %v1218
  %1291 = vmatpush.msra.mxu0 %v1215
  %1292 = vmatmul.f32.gmra.mxu0 0.0
  %v1293 = vpop.f32.mrf.mxu0
  %v1294 = vadd.f32 %v1265, %v1293
  %1295 = vdwg.mxu0
  %1296 = vmatpush.msra.mxu0 %v1261
  %1297 = vmatpush.msra.mxu0 %v1258
  %1298 = vmatpush.msra.mxu0 %v1255
  %1299 = vmatpush.msra.mxu0 %v1252
  %1300 = vmatpush.msra.mxu0 %v1249
  %1301 = vmatpush.msra.mxu0 %v1246
  %1302 = vmatpush.msra.mxu0 %v1243
  %1303 = vmatpush.msra.mxu0 %v1240
  %1304 = vmatpush.msra.mxu0 %v1237
  %1305 = vmatpush.msra.mxu0 %v1234
  %1306 = vmatpush.msra.mxu0 %v1231
  %1307 = vmatpush.msra.mxu0 %v1228
  %1308 = vmatpush.msra.mxu0 %v1225
  %1309 = vmatpush.msra.mxu0 %v1222
  %1310 = vmatpush.msra.mxu0 %v1219
  %1311 = vmatpush.msra.mxu0 %v1216
  %1312 = vmatmul.f32.gmra.mxu0 0.0
  %v1313 = vpop.f32.mrf.mxu0
  %v1314 = vadd.f32 %v1266, %v1313
  %1315 = vdwg.mxu0
  %1316 = vmatpush.msra.mxu0 %v1262
  %1317 = vmatpush.msra.mxu0 %v1259
  %1318 = vmatpush.msra.mxu0 %v1256
  %1319 = vmatpush.msra.mxu0 %v1253
  %1320 = vmatpush.msra.mxu0 %v1250
  %1321 = vmatpush.msra.mxu0 %v1247
  %1322 = vmatpush.msra.mxu0 %v1244
  %1323 = vmatpush.msra.mxu0 %v1241
  %1324 = vmatpush.msra.mxu0 %v1238
  %1325 = vmatpush.msra.mxu0 %v1235
  %1326 = vmatpush.msra.mxu0 %v1232
  %1327 = vmatpush.msra.mxu0 %v1229
  %1328 = vmatpush.msra.mxu0 %v1226
  %1329 = vmatpush.msra.mxu0 %v1223
  %1330 = vmatpush.msra.mxu0 %v1220
  %1331 = vmatpush.msra.mxu0 %v1217
  %1332 = vmatmul.f32.gmra.mxu0 0.0
  %v1333 = vpop.f32.mrf.mxu0
  %v1334 = vadd.f32 %v1267, %v1333
  %1335 = vdwg.mxu0
  %v1336 = vadd.f32 %v1273, %v1294
  %v1337 = vxor.u32 %v1336, 2147483648
  %v1338 = vmul.f32 %v1337, 1.442695
  %v1339 = vpow.pop %v1338
  %v1340 = vadd.f32 %v1339, 1.0
  %v1341 = vrcp.pop %v1340
  %v1342 = vmul.f32 %v1340, %v1341
  %v1343 = vsub.f32 1.0, %v1342
  %v1344 = vmul.f32 %v1341, %v1343
  %v1345 = vadd.f32 %v1341, %v1344
  %vm1346 = vweird.f32 %v1340
  %vm1347 = vweird.f32 %v1341
  %vm1348 = vmor %vm1346, %vm1347
  %v1349 = vsel %vm1348, %v1341, %v1345
  %v1350 = vand.u32 2147483647, %v1340
  %vm1351 = vcmp.eq.f32.partialorder %v1350, 8.507059e+37
  %v1352 = vand.u32 %v1340, 2147483648
  %v1353 = vor.u32 1.1754944e-38, %v1352
  %v1354 = vsel %vm1351, %v1353, %v1349
  %v1355 = vmul.f32 1.0, %v1354
  %v1356 = vadd.f32 %v1274, %v1314
  %v1357 = vxor.u32 %v1356, 2147483648
  %v1358 = vmul.f32 %v1357, 1.442695
  %v1359 = vpow.pop %v1358
  %v1360 = vadd.f32 %v1359, 1.0
  %v1361 = vrcp.pop %v1360
  %v1362 = vmul.f32 %v1360, %v1361
  %v1363 = vsub.f32 1.0, %v1362
  %v1364 = vmul.f32 %v1361, %v1363
  %v1365 = vadd.f32 %v1361, %v1364
  %vm1366 = vweird.f32 %v1360
  %vm1367 = vweird.f32 %v1361
  %vm1368 = vmor %vm1366, %vm1367
  %v1369 = vsel %vm1368, %v1361, %v1365
  %v1370 = vand.u32 2147483647, %v1360
  %vm1371 = vcmp.eq.f32.partialorder %v1370, 8.507059e+37
  %v1372 = vand.u32 %v1360, 2147483648
  %v1373 = vor.u32 1.1754944e-38, %v1372
  %v1374 = vsel %vm1371, %v1373, %v1369
  %v1375 = vmul.f32 1.0, %v1374
  %v1376 = vmul.f32 %v1355, %v1334
  %v1377 = vadd.f32 %v1275, %v1376
  %v1378 = vtanh.pop %v1377
  %v1379 = vsub.f32 1.0, %v1375
  %v1380 = vmul.f32 %v1379, %v1378
  %v1381 = vmul.f32 %v1375, 0.0
  %v1382 = vadd.f32 %v1380, %v1381
  %1383 = vst [vmem:[%s7] sm:$0xff] %v1382
  %s1384 = smul.addr %s198, 8
  %s1385 = scalar_lea.vmem [#allocation3], %s1384
  %v1386 = vld [vmem:[%s1385] sm:$0xff]
  %v1387 = vld [vmem:[%s1385 + $0x8] sm:$0xff]
  %v1388 = vld [vmem:[%s1385 + $0x10] sm:$0xff]
  %1389 = vmatpush.msra.mxu0 %v1260
  %1390 = vmatpush.msra.mxu0 %v1257
  %1391 = vmatpush.msra.mxu0 %v1254
  %1392 = vmatpush.msra.mxu0 %v1251
  %1393 = vmatpush.msra.mxu0 %v1248
  %1394 = vmatpush.msra.mxu0 %v1245
  %1395 = vmatpush.msra.mxu0 %v1242
  %1396 = vmatpush.msra.mxu0 %v1239
  %1397 = vmatpush.msra.mxu0 %v1236
  %1398 = vmatpush.msra.mxu0 %v1233
  %1399 = vmatpush.msra.mxu0 %v1230
  %1400 = vmatpush.msra.mxu0 %v1227
  %1401 = vmatpush.msra.mxu0 %v1224
  %1402 = vmatpush.msra.mxu0 %v1221
  %1403 = vmatpush.msra.mxu0 %v1218
  %1404 = vmatpush.msra.mxu0 %v1215
  %1405 = vmatmul.f32.gmra.mxu0 %v1382
  %v1406 = vpop.f32.mrf.mxu0
  %v1407 = vadd.f32 %v1265, %v1406
  %1408 = vdwg.mxu0
  %1409 = vmatpush.msra.mxu0 %v1261
  %1410 = vmatpush.msra.mxu0 %v1258
  %1411 = vmatpush.msra.mxu0 %v1255
  %1412 = vmatpush.msra.mxu0 %v1252
  %1413 = vmatpush.msra.mxu0 %v1249
  %1414 = vmatpush.msra.mxu0 %v1246
  %1415 = vmatpush.msra.mxu0 %v1243
  %1416 = vmatpush.msra.mxu0 %v1240
  %1417 = vmatpush.msra.mxu0 %v1237
  %1418 = vmatpush.msra.mxu0 %v1234
  %1419 = vmatpush.msra.mxu0 %v1231
  %1420 = vmatpush.msra.mxu0 %v1228
  %1421 = vmatpush.msra.mxu0 %v1225
  %1422 = vmatpush.msra.mxu0 %v1222
  %1423 = vmatpush.msra.mxu0 %v1219
  %1424 = vmatpush.msra.mxu0 %v1216
  %1425 = vmatmul.f32.gmra.mxu0 %v1382
  %v1426 = vpop.f32.mrf.mxu0
  %v1427 = vadd.f32 %v1266, %v1426
  %1428 = vdwg.mxu0
  %1429 = vmatpush.msra.mxu0 %v1262
  %1430 = vmatpush.msra.mxu0 %v1259
  %1431 = vmatpush.msra.mxu0 %v1256
  %1432 = vmatpush.msra.mxu0 %v1253
  %1433 = vmatpush.msra.mxu0 %v1250
  %1434 = vmatpush.msra.mxu0 %v1247
  %1435 = vmatpush.msra.mxu0 %v1244
  %1436 = vmatpush.msra.mxu0 %v1241
  %1437 = vmatpush.msra.mxu0 %v1238
  %1438 = vmatpush.msra.mxu0 %v1235
  %1439 = vmatpush.msra.mxu0 %v1232
  %1440 = vmatpush.msra.mxu0 %v1229
  %1441 = vmatpush.msra.mxu0 %v1226
  %1442 = vmatpush.msra.mxu0 %v1223
  %1443 = vmatpush.msra.mxu0 %v1220
  %1444 = vmatpush.msra.mxu0 %v1217
  %1445 = vmatmul.f32.gmra.mxu0 %v1382
  %v1446 = vpop.f32.mrf.mxu0
  %v1447 = vadd.f32 %v1267, %v1446
  %1448 = vdwg.mxu0
  %v1449 = vadd.f32 %v1386, %v1407
  %v1450 = vxor.u32 %v1449, 2147483648
  %v1451 = vmul.f32 %v1450, 1.442695
  %v1452 = vpow.pop %v1451
  %v1453 = vadd.f32 %v1452, 1.0
  %v1454 = vrcp.pop %v1453
  %v1455 = vmul.f32 %v1453, %v1454
  %v1456 = vsub.f32 1.0, %v1455
  %v1457 = vmul.f32 %v1454, %v1456
  %v1458 = vadd.f32 %v1454, %v1457
  %vm1459 = vweird.f32 %v1453
  %vm1460 = vweird.f32 %v1454
  %vm1461 = vmor %vm1459, %vm1460
  %v1462 = vsel %vm1461, %v1454, %v1458
  %v1463 = vand.u32 2147483647, %v1453
  %vm1464 = vcmp.eq.f32.partialorder %v1463, 8.507059e+37
  %v1465 = vand.u32 %v1453, 2147483648
  %v1466 = vor.u32 1.1754944e-38, %v1465
  %v1467 = vsel %vm1464, %v1466, %v1462
  %v1468 = vmul.f32 1.0, %v1467
  %v1469 = vadd.f32 %v1387, %v1427
  %v1470 = vxor.u32 %v1469, 2147483648
  %v1471 = vmul.f32 %v1470, 1.442695
  %v1472 = vpow.pop %v1471
  %v1473 = vadd.f32 %v1472, 1.0
  %v1474 = vrcp.pop %v1473
  %v1475 = vmul.f32 %v1473, %v1474
  %v1476 = vsub.f32 1.0, %v1475
  %v1477 = vmul.f32 %v1474, %v1476
  %v1478 = vadd.f32 %v1474, %v1477
  %vm1479 = vweird.f32 %v1473
  %vm1480 = vweird.f32 %v1474
  %vm1481 = vmor %vm1479, %vm1480
  %v1482 = vsel %vm1481, %v1474, %v1478
  %v1483 = vand.u32 2147483647, %v1473
  %vm1484 = vcmp.eq.f32.partialorder %v1483, 8.507059e+37
  %v1485 = vand.u32 %v1473, 2147483648
  %v1486 = vor.u32 1.1754944e-38, %v1485
  %v1487 = vsel %vm1484, %v1486, %v1482
  %v1488 = vmul.f32 1.0, %v1487
  %v1489 = vmul.f32 %v1468, %v1447
  %v1490 = vadd.f32 %v1388, %v1489
  %v1491 = vtanh.pop %v1490
  %v1492 = vsub.f32 1.0, %v1488
  %v1493 = vmul.f32 %v1492, %v1491
  %v1494 = vmul.f32 %v1488, %v1382
  %v1495 = vadd.f32 %v1493, %v1494
  %s1496 = scalar_lea.vmem %s7, 8
  %1497 = vst [vmem:[%s1496] sm:$0xff] %v1495
  %s1498 = smul.addr %s313, 8
  %s1499 = scalar_lea.vmem [#allocation3], %s1498
  %v1500 = vld [vmem:[%s1499] sm:$0xff]
  %v1501 = vld [vmem:[%s1499 + $0x8] sm:$0xff]
  %v1502 = vld [vmem:[%s1499 + $0x10] sm:$0xff]
  %1503 = vmatpush.msra.mxu0 %v1260
  %1504 = vmatpush.msra.mxu0 %v1257
  %1505 = vmatpush.msra.mxu0 %v1254
  %1506 = vmatpush.msra.mxu0 %v1251
  %1507 = vmatpush.msra.mxu0 %v1248
  %1508 = vmatpush.msra.mxu0 %v1245
  %1509 = vmatpush.msra.mxu0 %v1242
  %1510 = vmatpush.msra.mxu0 %v1239
  %1511 = vmatpush.msra.mxu0 %v1236
  %1512 = vmatpush.msra.mxu0 %v1233
  %1513 = vmatpush.msra.mxu0 %v1230
  %1514 = vmatpush.msra.mxu0 %v1227
  %1515 = vmatpush.msra.mxu0 %v1224
  %1516 = vmatpush.msra.mxu0 %v1221
  %1517 = vmatpush.msra.mxu0 %v1218
  %1518 = vmatpush.msra.mxu0 %v1215
  %1519 = vmatmul.f32.gmra.mxu0 %v1495
  %v1520 = vpop.f32.mrf.mxu0
  %v1521 = vadd.f32 %v1265, %v1520
  %1522 = vdwg.mxu0
  %1523 = vmatpush.msra.mxu0 %v1261
  %1524 = vmatpush.msra.mxu0 %v1258
  %1525 = vmatpush.msra.mxu0 %v1255
  %1526 = vmatpush.msra.mxu0 %v1252
  %1527 = vmatpush.msra.mxu0 %v1249
  %1528 = vmatpush.msra.mxu0 %v1246
  %1529 = vmatpush.msra.mxu0 %v1243
  %1530 = vmatpush.msra.mxu0 %v1240
  %1531 = vmatpush.msra.mxu0 %v1237
  %1532 = vmatpush.msra.mxu0 %v1234
  %1533 = vmatpush.msra.mxu0 %v1231
  %1534 = vmatpush.msra.mxu0 %v1228
  %1535 = vmatpush.msra.mxu0 %v1225
  %1536 = vmatpush.msra.mxu0 %v1222
  %1537 = vmatpush.msra.mxu0 %v1219
  %1538 = vmatpush.msra.mxu0 %v1216
  %1539 = vmatmul.f32.gmra.mxu0 %v1495
  %v1540 = vpop.f32.mrf.mxu0
  %v1541 = vadd.f32 %v1266, %v1540
  %1542 = vdwg.mxu0
  %1543 = vmatpush.msra.mxu0 %v1262
  %1544 = vmatpush.msra.mxu0 %v1259
  %1545 = vmatpush.msra.mxu0 %v1256
  %1546 = vmatpush.msra.mxu0 %v1253
  %1547 = vmatpush.msra.mxu0 %v1250
  %1548 = vmatpush.msra.mxu0 %v1247
  %1549 = vmatpush.msra.mxu0 %v1244
  %1550 = vmatpush.msra.mxu0 %v1241
  %1551 = vmatpush.msra.mxu0 %v1238
  %1552 = vmatpush.msra.mxu0 %v1235
  %1553 = vmatpush.msra.mxu0 %v1232
  %1554 = vmatpush.msra.mxu0 %v1229
  %1555 = vmatpush.msra.mxu0 %v1226
  %1556 = vmatpush.msra.mxu0 %v1223
  %1557 = vmatpush.msra.mxu0 %v1220
  %1558 = vmatpush.msra.mxu0 %v1217
  %1559 = vmatmul.f32.gmra.mxu0 %v1495
  %v1560 = vpop.f32.mrf.mxu0
  %v1561 = vadd.f32 %v1267, %v1560
  %1562 = vdwg.mxu0
  %v1563 = vadd.f32 %v1500, %v1521
  %v1564 = vxor.u32 %v1563, 2147483648
  %v1565 = vmul.f32 %v1564, 1.442695
  %v1566 = vpow.pop %v1565
  %v1567 = vadd.f32 %v1566, 1.0
  %v1568 = vrcp.pop %v1567
  %v1569 = vmul.f32 %v1567, %v1568
  %v1570 = vsub.f32 1.0, %v1569
  %v1571 = vmul.f32 %v1568, %v1570
  %v1572 = vadd.f32 %v1568, %v1571
  %vm1573 = vweird.f32 %v1567
  %vm1574 = vweird.f32 %v1568
  %vm1575 = vmor %vm1573, %vm1574
  %v1576 = vsel %vm1575, %v1568, %v1572
  %v1577 = vand.u32 2147483647, %v1567
  %vm1578 = vcmp.eq.f32.partialorder %v1577, 8.507059e+37
  %v1579 = vand.u32 %v1567, 2147483648
  %v1580 = vor.u32 1.1754944e-38, %v1579
  %v1581 = vsel %vm1578, %v1580, %v1576
  %v1582 = vmul.f32 1.0, %v1581
  %v1583 = vadd.f32 %v1501, %v1541
  %v1584 = vxor.u32 %v1583, 2147483648
  %v1585 = vmul.f32 %v1584, 1.442695
  %v1586 = vpow.pop %v1585
  %v1587 = vadd.f32 %v1586, 1.0
  %v1588 = vrcp.pop %v1587
  %v1589 = vmul.f32 %v1587, %v1588
  %v1590 = vsub.f32 1.0, %v1589
  %v1591 = vmul.f32 %v1588, %v1590
  %v1592 = vadd.f32 %v1588, %v1591
  %vm1593 = vweird.f32 %v1587
  %vm1594 = vweird.f32 %v1588
  %vm1595 = vmor %vm1593, %vm1594
  %v1596 = vsel %vm1595, %v1588, %v1592
  %v1597 = vand.u32 2147483647, %v1587
  %vm1598 = vcmp.eq.f32.partialorder %v1597, 8.507059e+37
  %v1599 = vand.u32 %v1587, 2147483648
  %v1600 = vor.u32 1.1754944e-38, %v1599
  %v1601 = vsel %vm1598, %v1600, %v1596
  %v1602 = vmul.f32 1.0, %v1601
  %v1603 = vmul.f32 %v1582, %v1561
  %v1604 = vadd.f32 %v1502, %v1603
  %v1605 = vtanh.pop %v1604
  %v1606 = vsub.f32 1.0, %v1602
  %v1607 = vmul.f32 %v1606, %v1605
  %v1608 = vmul.f32 %v1602, %v1495
  %v1609 = vadd.f32 %v1607, %v1608
  %s1610 = scalar_lea.vmem %s7, 16
  %1611 = vst [vmem:[%s1610] sm:$0xff] %v1609
  %s1612 = smul.addr %s428, 8
  %s1613 = scalar_lea.vmem [#allocation3], %s1612
  %v1614 = vld [vmem:[%s1613] sm:$0xff]
  %v1615 = vld [vmem:[%s1613 + $0x8] sm:$0xff]
  %v1616 = vld [vmem:[%s1613 + $0x10] sm:$0xff]
  %1617 = vmatpush.msra.mxu0 %v1260
  %1618 = vmatpush.msra.mxu0 %v1257
  %1619 = vmatpush.msra.mxu0 %v1254
  %1620 = vmatpush.msra.mxu0 %v1251
  %1621 = vmatpush.msra.mxu0 %v1248
  %1622 = vmatpush.msra.mxu0 %v1245
  %1623 = vmatpush.msra.mxu0 %v1242
  %1624 = vmatpush.msra.mxu0 %v1239
  %1625 = vmatpush.msra.mxu0 %v1236
  %1626 = vmatpush.msra.mxu0 %v1233
  %1627 = vmatpush.msra.mxu0 %v1230
  %1628 = vmatpush.msra.mxu0 %v1227
  %1629 = vmatpush.msra.mxu0 %v1224
  %1630 = vmatpush.msra.mxu0 %v1221
  %1631 = vmatpush.msra.mxu0 %v1218
  %1632 = vmatpush.msra.mxu0 %v1215
  %1633 = vmatmul.f32.gmra.mxu0 %v1609
  %v1634 = vpop.f32.mrf.mxu0
  %v1635 = vadd.f32 %v1265, %v1634
  %1636 = vdwg.mxu0
  %1637 = vmatpush.msra.mxu0 %v1261
  %1638 = vmatpush.msra.mxu0 %v1258
  %1639 = vmatpush.msra.mxu0 %v1255
  %1640 = vmatpush.msra.mxu0 %v1252
  %1641 = vmatpush.msra.mxu0 %v1249
  %1642 = vmatpush.msra.mxu0 %v1246
  %1643 = vmatpush.msra.mxu0 %v1243
  %1644 = vmatpush.msra.mxu0 %v1240
  %1645 = vmatpush.msra.mxu0 %v1237
  %1646 = vmatpush.msra.mxu0 %v1234
  %1647 = vmatpush.msra.mxu0 %v1231
  %1648 = vmatpush.msra.mxu0 %v1228
  %1649 = vmatpush.msra.mxu0 %v1225
  %1650 = vmatpush.msra.mxu0 %v1222
  %1651 = vmatpush.msra.mxu0 %v1219
  %1652 = vmatpush.msra.mxu0 %v1216
  %1653 = vmatmul.f32.gmra.mxu0 %v1609
  %v1654 = vpop.f32.mrf.mxu0
  %v1655 = vadd.f32 %v1266, %v1654
  %1656 = vdwg.mxu0
  %1657 = vmatpush.msra.mxu0 %v1262
  %1658 = vmatpush.msra.mxu0 %v1259
  %1659 = vmatpush.msra.mxu0 %v1256
  %1660 = vmatpush.msra.mxu0 %v1253
  %1661 = vmatpush.msra.mxu0 %v1250
  %1662 = vmatpush.msra.mxu0 %v1247
  %1663 = vmatpush.msra.mxu0 %v1244
  %1664 = vmatpush.msra.mxu0 %v1241
  %1665 = vmatpush.msra.mxu0 %v1238
  %1666 = vmatpush.msra.mxu0 %v1235
  %1667 = vmatpush.msra.mxu0 %v1232
  %1668 = vmatpush.msra.mxu0 %v1229
  %1669 = vmatpush.msra.mxu0 %v1226
  %1670 = vmatpush.msra.mxu0 %v1223
  %1671 = vmatpush.msra.mxu0 %v1220
  %1672 = vmatpush.msra.mxu0 %v1217
  %1673 = vmatmul.f32.gmra.mxu0 %v1609
  %v1674 = vpop.f32.mrf.mxu0
  %v1675 = vadd.f32 %v1267, %v1674
  %1676 = vdwg.mxu0
  %v1677 = vadd.f32 %v1614, %v1635
  %v1678 = vxor.u32 %v1677, 2147483648
  %v1679 = vmul.f32 %v1678, 1.442695
  %v1680 = vpow.pop %v1679
  %v1681 = vadd.f32 %v1680, 1.0
  %v1682 = vrcp.pop %v1681
  %v1683 = vmul.f32 %v1681, %v1682
  %v1684 = vsub.f32 1.0, %v1683
  %v1685 = vmul.f32 %v1682, %v1684
  %v1686 = vadd.f32 %v1682, %v1685
  %vm1687 = vweird.f32 %v1681
  %vm1688 = vweird.f32 %v1682
  %vm1689 = vmor %vm1687, %vm1688
  %v1690 = vsel %vm1689, %v1682, %v1686
  %v1691 = vand.u32 2147483647, %v1681
  %vm1692 = vcmp.eq.f32.partialorder %v1691, 8.507059e+37
  %v1693 = vand.u32 %v1681, 2147483648
  %v1694 = vor.u32 1.1754944e-38, %v1693
  %v1695 = vsel %vm1692, %v1694, %v1690
  %v1696 = vmul.f32 1.0, %v1695
  %v1697 = vadd.f32 %v1615, %v1655
  %v1698 = vxor.u32 %v1697, 2147483648
  %v1699 = vmul.f32 %v1698, 1.442695
  %v1700 = vpow.pop %v1699
  %v1701 = vadd.f32 %v1700, 1.0
  %v1702 = vrcp.pop %v1701
  %v1703 = vmul.f32 %v1701, %v1702
  %v1704 = vsub.f32 1.0, %v1703
  %v1705 = vmul.f32 %v1702, %v1704
  %v1706 = vadd.f32 %v1702, %v1705
  %vm1707 = vweird.f32 %v1701
  %vm1708 = vweird.f32 %v1702
  %vm1709 = vmor %vm1707, %vm1708
  %v1710 = vsel %vm1709, %v1702, %v1706
  %v1711 = vand.u32 2147483647, %v1701
  %vm1712 = vcmp.eq.f32.partialorder %v1711, 8.507059e+37
  %v1713 = vand.u32 %v1701, 2147483648
  %v1714 = vor.u32 1.1754944e-38, %v1713
  %v1715 = vsel %vm1712, %v1714, %v1710
  %v1716 = vmul.f32 1.0, %v1715
  %v1717 = vmul.f32 %v1696, %v1675
  %v1718 = vadd.f32 %v1616, %v1717
  %v1719 = vtanh.pop %v1718
  %v1720 = vsub.f32 1.0, %v1716
  %v1721 = vmul.f32 %v1720, %v1719
  %v1722 = vmul.f32 %v1716, %v1609
  %v1723 = vadd.f32 %v1721, %v1722
  %s1724 = scalar_lea.vmem %s7, 24
  %1725 = vst [vmem:[%s1724] sm:$0xff] %v1723
  %s1726 = smul.addr %s543, 8
  %s1727 = scalar_lea.vmem [#allocation3], %s1726
  %v1728 = vld [vmem:[%s1727] sm:$0xff]
  %v1729 = vld [vmem:[%s1727 + $0x8] sm:$0xff]
  %v1730 = vld [vmem:[%s1727 + $0x10] sm:$0xff]
  %1731 = vmatpush.msra.mxu0 %v1260
  %1732 = vmatpush.msra.mxu0 %v1257
  %1733 = vmatpush.msra.mxu0 %v1254
  %1734 = vmatpush.msra.mxu0 %v1251
  %1735 = vmatpush.msra.mxu0 %v1248
  %1736 = vmatpush.msra.mxu0 %v1245
  %1737 = vmatpush.msra.mxu0 %v1242
  %1738 = vmatpush.msra.mxu0 %v1239
  %1739 = vmatpush.msra.mxu0 %v1236
  %1740 = vmatpush.msra.mxu0 %v1233
  %1741 = vmatpush.msra.mxu0 %v1230
  %1742 = vmatpush.msra.mxu0 %v1227
  %1743 = vmatpush.msra.mxu0 %v1224
  %1744 = vmatpush.msra.mxu0 %v1221
  %1745 = vmatpush.msra.mxu0 %v1218
  %1746 = vmatpush.msra.mxu0 %v1215
  %1747 = vmatmul.f32.gmra.mxu0 %v1723
  %v1748 = vpop.f32.mrf.mxu0
  %v1749 = vadd.f32 %v1265, %v1748
  %1750 = vdwg.mxu0
  %1751 = vmatpush.msra.mxu0 %v1261
  %1752 = vmatpush.msra.mxu0 %v1258
  %1753 = vmatpush.msra.mxu0 %v1255
  %1754 = vmatpush.msra.mxu0 %v1252
  %1755 = vmatpush.msra.mxu0 %v1249
  %1756 = vmatpush.msra.mxu0 %v1246
  %1757 = vmatpush.msra.mxu0 %v1243
  %1758 = vmatpush.msra.mxu0 %v1240
  %1759 = vmatpush.msra.mxu0 %v1237
  %1760 = vmatpush.msra.mxu0 %v1234
  %1761 = vmatpush.msra.mxu0 %v1231
  %1762 = vmatpush.msra.mxu0 %v1228
  %1763 = vmatpush.msra.mxu0 %v1225
  %1764 = vmatpush.msra.mxu0 %v1222
  %1765 = vmatpush.msra.mxu0 %v1219
  %1766 = vmatpush.msra.mxu0 %v1216
  %1767 = vmatmul.f32.gmra.mxu0 %v1723
  %v1768 = vpop.f32.mrf.mxu0
  %v1769 = vadd.f32 %v1266, %v1768
  %1770 = vdwg.mxu0
  %1771 = vmatpush.msra.mxu0 %v1262
  %1772 = vmatpush.msra.mxu0 %v1259
  %1773 = vmatpush.msra.mxu0 %v1256
  %1774 = vmatpush.msra.mxu0 %v1253
  %1775 = vmatpush.msra.mxu0 %v1250
  %1776 = vmatpush.msra.mxu0 %v1247
  %1777 = vmatpush.msra.mxu0 %v1244
  %1778 = vmatpush.msra.mxu0 %v1241
  %1779 = vmatpush.msra.mxu0 %v1238
  %1780 = vmatpush.msra.mxu0 %v1235
  %1781 = vmatpush.msra.mxu0 %v1232
  %1782 = vmatpush.msra.mxu0 %v1229
  %1783 = vmatpush.msra.mxu0 %v1226
  %1784 = vmatpush.msra.mxu0 %v1223
  %1785 = vmatpush.msra.mxu0 %v1220
  %1786 = vmatpush.msra.mxu0 %v1217
  %1787 = vmatmul.f32.gmra.mxu0 %v1723
  %v1788 = vpop.f32.mrf.mxu0
  %v1789 = vadd.f32 %v1267, %v1788
  %1790 = vdwg.mxu0
  %v1791 = vadd.f32 %v1728, %v1749
  %v1792 = vxor.u32 %v1791, 2147483648
  %v1793 = vmul.f32 %v1792, 1.442695
  %v1794 = vpow.pop %v1793
  %v1795 = vadd.f32 %v1794, 1.0
  %v1796 = vrcp.pop %v1795
  %v1797 = vmul.f32 %v1795, %v1796
  %v1798 = vsub.f32 1.0, %v1797
  %v1799 = vmul.f32 %v1796, %v1798
  %v1800 = vadd.f32 %v1796, %v1799
  %vm1801 = vweird.f32 %v1795
  %vm1802 = vweird.f32 %v1796
  %vm1803 = vmor %vm1801, %vm1802
  %v1804 = vsel %vm1803, %v1796, %v1800
  %v1805 = vand.u32 2147483647, %v1795
  %vm1806 = vcmp.eq.f32.partialorder %v1805, 8.507059e+37
  %v1807 = vand.u32 %v1795, 2147483648
  %v1808 = vor.u32 1.1754944e-38, %v1807
  %v1809 = vsel %vm1806, %v1808, %v1804
  %v1810 = vmul.f32 1.0, %v1809
  %v1811 = vadd.f32 %v1729, %v1769
  %v1812 = vxor.u32 %v1811, 2147483648
  %v1813 = vmul.f32 %v1812, 1.442695
  %v1814 = vpow.pop %v1813
  %v1815 = vadd.f32 %v1814, 1.0
  %v1816 = vrcp.pop %v1815
  %v1817 = vmul.f32 %v1815, %v1816
  %v1818 = vsub.f32 1.0, %v1817
  %v1819 = vmul.f32 %v1816, %v1818
  %v1820 = vadd.f32 %v1816, %v1819
  %vm1821 = vweird.f32 %v1815
  %vm1822 = vweird.f32 %v1816
  %vm1823 = vmor %vm1821, %vm1822
  %v1824 = vsel %vm1823, %v1816, %v1820
  %v1825 = vand.u32 2147483647, %v1815
  %vm1826 = vcmp.eq.f32.partialorder %v1825, 8.507059e+37
  %v1827 = vand.u32 %v1815, 2147483648
  %v1828 = vor.u32 1.1754944e-38, %v1827
  %v1829 = vsel %vm1826, %v1828, %v1824
  %v1830 = vmul.f32 1.0, %v1829
  %v1831 = vmul.f32 %v1810, %v1789
  %v1832 = vadd.f32 %v1730, %v1831
  %v1833 = vtanh.pop %v1832
  %v1834 = vsub.f32 1.0, %v1830
  %v1835 = vmul.f32 %v1834, %v1833
  %v1836 = vmul.f32 %v1830, %v1723
  %v1837 = vadd.f32 %v1835, %v1836
  %s1838 = scalar_lea.vmem %s7, 32
  %1839 = vst [vmem:[%s1838] sm:$0xff] %v1837
  %s1840 = smul.addr %s658, 8
  %s1841 = scalar_lea.vmem [#allocation3], %s1840
  %v1842 = vld [vmem:[%s1841] sm:$0xff]
  %v1843 = vld [vmem:[%s1841 + $0x8] sm:$0xff]
  %v1844 = vld [vmem:[%s1841 + $0x10] sm:$0xff]
  %1845 = vmatpush.msra.mxu0 %v1260
  %1846 = vmatpush.msra.mxu0 %v1257
  %1847 = vmatpush.msra.mxu0 %v1254
  %1848 = vmatpush.msra.mxu0 %v1251
  %1849 = vmatpush.msra.mxu0 %v1248
  %1850 = vmatpush.msra.mxu0 %v1245
  %1851 = vmatpush.msra.mxu0 %v1242
  %1852 = vmatpush.msra.mxu0 %v1239
  %1853 = vmatpush.msra.mxu0 %v1236
  %1854 = vmatpush.msra.mxu0 %v1233
  %1855 = vmatpush.msra.mxu0 %v1230
  %1856 = vmatpush.msra.mxu0 %v1227
  %1857 = vmatpush.msra.mxu0 %v1224
  %1858 = vmatpush.msra.mxu0 %v1221
  %1859 = vmatpush.msra.mxu0 %v1218
  %1860 = vmatpush.msra.mxu0 %v1215
  %1861 = vmatmul.f32.gmra.mxu0 %v1837
  %v1862 = vpop.f32.mrf.mxu0
  %v1863 = vadd.f32 %v1265, %v1862
  %1864 = vdwg.mxu0
  %1865 = vmatpush.msra.mxu0 %v1261
  %1866 = vmatpush.msra.mxu0 %v1258
  %1867 = vmatpush.msra.mxu0 %v1255
  %1868 = vmatpush.msra.mxu0 %v1252
  %1869 = vmatpush.msra.mxu0 %v1249
  %1870 = vmatpush.msra.mxu0 %v1246
  %1871 = vmatpush.msra.mxu0 %v1243
  %1872 = vmatpush.msra.mxu0 %v1240
  %1873 = vmatpush.msra.mxu0 %v1237
  %1874 = vmatpush.msra.mxu0 %v1234
  %1875 = vmatpush.msra.mxu0 %v1231
  %1876 = vmatpush.msra.mxu0 %v1228
  %1877 = vmatpush.msra.mxu0 %v1225
  %1878 = vmatpush.msra.mxu0 %v1222
  %1879 = vmatpush.msra.mxu0 %v1219
  %1880 = vmatpush.msra.mxu0 %v1216
  %1881 = vmatmul.f32.gmra.mxu0 %v1837
  %v1882 = vpop.f32.mrf.mxu0
  %v1883 = vadd.f32 %v1266, %v1882
  %1884 = vdwg.mxu0
  %1885 = vmatpush.msra.mxu0 %v1262
  %1886 = vmatpush.msra.mxu0 %v1259
  %1887 = vmatpush.msra.mxu0 %v1256
  %1888 = vmatpush.msra.mxu0 %v1253
  %1889 = vmatpush.msra.mxu0 %v1250
  %1890 = vmatpush.msra.mxu0 %v1247
  %1891 = vmatpush.msra.mxu0 %v1244
  %1892 = vmatpush.msra.mxu0 %v1241
  %1893 = vmatpush.msra.mxu0 %v1238
  %1894 = vmatpush.msra.mxu0 %v1235
  %1895 = vmatpush.msra.mxu0 %v1232
  %1896 = vmatpush.msra.mxu0 %v1229
  %1897 = vmatpush.msra.mxu0 %v1226
  %1898 = vmatpush.msra.mxu0 %v1223
  %1899 = vmatpush.msra.mxu0 %v1220
  %1900 = vmatpush.msra.mxu0 %v1217
  %1901 = vmatmul.f32.gmra.mxu0 %v1837
  %v1902 = vpop.f32.mrf.mxu0
  %v1903 = vadd.f32 %v1267, %v1902
  %1904 = vdwg.mxu0
  %v1905 = vadd.f32 %v1842, %v1863
  %v1906 = vxor.u32 %v1905, 2147483648
  %v1907 = vmul.f32 %v1906, 1.442695
  %v1908 = vpow.pop %v1907
  %v1909 = vadd.f32 %v1908, 1.0
  %v1910 = vrcp.pop %v1909
  %v1911 = vmul.f32 %v1909, %v1910
  %v1912 = vsub.f32 1.0, %v1911
  %v1913 = vmul.f32 %v1910, %v1912
  %v1914 = vadd.f32 %v1910, %v1913
  %vm1915 = vweird.f32 %v1909
  %vm1916 = vweird.f32 %v1910
  %vm1917 = vmor %vm1915, %vm1916
  %v1918 = vsel %vm1917, %v1910, %v1914
  %v1919 = vand.u32 2147483647, %v1909
  %vm1920 = vcmp.eq.f32.partialorder %v1919, 8.507059e+37
  %v1921 = vand.u32 %v1909, 2147483648
  %v1922 = vor.u32 1.1754944e-38, %v1921
  %v1923 = vsel %vm1920, %v1922, %v1918
  %v1924 = vmul.f32 1.0, %v1923
  %v1925 = vadd.f32 %v1843, %v1883
  %v1926 = vxor.u32 %v1925, 2147483648
  %v1927 = vmul.f32 %v1926, 1.442695
  %v1928 = vpow.pop %v1927
  %v1929 = vadd.f32 %v1928, 1.0
  %v1930 = vrcp.pop %v1929
  %v1931 = vmul.f32 %v1929, %v1930
  %v1932 = vsub.f32 1.0, %v1931
  %v1933 = vmul.f32 %v1930, %v1932
  %v1934 = vadd.f32 %v1930, %v1933
  %vm1935 = vweird.f32 %v1929
  %vm1936 = vweird.f32 %v1930
  %vm1937 = vmor %vm1935, %vm1936
  %v1938 = vsel %vm1937, %v1930, %v1934
  %v1939 = vand.u32 2147483647, %v1929
  %vm1940 = vcmp.eq.f32.partialorder %v1939, 8.507059e+37
  %v1941 = vand.u32 %v1929, 2147483648
  %v1942 = vor.u32 1.1754944e-38, %v1941
  %v1943 = vsel %vm1940, %v1942, %v1938
  %v1944 = vmul.f32 1.0, %v1943
  %v1945 = vmul.f32 %v1924, %v1903
  %v1946 = vadd.f32 %v1844, %v1945
  %v1947 = vtanh.pop %v1946
  %v1948 = vsub.f32 1.0, %v1944
  %v1949 = vmul.f32 %v1948, %v1947
  %v1950 = vmul.f32 %v1944, %v1837
  %v1951 = vadd.f32 %v1949, %v1950
  %s1952 = scalar_lea.vmem %s7, 40
  %1953 = vst [vmem:[%s1952] sm:$0xff] %v1951
  %s1954 = smul.addr %s773, 8
  %s1955 = scalar_lea.vmem [#allocation3], %s1954
  %v1956 = vld [vmem:[%s1955] sm:$0xff]
  %v1957 = vld [vmem:[%s1955 + $0x8] sm:$0xff]
  %v1958 = vld [vmem:[%s1955 + $0x10] sm:$0xff]
  %1959 = vmatpush.msra.mxu0 %v1260
  %1960 = vmatpush.msra.mxu0 %v1257
  %1961 = vmatpush.msra.mxu0 %v1254
  %1962 = vmatpush.msra.mxu0 %v1251
  %1963 = vmatpush.msra.mxu0 %v1248
  %1964 = vmatpush.msra.mxu0 %v1245
  %1965 = vmatpush.msra.mxu0 %v1242
  %1966 = vmatpush.msra.mxu0 %v1239
  %1967 = vmatpush.msra.mxu0 %v1236
  %1968 = vmatpush.msra.mxu0 %v1233
  %1969 = vmatpush.msra.mxu0 %v1230
  %1970 = vmatpush.msra.mxu0 %v1227
  %1971 = vmatpush.msra.mxu0 %v1224
  %1972 = vmatpush.msra.mxu0 %v1221
  %1973 = vmatpush.msra.mxu0 %v1218
  %1974 = vmatpush.msra.mxu0 %v1215
  %1975 = vmatmul.f32.gmra.mxu0 %v1951
  %v1976 = vpop.f32.mrf.mxu0
  %v1977 = vadd.f32 %v1265, %v1976
  %1978 = vdwg.mxu0
  %1979 = vmatpush.msra.mxu0 %v1261
  %1980 = vmatpush.msra.mxu0 %v1258
  %1981 = vmatpush.msra.mxu0 %v1255
  %1982 = vmatpush.msra.mxu0 %v1252
  %1983 = vmatpush.msra.mxu0 %v1249
  %1984 = vmatpush.msra.mxu0 %v1246
  %1985 = vmatpush.msra.mxu0 %v1243
  %1986 = vmatpush.msra.mxu0 %v1240
  %1987 = vmatpush.msra.mxu0 %v1237
  %1988 = vmatpush.msra.mxu0 %v1234
  %1989 = vmatpush.msra.mxu0 %v1231
  %1990 = vmatpush.msra.mxu0 %v1228
  %1991 = vmatpush.msra.mxu0 %v1225
  %1992 = vmatpush.msra.mxu0 %v1222
  %1993 = vmatpush.msra.mxu0 %v1219
  %1994 = vmatpush.msra.mxu0 %v1216
  %1995 = vmatmul.f32.gmra.mxu0 %v1951
  %v1996 = vpop.f32.mrf.mxu0
  %v1997 = vadd.f32 %v1266, %v1996
  %1998 = vdwg.mxu0
  %1999 = vmatpush.msra.mxu0 %v1262
  %2000 = vmatpush.msra.mxu0 %v1259
  %2001 = vmatpush.msra.mxu0 %v1256
  %2002 = vmatpush.msra.mxu0 %v1253
  %2003 = vmatpush.msra.mxu0 %v1250
  %2004 = vmatpush.msra.mxu0 %v1247
  %2005 = vmatpush.msra.mxu0 %v1244
  %2006 = vmatpush.msra.mxu0 %v1241
  %2007 = vmatpush.msra.mxu0 %v1238
  %2008 = vmatpush.msra.mxu0 %v1235
  %2009 = vmatpush.msra.mxu0 %v1232
  %2010 = vmatpush.msra.mxu0 %v1229
  %2011 = vmatpush.msra.mxu0 %v1226
  %2012 = vmatpush.msra.mxu0 %v1223
  %2013 = vmatpush.msra.mxu0 %v1220
  %2014 = vmatpush.msra.mxu0 %v1217
  %2015 = vmatmul.f32.gmra.mxu0 %v1951
  %v2016 = vpop.f32.mrf.mxu0
  %v2017 = vadd.f32 %v1267, %v2016
  %2018 = vdwg.mxu0
  %v2019 = vadd.f32 %v1956, %v1977
  %v2020 = vxor.u32 %v2019, 2147483648
  %v2021 = vmul.f32 %v2020, 1.442695
  %v2022 = vpow.pop %v2021
  %v2023 = vadd.f32 %v2022, 1.0
  %v2024 = vrcp.pop %v2023
  %v2025 = vmul.f32 %v2023, %v2024
  %v2026 = vsub.f32 1.0, %v2025
  %v2027 = vmul.f32 %v2024, %v2026
  %v2028 = vadd.f32 %v2024, %v2027
  %vm2029 = vweird.f32 %v2023
  %vm2030 = vweird.f32 %v2024
  %vm2031 = vmor %vm2029, %vm2030
  %v2032 = vsel %vm2031, %v2024, %v2028
  %v2033 = vand.u32 2147483647, %v2023
  %vm2034 = vcmp.eq.f32.partialorder %v2033, 8.507059e+37
  %v2035 = vand.u32 %v2023, 2147483648
  %v2036 = vor.u32 1.1754944e-38, %v2035
  %v2037 = vsel %vm2034, %v2036, %v2032
  %v2038 = vmul.f32 1.0, %v2037
  %v2039 = vadd.f32 %v1957, %v1997
  %v2040 = vxor.u32 %v2039, 2147483648
  %v2041 = vmul.f32 %v2040, 1.442695
  %v2042 = vpow.pop %v2041
  %v2043 = vadd.f32 %v2042, 1.0
  %v2044 = vrcp.pop %v2043
  %v2045 = vmul.f32 %v2043, %v2044
  %v2046 = vsub.f32 1.0, %v2045
  %v2047 = vmul.f32 %v2044, %v2046
  %v2048 = vadd.f32 %v2044, %v2047
  %vm2049 = vweird.f32 %v2043
  %vm2050 = vweird.f32 %v2044
  %vm2051 = vmor %vm2049, %vm2050
  %v2052 = vsel %vm2051, %v2044, %v2048
  %v2053 = vand.u32 2147483647, %v2043
  %vm2054 = vcmp.eq.f32.partialorder %v2053, 8.507059e+37
  %v2055 = vand.u32 %v2043, 2147483648
  %v2056 = vor.u32 1.1754944e-38, %v2055
  %v2057 = vsel %vm2054, %v2056, %v2052
  %v2058 = vmul.f32 1.0, %v2057
  %v2059 = vmul.f32 %v2038, %v2017
  %v2060 = vadd.f32 %v1958, %v2059
  %v2061 = vtanh.pop %v2060
  %v2062 = vsub.f32 1.0, %v2058
  %v2063 = vmul.f32 %v2062, %v2061
  %v2064 = vmul.f32 %v2058, %v1951
  %v2065 = vadd.f32 %v2063, %v2064
  %s2066 = scalar_lea.vmem %s7, 48
  %2067 = vst [vmem:[%s2066] sm:$0xff] %v2065
  %s2068 = smul.addr %s888, 8
  %s2069 = scalar_lea.vmem [#allocation3], %s2068
  %v2070 = vld [vmem:[%s2069] sm:$0xff]
  %v2071 = vld [vmem:[%s2069 + $0x8] sm:$0xff]
  %v2072 = vld [vmem:[%s2069 + $0x10] sm:$0xff]
  %2073 = vmatpush.msra.mxu0 %v1260
  %2074 = vmatpush.msra.mxu0 %v1257
  %2075 = vmatpush.msra.mxu0 %v1254
  %2076 = vmatpush.msra.mxu0 %v1251
  %2077 = vmatpush.msra.mxu0 %v1248
  %2078 = vmatpush.msra.mxu0 %v1245
  %2079 = vmatpush.msra.mxu0 %v1242
  %2080 = vmatpush.msra.mxu0 %v1239
  %2081 = vmatpush.msra.mxu0 %v1236
  %2082 = vmatpush.msra.mxu0 %v1233
  %2083 = vmatpush.msra.mxu0 %v1230
  %2084 = vmatpush.msra.mxu0 %v1227
  %2085 = vmatpush.msra.mxu0 %v1224
  %2086 = vmatpush.msra.mxu0 %v1221
  %2087 = vmatpush.msra.mxu0 %v1218
  %2088 = vmatpush.msra.mxu0 %v1215
  %2089 = vmatmul.f32.gmra.mxu0 %v2065
  %v2090 = vpop.f32.mrf.mxu0
  %v2091 = vadd.f32 %v1265, %v2090
  %2092 = vdwg.mxu0
  %2093 = vmatpush.msra.mxu0 %v1261
  %2094 = vmatpush.msra.mxu0 %v1258
  %2095 = vmatpush.msra.mxu0 %v1255
  %2096 = vmatpush.msra.mxu0 %v1252
  %2097 = vmatpush.msra.mxu0 %v1249
  %2098 = vmatpush.msra.mxu0 %v1246
  %2099 = vmatpush.msra.mxu0 %v1243
  %2100 = vmatpush.msra.mxu0 %v1240
  %2101 = vmatpush.msra.mxu0 %v1237
  %2102 = vmatpush.msra.mxu0 %v1234
  %2103 = vmatpush.msra.mxu0 %v1231
  %2104 = vmatpush.msra.mxu0 %v1228
  %2105 = vmatpush.msra.mxu0 %v1225
  %2106 = vmatpush.msra.mxu0 %v1222
  %2107 = vmatpush.msra.mxu0 %v1219
  %2108 = vmatpush.msra.mxu0 %v1216
  %2109 = vmatmul.f32.gmra.mxu0 %v2065
  %v2110 = vpop.f32.mrf.mxu0
  %v2111 = vadd.f32 %v1266, %v2110
  %2112 = vdwg.mxu0
  %2113 = vmatpush.msra.mxu0 %v1262
  %2114 = vmatpush.msra.mxu0 %v1259
  %2115 = vmatpush.msra.mxu0 %v1256
  %2116 = vmatpush.msra.mxu0 %v1253
  %2117 = vmatpush.msra.mxu0 %v1250
  %2118 = vmatpush.msra.mxu0 %v1247
  %2119 = vmatpush.msra.mxu0 %v1244
  %2120 = vmatpush.msra.mxu0 %v1241
  %2121 = vmatpush.msra.mxu0 %v1238
  %2122 = vmatpush.msra.mxu0 %v1235
  %2123 = vmatpush.msra.mxu0 %v1232
  %2124 = vmatpush.msra.mxu0 %v1229
  %2125 = vmatpush.msra.mxu0 %v1226
  %2126 = vmatpush.msra.mxu0 %v1223
  %2127 = vmatpush.msra.mxu0 %v1220
  %2128 = vmatpush.msra.mxu0 %v1217
  %2129 = vmatmul.f32.gmra.mxu0 %v2065
  %v2130 = vpop.f32.mrf.mxu0
  %v2131 = vadd.f32 %v1267, %v2130
  %2132 = vdwg.mxu0
  %v2133 = vadd.f32 %v2070, %v2091
  %v2134 = vxor.u32 %v2133, 2147483648
  %v2135 = vmul.f32 %v2134, 1.442695
  %v2136 = vpow.pop %v2135
  %v2137 = vadd.f32 %v2136, 1.0
  %v2138 = vrcp.pop %v2137
  %v2139 = vmul.f32 %v2137, %v2138
  %v2140 = vsub.f32 1.0, %v2139
  %v2141 = vmul.f32 %v2138, %v2140
  %v2142 = vadd.f32 %v2138, %v2141
  %vm2143 = vweird.f32 %v2137
  %vm2144 = vweird.f32 %v2138
  %vm2145 = vmor %vm2143, %vm2144
  %v2146 = vsel %vm2145, %v2138, %v2142
  %v2147 = vand.u32 2147483647, %v2137
  %vm2148 = vcmp.eq.f32.partialorder %v2147, 8.507059e+37
  %v2149 = vand.u32 %v2137, 2147483648
  %v2150 = vor.u32 1.1754944e-38, %v2149
  %v2151 = vsel %vm2148, %v2150, %v2146
  %v2152 = vmul.f32 1.0, %v2151
  %v2153 = vadd.f32 %v2071, %v2111
  %v2154 = vxor.u32 %v2153, 2147483648
  %v2155 = vmul.f32 %v2154, 1.442695
  %v2156 = vpow.pop %v2155
  %v2157 = vadd.f32 %v2156, 1.0
  %v2158 = vrcp.pop %v2157
  %v2159 = vmul.f32 %v2157, %v2158
  %v2160 = vsub.f32 1.0, %v2159
  %v2161 = vmul.f32 %v2158, %v2160
  %v2162 = vadd.f32 %v2158, %v2161
  %vm2163 = vweird.f32 %v2157
  %vm2164 = vweird.f32 %v2158
  %vm2165 = vmor %vm2163, %vm2164
  %v2166 = vsel %vm2165, %v2158, %v2162
  %v2167 = vand.u32 2147483647, %v2157
  %vm2168 = vcmp.eq.f32.partialorder %v2167, 8.507059e+37
  %v2169 = vand.u32 %v2157, 2147483648
  %v2170 = vor.u32 1.1754944e-38, %v2169
  %v2171 = vsel %vm2168, %v2170, %v2166
  %v2172 = vmul.f32 1.0, %v2171
  %v2173 = vmul.f32 %v2152, %v2131
  %v2174 = vadd.f32 %v2072, %v2173
  %v2175 = vtanh.pop %v2174
  %v2176 = vsub.f32 1.0, %v2172
  %v2177 = vmul.f32 %v2176, %v2175
  %v2178 = vmul.f32 %v2172, %v2065
  %v2179 = vadd.f32 %v2177, %v2178
  %s2180 = scalar_lea.vmem %s7, 56
  %2181 = vst [vmem:[%s2180] sm:$0xff] %v2179
  %s2182 = scalar_lea.vmem %s8, 8
  %2183 = vst [vmem:[%s2182] sm:$0xff] %v2179
  // Predicated region
  $region30: #{encoder_forward.1} parent=0 // pred_check
    _
  $region31: #{encoder_forward.1} parent=0 // pred_check_branch
    %2185 = sbr.rel (0) target = $region33
  $region32: #{encoder_forward.1} parent=0 // pred_region
    _
  $region33: #{encoder_forward.1} parent=0 // pred_fallthru
    _
  // Predicated region
  $region34: #{encoder_forward.1} parent=0 // pred_check
    _
  $region35: #{encoder_forward.1} parent=0 // pred_check_branch
    %2187 = sbr.rel (0) target = $region37
  $region36: #{encoder_forward.1} parent=0 // pred_region
    _
  $region37: #{encoder_forward.1} parent=0 // pred_fallthru
    _
  // Predicated region
  $region38: #{encoder_forward.1} parent=0 // pred_check
    _
  $region39: #{encoder_forward.1} parent=0 // pred_check_branch
    %2189 = sbr.rel (0) target = $region41
  $region40: #{encoder_forward.1} parent=0 // pred_region
    _
  $region41: #{encoder_forward.1} parent=0 // pred_fallthru
    _
  // Predicated region
  $region42: #{encoder_forward.1} parent=0 // pred_check
    _
  $region43: #{encoder_forward.1} parent=0 // pred_check_branch
    %2191 = sbr.rel (0) target = $region45
  $region44: #{encoder_forward.1} parent=0 // pred_region
    _
  $region45: #{encoder_forward.1} parent=0 // pred_fallthru
    _

</llo_original>
